<compile_context>
chip_gen: v7x
topology: tpu7x:2x2x1
jax: 0.10.0
libtpu: 0.0.40
codegen_flags: <defaults>
</compile_context>

<pallas_src>
import functools

import jax
import jax.numpy as jnp
from jax import lax
from jax.experimental import pallas as pl
from jax.experimental.pallas import tpu as pltpu

F32 = jnp.float32
VMEM = pltpu.MemorySpace.VMEM
SMEM = pltpu.MemorySpace.SMEM
_EPS = 1e-5


def _vspec():
    return pl.BlockSpec(memory_space=VMEM)


# --------------------------------------------------------------------------
# Kernel 1: GRU + y-encoder  ->  cond rows (t-major: row = t*B + b)
# --------------------------------------------------------------------------
def _gru_encoder_kernel(x_ref, y_ref, wi_ref, wh_ref, bi_ref, bh_ref,
                        g1_ref, be1_ref, w1_ref, b1_ref,
                        g2_ref, be2_ref, w2_ref, b2_ref,
                        cond_ref, hs_ref, *, B, T, H, X):
    # y_ref: (T, B, Y).  Hoist the GRU input projection out of the recurrence:
    # one (T*B, Y) x (Y, 3H) matmul instead of 3*T tiny ones.
    y = y_ref[...]
    yf = y.reshape(T * B, y_ref.shape[-1])
    pre = jnp.dot(yf, wi_ref[...], preferred_element_type=F32) + bi_ref[...]
    pre = pre.reshape(T, B, 3 * H)

    wh = wh_ref[...]
    bh = bh_ref[...]
    h = jnp.zeros((B, H), dtype=F32)
    for t in range(T):                                  # static unroll (fixed T)
        hh = jnp.dot(h, wh, preferred_element_type=F32) + bh   # (B, 3H), fused gates
        p_t = pre[t]
        r = jax.nn.sigmoid(p_t[:, :H] + hh[:, :H])
        z = jax.nn.sigmoid(p_t[:, H:2 * H] + hh[:, H:2 * H])
        n = jnp.tanh(p_t[:, 2 * H:] + r * hh[:, 2 * H:])
        h = (1.0 - z) * n + z * h
        hs_ref[t] = h
    hseq = hs_ref[...].reshape(T * B, H)                # (T*B, H)

    # BatchNorm1d(h_rnn_dim), training stats over all rows, folded into l1y
    # (no activation between BN and the Linear).
    mean1 = jnp.mean(hseq, axis=0, keepdims=True)
    var1 = jnp.mean((hseq - mean1) ** 2, axis=0, keepdims=True)
    a1 = g1_ref[...] * lax.rsqrt(var1 + _EPS)
    c1 = be1_ref[...] - mean1 * a1
    bias1 = jnp.dot(c1, w1_ref[...], preferred_element_type=F32) + b1_ref[...]
    h1 = jnp.dot(hseq * a1, w1_ref[...], preferred_element_type=F32) + bias1

    # BatchNorm1d(h_linear_dim) -> ELU -> l2y (ELU blocks the fold).
    mean2 = jnp.mean(h1, axis=0, keepdims=True)
    var2 = jnp.mean((h1 - mean2) ** 2, axis=0, keepdims=True)
    xn = (h1 - mean2) * (g2_ref[...] * lax.rsqrt(var2 + _EPS)) + be2_ref[...]
    xe = jnp.where(xn > 0, xn, jnp.exp(xn) - 1.0)
    y_en = jnp.dot(xe, w2_ref[...], preferred_element_type=F32) + b2_ref[...]

    # cond = [x repeated over time | y_en]  (column-range stores, no concat)
    xv = x_ref[...]
    x_rep = jnp.broadcast_to(xv[None, :, :], (T, B, X)).reshape(T * B, X)
    cond_ref[:, :X] = x_rep
    cond_ref[:, X:] = y_en


def gru_encoder_op(x, y_t, wi, wh, bi, bh, g1, be1, w1, b1, g2, be2, w2, b2,
                   *, B, T, H, X, S2):
    return pl.pallas_call(
        functools.partial(_gru_encoder_kernel, B=B, T=T, H=H, X=X),
        out_shape=jax.ShapeDtypeStruct((T * B, S2), F32),
        in_specs=[_vspec()] * 14,
        out_specs=_vspec(),
        scratch_shapes=[pltpu.VMEM((T, B, H), F32)],
    )(x, y_t, wi, wh, bi, bh, g1, be1, w1, b1, g2, be2, w2, b2)


# --------------------------------------------------------------------------
# Kernel 2: time encoder (BN over the horizon channel -> l1t -> BN -> ELU -> l2t)
# operates on rows = (b, s2) pairs, feature axis = horizon.
# --------------------------------------------------------------------------
def _time_encoder_kernel(ct_ref, g1_ref, be1_ref, w1_ref, b1_ref,
                         g2_ref, be2_ref, w2_ref, b2_ref, o_ref):
    ct = ct_ref[...]                                    # (B*S2, T)
    mean1 = jnp.mean(ct, axis=0, keepdims=True)
    var1 = jnp.mean((ct - mean1) ** 2, axis=0, keepdims=True)
    a1 = g1_ref[...] * lax.rsqrt(var1 + _EPS)
    c1 = be1_ref[...] - mean1 * a1
    bias1 = jnp.dot(c1, w1_ref[...], preferred_element_type=F32) + b1_ref[...]
    h1 = jnp.dot(ct * a1, w1_ref[...], preferred_element_type=F32) + bias1

    mean2 = jnp.mean(h1, axis=0, keepdims=True)
    var2 = jnp.mean((h1 - mean2) ** 2, axis=0, keepdims=True)
    xn = (h1 - mean2) * (g2_ref[...] * lax.rsqrt(var2 + _EPS)) + be2_ref[...]
    xe = jnp.where(xn > 0, xn, jnp.exp(xn) - 1.0)
    o_ref[...] = jnp.dot(xe, w2_ref[...], preferred_element_type=F32) + b2_ref[...]


def time_encoder_op(ct_in, g1, be1, w1, b1, g2, be2, w2, b2):
    rows, T = ct_in.shape
    return pl.pallas_call(
        _time_encoder_kernel,
        out_shape=jax.ShapeDtypeStruct((rows, T), F32),
        in_specs=[_vspec()] * 9,
        out_specs=_vspec(),
    )(ct_in, g1, be1, w1, b1, g2, be2, w2, b2)


# --------------------------------------------------------------------------
# Kernel 3: conditional RealNVP flow (fused s/t nets) + loss, all in one call.
# Rows are t-major (row = t*B + b).
# --------------------------------------------------------------------------
def _flow_loss_kernel(*refs, B, T, U, S, S2, n_blocks, n_layers, dims, deltat):
    cond_ref, condt_ref, u_ref = refs[0], refs[1], refs[2]
    per_blk = 1 + 2 * n_layers + 2
    flow_refs = refs[3:3 + n_blocks * per_blk]
    o_ref = refs[3 + n_blocks * per_blk]
    inp_ref = refs[3 + n_blocks * per_blk + 1]          # (T*B, S+U) scratch

    # Persistent conditioning input: [cond | condt | mx]; cond part written once.
    inp_ref[:, :S2] = cond_ref[...]
    inp_ref[:, S2:S] = condt_ref[...]

    z = u_ref[...]                                      # (T*B, U)
    jac = jnp.zeros((T, B, U), dtype=F32)

    for blk in range(n_blocks):
        base = blk * per_blk
        mask = flow_refs[base][...]                     # (1, U)
        ws = [flow_refs[base + 1 + 2 * i][...] for i in range(n_layers)]
        bs = [flow_refs[base + 2 + 2 * i][...] for i in range(n_layers)]
        lg = flow_refs[base + 1 + 2 * n_layers][...]    # (1, 1, U)
        beta = flow_refs[base + 2 + 2 * n_layers][...]  # (1, 1, U)

        mx = z * mask
        inp_ref[:, S:] = mx                             # refresh only the mx columns

        # fused s/t MLP: one matmul per layer, tanh on the s half, relu on t half.
        h = jnp.dot(inp_ref[...], ws[0], preferred_element_type=F32) + bs[0]
        for i in range(1, n_layers):
            half = dims[i]
            col = lax.broadcasted_iota(jnp.int32, h.shape, 1)
            h = jnp.where(col < half, jnp.tanh(h), jnp.maximum(h, 0.0))
            h = jnp.dot(h, ws[i], preferred_element_type=F32) + bs[i]
        s = h[:, :U]
        t = h[:, U:]

        # masked affine coupling
        z = mx + (1.0 - mask) * (z - t) * jnp.exp(-s)
        jac = jac + (-(1.0 - mask) * s).reshape(T, B, U)

        # flow BatchNorm (training stats over the batch axis, unbiased variance);
        # its (T,1,U) log-det is added directly to jac (no broadcast store).
        z3 = z.reshape(T, B, U)
        mean = jnp.mean(z3, axis=1, keepdims=True)
        var = jnp.sum((z3 - mean) ** 2, axis=1, keepdims=True) / (B - 1)
        z3 = jnp.exp(lg) * (z3 - mean) * lax.rsqrt(var + _EPS) + beta
        z = z3.reshape(T * B, U)
        jac = jac + (lg - 0.5 * jnp.log(var + _EPS))

    # loss: z_loss over horizon, log-det, mean over batch of sum over u.
    z3 = z.reshape(T, B, U)
    z_loss = jnp.zeros((B, U), dtype=F32)
    for t_idx in range(T):
        w_t = 0.5 / (deltat * float((t_idx + 1) ** 2))
        z_loss = z_loss + w_t * z3[t_idx] * z3[t_idx]
    log_det = jnp.sum(jac, axis=0)                      # (B, U)  == sum over dim=-2
    diff = (z_loss - log_det) / float(T)
    o_ref[0, 0] = jnp.sum(diff) / float(B)


def flow_loss_op(cond2d, condt_rows, u_rows, flow_inputs,
                 *, B, T, U, S, S2, n_blocks, n_layers, dims, deltat):
    n_in = 3 + len(flow_inputs)
    out = pl.pallas_call(
        functools.partial(_flow_loss_kernel, B=B, T=T, U=U, S=S, S2=S2,
                          n_blocks=n_blocks, n_layers=n_layers,
                          dims=tuple(dims), deltat=deltat),
        out_shape=jax.ShapeDtypeStruct((1, 1), F32),
        in_specs=[_vspec()] * n_in,
        out_specs=pl.BlockSpec(memory_space=SMEM),
        scratch_shapes=[pltpu.VMEM((T * B, S + U), F32)],
    )(cond2d, condt_rows, u_rows, *flow_inputs)
    return out[0, 0]


# --------------------------------------------------------------------------
# Parameter construction (deterministic, synthetic)
# --------------------------------------------------------------------------
def init_params(key, cfg):
    U, X, Y = cfg["u_dim"], cfg["x_dim"], cfg["y_dim"]
    S = cfg["summary_dim"]
    S2 = S // 2
    H = cfg["h_rnn_dim"]
    L = cfg["h_linear_dim"]
    T = cfg["horizon"]
    HID = cfg["hidden_layer_size"]
    nb, nh = cfg["n_blocks"], cfg["n_hidden"]

    keys = iter(jax.random.split(key, 512))

    def w(shape, scale=0.1):
        return scale * jax.random.normal(next(keys), shape, dtype=F32)

    p = dict(
        gru_wi=w((3, Y, H)), gru_wh=w((3, H, H)),
        gru_bi=w((3, 1, H)), gru_bh=w((3, 1, H)),
        bn1y_g=1.0 + w((1, H)), bn1y_b=w((1, H)),
        l1y_w=w((H, L)), l1y_b=w((1, L)),
        bn2y_g=1.0 + w((1, L)), bn2y_b=w((1, L)),
        l2y_w=w((L, S2 - X)), l2y_b=w((1, S2 - X)),
        bn1t_g=1.0 + w((1, T)), bn1t_b=w((1, T)),
        l1t_w=w((T, L)), l1t_b=w((1, L)),
        bn2t_g=1.0 + w((1, L)), bn2t_b=w((1, L)),
        l2t_w=w((L, T)), l2t_b=w((1, T)),
    )

    mask = (jnp.arange(U) % 2).astype(F32).reshape(1, U)
    flow = []
    for _ in range(nb):
        dims = [U + S] + [HID] * (nh + 1) + [U]   # n_hidden + 2 linear layers
        s_layers = [(w((dims[i], dims[i + 1])), w((1, dims[i + 1]))) for i in range(len(dims) - 1)]
        t_layers = [(w((dims[i], dims[i + 1])), w((1, dims[i + 1]))) for i in range(len(dims) - 1)]
        flow.append(dict(
            mask=mask,
            s_layers=s_layers,
            t_layers=t_layers,
            bn_lg=w((1, 1, U)),
            bn_beta=w((1, 1, U)),
        ))
        mask = 1.0 - mask
    p["flow"] = flow
    return p


def _block_diag(a, b):
    za = jnp.zeros((a.shape[0], b.shape[1]), F32)
    zb = jnp.zeros((b.shape[0], a.shape[1]), F32)
    return jnp.concatenate(
        [jnp.concatenate([a, za], axis=1), jnp.concatenate([zb, b], axis=1)], axis=0)


# --------------------------------------------------------------------------
# TcNF forward
# --------------------------------------------------------------------------
def tcnf_forward(params, x, y, u, cfg):
    B = x.shape[0]
    T = cfg["horizon"]
    U = cfg["u_dim"]
    X = cfg["x_dim"]
    S = cfg["summary_dim"]
    S2 = S // 2
    H = cfg["h_rnn_dim"]
    HID = cfg["hidden_layer_size"]
    n_blocks = cfg["n_blocks"]
    n_layers = cfg["n_hidden"] + 2
    dims = [U + S] + [HID] * (cfg["n_hidden"] + 1) + [U]

    # ---- fuse GRU gate weights (r|z|n) into single matmul operands ----------
    wi, wh = params["gru_wi"], params["gru_wh"]
    bi, bh = params["gru_bi"], params["gru_bh"]
    wi_f = jnp.concatenate([wi[0], wi[1], wi[2]], axis=1)      # (Y, 3H)
    wh_f = jnp.concatenate([wh[0], wh[1], wh[2]], axis=1)      # (H, 3H)
    bi_f = jnp.concatenate([bi[0], bi[1], bi[2]], axis=1)      # (1, 3H)
    bh_f = jnp.concatenate([bh[0], bh[1], bh[2]], axis=1)      # (1, 3H)

    # ---- kernel 1: GRU + y-encoder -> cond (t-major rows) -------------------
    y_t = jnp.transpose(y, (1, 0, 2))                          # (T, B, Y)
    cond2d = gru_encoder_op(
        x, y_t, wi_f, wh_f, bi_f, bh_f,
        params["bn1y_g"], params["bn1y_b"], params["l1y_w"], params["l1y_b"],
        params["bn2y_g"], params["bn2y_b"], params["l2y_w"], params["l2y_b"],
        B=B, T=T, H=H, X=X, S2=S2)                             # (T*B, S2)

    # ---- kernel 2: time encoder (feature axis = horizon) --------------------
    ct_in = jnp.transpose(cond2d.reshape(T, B, S2), (1, 2, 0)).reshape(B * S2, T)
    ct_out = time_encoder_op(
        ct_in,
        params["bn1t_g"], params["bn1t_b"], params["l1t_w"], params["l1t_b"],
        params["bn2t_g"], params["bn2t_b"], params["l2t_w"], params["l2t_b"])  # (B*S2, T)
    condt_rows = jnp.transpose(ct_out.reshape(B, S2, T), (2, 0, 1)).reshape(T * B, S2)

    # ---- kernel 3: conditional RealNVP flow + loss ---------------------------
    u_rows = jnp.transpose(u, (1, 0, 2)).reshape(T * B, U)
    flow_inputs = []
    for blk in params["flow"]:
        sl, tl = blk["s_layers"], blk["t_layers"]
        fused = [jnp.concatenate([sl[0][0], tl[0][0]], axis=1),    # shared input layer
                 jnp.concatenate([sl[0][1], tl[0][1]], axis=1)]
        for i in range(1, n_layers):                               # block-diagonal rest
            fused += [_block_diag(sl[i][0], tl[i][0]),
                      jnp.concatenate([sl[i][1], tl[i][1]], axis=1)]
        flow_inputs += [blk["mask"]] + fused + [blk["bn_lg"], blk["bn_beta"]]

    return flow_loss_op(cond2d, condt_rows, u_rows, flow_inputs,
                        B=B, T=T, U=U, S=S, S2=S2, n_blocks=n_blocks,
                        n_layers=n_layers, dims=dims, deltat=cfg["deltat"])


# --------------------------------------------------------------------------
if __name__ == "__main__":
    cfg = dict(u_dim=4, x_dim=2, y_dim=3, summary_dim=16, n_blocks=2,
               hidden_layer_size=32, n_hidden=1, h_rnn_dim=16, h_linear_dim=24,
               horizon=8, deltat=0.01)

    key = jax.random.PRNGKey(0)
    kp, kx, ky, ku = jax.random.split(key, 4)
    params = init_params(kp, cfg)

    B = 2
    x = jax.random.normal(kx, (B, cfg["x_dim"]), dtype=F32)
    y = jax.random.normal(ky, (B, cfg["horizon"], cfg["y_dim"]), dtype=F32)
    u = jax.random.normal(ku, (B, cfg["horizon"], cfg["u_dim"]), dtype=F32)

    fwd = jax.jit(functools.partial(tcnf_forward, cfg=cfg))
    loss = fwd(params, x, y, u)
    jax.block_until_ready(loss)
    print("KERNEL_OK")
</pallas_src>

<mosaic_0001>
module attributes {stable_mosaic.version = 11 : i64} {
  func.func @_time_encoder_kernel(%arg0: memref<16x8xf32, #tpu.memory_space<vmem>>, %arg1: memref<1x8xf32, #tpu.memory_space<vmem>>, %arg2: memref<1x8xf32, #tpu.memory_space<vmem>>, %arg3: memref<8x24xf32, #tpu.memory_space<vmem>>, %arg4: memref<1x24xf32, #tpu.memory_space<vmem>>, %arg5: memref<1x24xf32, #tpu.memory_space<vmem>>, %arg6: memref<1x24xf32, #tpu.memory_space<vmem>>, %arg7: memref<24x8xf32, #tpu.memory_space<vmem>>, %arg8: memref<1x8xf32, #tpu.memory_space<vmem>>, %arg9: memref<16x8xf32, #tpu.memory_space<vmem>>) attributes {dimension_semantics = [], scalar_prefetch = 0 : i64, scratch_operands = 0 : i64, tpu.core_type = #tpu.core_type<tc>} {
    %c0 = arith.constant 0 : index
    %c0_0 = arith.constant 0 : index
    %0 = vector.load %arg0[%c0, %c0_0] : memref<16x8xf32, #tpu.memory_space<vmem>>, vector<16x8xf32>
    %cst = arith.constant dense<0.000000e+00> : vector<8xf32>
    %1 = vector.multi_reduction <add>, %0, %cst [0] : vector<16x8xf32> to vector<8xf32>
    %2 = vector.shape_cast %1 : vector<8xf32> to vector<1x8xf32>
    %cst_1 = arith.constant 1.600000e+01 : f32
    %3 = vector.broadcast %cst_1 : f32 to vector<1x8xf32>
    %4 = arith.divf %2, %3 : vector<1x8xf32>
    %5 = vector.broadcast %4 : vector<1x8xf32> to vector<16x8xf32>
    %6 = arith.subf %0, %5 : vector<16x8xf32>
    %7 = arith.mulf %6, %6 : vector<16x8xf32>
    %cst_2 = arith.constant dense<0.000000e+00> : vector<8xf32>
    %8 = vector.multi_reduction <add>, %7, %cst_2 [0] : vector<16x8xf32> to vector<8xf32>
    %9 = vector.shape_cast %8 : vector<8xf32> to vector<1x8xf32>
    %cst_3 = arith.constant 1.600000e+01 : f32
    %10 = vector.broadcast %cst_3 : f32 to vector<1x8xf32>
    %11 = arith.divf %9, %10 : vector<1x8xf32>
    %c0_4 = arith.constant 0 : index
    %c0_5 = arith.constant 0 : index
    %12 = vector.load %arg1[%c0_4, %c0_5] : memref<1x8xf32, #tpu.memory_space<vmem>>, vector<1x8xf32>
    %cst_6 = arith.constant 9.99999974E-6 : f32
    %13 = vector.broadcast %cst_6 : f32 to vector<1x8xf32>
    %14 = arith.addf %11, %13 : vector<1x8xf32>
    %15 = math.rsqrt %14 : vector<1x8xf32>
    %16 = arith.mulf %12, %15 : vector<1x8xf32>
    %c0_7 = arith.constant 0 : index
    %c0_8 = arith.constant 0 : index
    %17 = vector.load %arg2[%c0_7, %c0_8] : memref<1x8xf32, #tpu.memory_space<vmem>>, vector<1x8xf32>
    %18 = arith.mulf %4, %16 : vector<1x8xf32>
    %19 = arith.subf %17, %18 : vector<1x8xf32>
    %c0_9 = arith.constant 0 : index
    %c0_10 = arith.constant 0 : index
    %20 = vector.load %arg3[%c0_9, %c0_10] : memref<8x24xf32, #tpu.memory_space<vmem>>, vector<8x24xf32>
    %cst_11 = arith.constant dense<0.000000e+00> : vector<1x24xf32>
    %21 = tpu.matmul %19, %20, %cst_11 {dimension_numbers = #tpu.dot_dimension_numbers<[1], [0], [0], [1], [0, 0, 1, 1], [], []>} : vector<1x8xf32>, vector<8x24xf32>, vector<1x24xf32> -> vector<1x24xf32>
    %c0_12 = arith.constant 0 : index
    %c0_13 = arith.constant 0 : index
    %22 = vector.load %arg4[%c0_12, %c0_13] : memref<1x24xf32, #tpu.memory_space<vmem>>, vector<1x24xf32>
    %23 = arith.addf %21, %22 : vector<1x24xf32>
    %24 = vector.broadcast %16 : vector<1x8xf32> to vector<16x8xf32>
    %25 = arith.mulf %0, %24 : vector<16x8xf32>
    %c0_14 = arith.constant 0 : index
    %c0_15 = arith.constant 0 : index
    %26 = vector.load %arg3[%c0_14, %c0_15] : memref<8x24xf32, #tpu.memory_space<vmem>>, vector<8x24xf32>
    %cst_16 = arith.constant dense<0.000000e+00> : vector<16x24xf32>
    %27 = tpu.matmul %25, %26, %cst_16 {dimension_numbers = #tpu.dot_dimension_numbers<[1], [0], [0], [1], [0, 0, 1, 1], [], []>} : vector<16x8xf32>, vector<8x24xf32>, vector<16x24xf32> -> vector<16x24xf32>
    %28 = vector.broadcast %23 : vector<1x24xf32> to vector<16x24xf32>
    %29 = arith.addf %27, %28 : vector<16x24xf32>
    %cst_17 = arith.constant dense<0.000000e+00> : vector<24xf32>
    %30 = vector.multi_reduction <add>, %29, %cst_17 [0] : vector<16x24xf32> to vector<24xf32>
    %31 = vector.shape_cast %30 : vector<24xf32> to vector<1x24xf32>
    %cst_18 = arith.constant 1.600000e+01 : f32
    %32 = vector.broadcast %cst_18 : f32 to vector<1x24xf32>
    %33 = arith.divf %31, %32 : vector<1x24xf32>
    %34 = vector.broadcast %33 : vector<1x24xf32> to vector<16x24xf32>
    %35 = arith.subf %29, %34 : vector<16x24xf32>
    %36 = arith.mulf %35, %35 : vector<16x24xf32>
    %cst_19 = arith.constant dense<0.000000e+00> : vector<24xf32>
    %37 = vector.multi_reduction <add>, %36, %cst_19 [0] : vector<16x24xf32> to vector<24xf32>
    %38 = vector.shape_cast %37 : vector<24xf32> to vector<1x24xf32>
    %cst_20 = arith.constant 1.600000e+01 : f32
    %39 = vector.broadcast %cst_20 : f32 to vector<1x24xf32>
    %40 = arith.divf %38, %39 : vector<1x24xf32>
    %41 = vector.broadcast %33 : vector<1x24xf32> to vector<16x24xf32>
    %42 = arith.subf %29, %41 : vector<16x24xf32>
    %c0_21 = arith.constant 0 : index
    %c0_22 = arith.constant 0 : index
    %43 = vector.load %arg5[%c0_21, %c0_22] : memref<1x24xf32, #tpu.memory_space<vmem>>, vector<1x24xf32>
    %cst_23 = arith.constant 9.99999974E-6 : f32
    %44 = vector.broadcast %cst_23 : f32 to vector<1x24xf32>
    %45 = arith.addf %40, %44 : vector<1x24xf32>
    %46 = math.rsqrt %45 : vector<1x24xf32>
    %47 = arith.mulf %43, %46 : vector<1x24xf32>
    %48 = vector.broadcast %47 : vector<1x24xf32> to vector<16x24xf32>
    %49 = arith.mulf %42, %48 : vector<16x24xf32>
    %c0_24 = arith.constant 0 : index
    %c0_25 = arith.constant 0 : index
    %50 = vector.load %arg6[%c0_24, %c0_25] : memref<1x24xf32, #tpu.memory_space<vmem>>, vector<1x24xf32>
    %51 = vector.broadcast %50 : vector<1x24xf32> to vector<16x24xf32>
    %52 = arith.addf %49, %51 : vector<16x24xf32>
    %cst_26 = arith.constant 0.000000e+00 : f32
    %53 = vector.broadcast %cst_26 : f32 to vector<16x24xf32>
    %54 = arith.cmpf ogt, %52, %53 : vector<16x24xf32>
    %55 = math.exp %52 : vector<16x24xf32>
    %cst_27 = arith.constant 1.000000e+00 : f32
    %56 = vector.broadcast %cst_27 : f32 to vector<16x24xf32>
    %57 = arith.subf %55, %56 : vector<16x24xf32>
    %58 = arith.select %54, %52, %57 : vector<16x24xi1>, vector<16x24xf32>
    %c0_28 = arith.constant 0 : index
    %c0_29 = arith.constant 0 : index
    %59 = vector.load %arg7[%c0_28, %c0_29] : memref<24x8xf32, #tpu.memory_space<vmem>>, vector<24x8xf32>
    %cst_30 = arith.constant dense<0.000000e+00> : vector<16x8xf32>
    %60 = tpu.matmul %58, %59, %cst_30 {dimension_numbers = #tpu.dot_dimension_numbers<[1], [0], [0], [1], [0, 0, 1, 1], [], []>} : vector<16x24xf32>, vector<24x8xf32>, vector<16x8xf32> -> vector<16x8xf32>
    %c0_31 = arith.constant 0 : index
    %c0_32 = arith.constant 0 : index
    %61 = vector.load %arg8[%c0_31, %c0_32] : memref<1x8xf32, #tpu.memory_space<vmem>>, vector<1x8xf32>
    %62 = vector.broadcast %61 : vector<1x8xf32> to vector<16x8xf32>
    %63 = arith.addf %60, %62 : vector<16x8xf32>
    %c0_33 = arith.constant 0 : index
    %c0_34 = arith.constant 0 : index
    %64 = vector.load %arg9[%c0_33, %c0_34] : memref<16x8xf32, #tpu.memory_space<vmem>>, vector<16x8xf32>
    tpu.vector_store %arg9[%c0_33, %c0_34], %63 {strides = array<i32>} : memref<16x8xf32, #tpu.memory_space<vmem>>, vector<16x8xf32>,
    return
  }
}

module attributes {stable_mosaic.version = 11 : i64} {
  func.func @_gru_encoder_kernel(%arg0: memref<2x2xf32, #tpu.memory_space<vmem>>, %arg1: memref<8x2x3xf32, #tpu.memory_space<vmem>>, %arg2: memref<3x48xf32, #tpu.memory_space<vmem>>, %arg3: memref<16x48xf32, #tpu.memory_space<vmem>>, %arg4: memref<1x48xf32, #tpu.memory_space<vmem>>, %arg5: memref<1x48xf32, #tpu.memory_space<vmem>>, %arg6: memref<1x16xf32, #tpu.memory_space<vmem>>, %arg7: memref<1x16xf32, #tpu.memory_space<vmem>>, %arg8: memref<16x24xf32, #tpu.memory_space<vmem>>, %arg9: memref<1x24xf32, #tpu.memory_space<vmem>>, %arg10: memref<1x24xf32, #tpu.memory_space<vmem>>, %arg11: memref<1x24xf32, #tpu.memory_space<vmem>>, %arg12: memref<24x6xf32, #tpu.memory_space<vmem>>, %arg13: memref<1x6xf32, #tpu.memory_space<vmem>>, %arg14: memref<16x8xf32, #tpu.memory_space<vmem>>, %arg15: memref<8x2x16xf32, #tpu.memory_space<vmem>>) attributes {dimension_semantics = [], scalar_prefetch = 0 : i64, scratch_operands = 1 : i64, tpu.core_type = #tpu.core_type<tc>} {
    %c0 = arith.constant 0 : index
    %c0_0 = arith.constant 0 : index
    %c0_1 = arith.constant 0 : index
    %0 = vector.load %arg1[%c0, %c0_0, %c0_1] : memref<8x2x3xf32, #tpu.memory_space<vmem>>, vector<8x2x3xf32>
    %1 = vector.shape_cast %0 : vector<8x2x3xf32> to vector<16x3xf32>
    %c0_2 = arith.constant 0 : index
    %c0_3 = arith.constant 0 : index
    %2 = vector.load %arg2[%c0_2, %c0_3] : memref<3x48xf32, #tpu.memory_space<vmem>>, vector<3x48xf32>
    %cst = arith.constant dense<0.000000e+00> : vector<16x48xf32>
    %3 = tpu.matmul %1, %2, %cst {dimension_numbers = #tpu.dot_dimension_numbers<[1], [0], [0], [1], [0, 0, 1, 1], [], []>} : vector<16x3xf32>, vector<3x48xf32>, vector<16x48xf32> -> vector<16x48xf32>
    %c0_4 = arith.constant 0 : index
    %c0_5 = arith.constant 0 : index
    %4 = vector.load %arg4[%c0_4, %c0_5] : memref<1x48xf32, #tpu.memory_space<vmem>>, vector<1x48xf32>
    %5 = vector.broadcast %4 : vector<1x48xf32> to vector<16x48xf32>
    %6 = arith.addf %3, %5 : vector<16x48xf32>
    %7 = vector.shape_cast %6 : vector<16x48xf32> to vector<8x2x48xf32>
    %c0_6 = arith.constant 0 : index
    %c0_7 = arith.constant 0 : index
    %8 = vector.load %arg3[%c0_6, %c0_7] : memref<16x48xf32, #tpu.memory_space<vmem>>, vector<16x48xf32>
    %c0_8 = arith.constant 0 : index
    %c0_9 = arith.constant 0 : index
    %9 = vector.load %arg5[%c0_8, %c0_9] : memref<1x48xf32, #tpu.memory_space<vmem>>, vector<1x48xf32>
    %cst_10 = arith.constant 0.000000e+00 : f32
    %10 = vector.broadcast %cst_10 : f32 to vector<2x16xf32>
    %cst_11 = arith.constant dense<0.000000e+00> : vector<2x48xf32>
    %11 = tpu.matmul %10, %8, %cst_11 {dimension_numbers = #tpu.dot_dimension_numbers<[1], [0], [0], [1], [0, 0, 1, 1], [], []>} : vector<2x16xf32>, vector<16x48xf32>, vector<2x48xf32> -> vector<2x48xf32>
    %12 = vector.broadcast %9 : vector<1x48xf32> to vector<2x48xf32>
    %13 = arith.addf %11, %12 : vector<2x48xf32>
    %14 = vector.extract_strided_slice %7 {offsets = [0, 0, 0], sizes = [1, 2, 48], strides = [1, 1, 1]} : vector<8x2x48xf32> to vector<1x2x48xf32>
    %15 = vector.shape_cast %14 : vector<1x2x48xf32> to vector<2x48xf32>
    %16 = vector.extract_strided_slice %15 {offsets = [0, 0], sizes = [2, 16], strides = [1, 1]} : vector<2x48xf32> to vector<2x16xf32>
    %17 = vector.extract_strided_slice %13 {offsets = [0, 0], sizes = [2, 16], strides = [1, 1]} : vector<2x48xf32> to vector<2x16xf32>
    %18 = arith.addf %16, %17 : vector<2x16xf32>
    %19 = arith.negf %18 : vector<2x16xf32>
    %20 = math.exp %19 : vector<2x16xf32>
    %cst_12 = arith.constant 1.000000e+00 : f32
    %21 = vector.broadcast %cst_12 : f32 to vector<2x16xf32>
    %22 = arith.addf %21, %20 : vector<2x16xf32>
    %23 = arith.divf %21, %22 : vector<2x16xf32>
    %24 = vector.extract_strided_slice %15 {offsets = [0, 16], sizes = [2, 16], strides = [1, 1]} : vector<2x48xf32> to vector<2x16xf32>
    %25 = vector.extract_strided_slice %13 {offsets = [0, 16], sizes = [2, 16], strides = [1, 1]} : vector<2x48xf32> to vector<2x16xf32>
    %26 = arith.addf %24, %25 : vector<2x16xf32>
    %27 = arith.negf %26 : vector<2x16xf32>
    %28 = math.exp %27 : vector<2x16xf32>
    %cst_13 = arith.constant 1.000000e+00 : f32
    %29 = vector.broadcast %cst_13 : f32 to vector<2x16xf32>
    %30 = arith.addf %29, %28 : vector<2x16xf32>
    %31 = arith.divf %29, %30 : vector<2x16xf32>
    %32 = vector.extract_strided_slice %15 {offsets = [0, 32], sizes = [2, 16], strides = [1, 1]} : vector<2x48xf32> to vector<2x16xf32>
    %33 = vector.extract_strided_slice %13 {offsets = [0, 32], sizes = [2, 16], strides = [1, 1]} : vector<2x48xf32> to vector<2x16xf32>
    %34 = arith.mulf %23, %33 : vector<2x16xf32>
    %35 = arith.addf %32, %34 : vector<2x16xf32>
    %36 = math.tanh %35 : vector<2x16xf32>
    %cst_14 = arith.constant 1.000000e+00 : f32
    %37 = vector.broadcast %cst_14 : f32 to vector<2x16xf32>
    %38 = arith.subf %37, %31 : vector<2x16xf32>
    %39 = arith.mulf %38, %36 : vector<2x16xf32>
    %40 = arith.mulf %31, %10 : vector<2x16xf32>
    %41 = arith.addf %39, %40 : vector<2x16xf32>
    %c0_15 = arith.constant 0 : index
    %c0_16 = arith.constant 0 : index
    %c0_17 = arith.constant 0 : index
    %42 = vector.load %arg15[%c0_15, %c0_16, %c0_17] : memref<8x2x16xf32, #tpu.memory_space<vmem>>, vector<1x2x16xf32>
    %43 = vector.shape_cast %42 : vector<1x2x16xf32> to vector<2x16xf32>
    %44 = vector.shape_cast %41 : vector<2x16xf32> to vector<1x2x16xf32>
    tpu.vector_store %arg15[%c0_15, %c0_16, %c0_17], %44 {strides = array<i32>} : memref<8x2x16xf32, #tpu.memory_space<vmem>>, vector<1x2x16xf32>,
    %cst_18 = arith.constant dense<0.000000e+00> : vector<2x48xf32>
    %45 = tpu.matmul %41, %8, %cst_18 {dimension_numbers = #tpu.dot_dimension_numbers<[1], [0], [0], [1], [0, 0, 1, 1], [], []>} : vector<2x16xf32>, vector<16x48xf32>, vector<2x48xf32> -> vector<2x48xf32>
    %46 = vector.broadcast %9 : vector<1x48xf32> to vector<2x48xf32>
    %47 = arith.addf %45, %46 : vector<2x48xf32>
    %48 = vector.extract_strided_slice %7 {offsets = [1, 0, 0], sizes = [1, 2, 48], strides = [1, 1, 1]} : vector<8x2x48xf32> to vector<1x2x48xf32>
    %49 = vector.shape_cast %48 : vector<1x2x48xf32> to vector<2x48xf32>
    %50 = vector.extract_strided_slice %49 {offsets = [0, 0], sizes = [2, 16], strides = [1, 1]} : vector<2x48xf32> to vector<2x16xf32>
    %51 = vector.extract_strided_slice %47 {offsets = [0, 0], sizes = [2, 16], strides = [1, 1]} : vector<2x48xf32> to vector<2x16xf32>
    %52 = arith.addf %50, %51 : vector<2x16xf32>
    %53 = arith.negf %52 : vector<2x16xf32>
    %54 = math.exp %53 : vector<2x16xf32>
    %cst_19 = arith.constant 1.000000e+00 : f32
    %55 = vector.broadcast %cst_19 : f32 to vector<2x16xf32>
    %56 = arith.addf %55, %54 : vector<2x16xf32>
    %57 = arith.divf %55, %56 : vector<2x16xf32>
    %58 = vector.extract_strided_slice %49 {offsets = [0, 16], sizes = [2, 16], strides = [1, 1]} : vector<2x48xf32> to vector<2x16xf32>
    %59 = vector.extract_strided_slice %47 {offsets = [0, 16], sizes = [2, 16], strides = [1, 1]} : vector<2x48xf32> to vector<2x16xf32>
    %60 = arith.addf %58, %59 : vector<2x16xf32>
    %61 = arith.negf %60 : vector<2x16xf32>
    %62 = math.exp %61 : vector<2x16xf32>
    %cst_20 = arith.constant 1.000000e+00 : f32
    %63 = vector.broadcast %cst_20 : f32 to vector<2x16xf32>
    %64 = arith.addf %63, %62 : vector<2x16xf32>
    %65 = arith.divf %63, %64 : vector<2x16xf32>
    %66 = vector.extract_strided_slice %49 {offsets = [0, 32], sizes = [2, 16], strides = [1, 1]} : vector<2x48xf32> to vector<2x16xf32>
    %67 = vector.extract_strided_slice %47 {offsets = [0, 32], sizes = [2, 16], strides = [1, 1]} : vector<2x48xf32> to vector<2x16xf32>
    %68 = arith.mulf %57, %67 : vector<2x16xf32>
    %69 = arith.addf %66, %68 : vector<2x16xf32>
    %70 = math.tanh %69 : vector<2x16xf32>
    %cst_21 = arith.constant 1.000000e+00 : f32
    %71 = vector.broadcast %cst_21 : f32 to vector<2x16xf32>
    %72 = arith.subf %71, %65 : vector<2x16xf32>
    %73 = arith.mulf %72, %70 : vector<2x16xf32>
    %74 = arith.mulf %65, %41 : vector<2x16xf32>
    %75 = arith.addf %73, %74 : vector<2x16xf32>
    %c1 = arith.constant 1 : index
    %c0_22 = arith.constant 0 : index
    %c0_23 = arith.constant 0 : index
    %76 = vector.load %arg15[%c1, %c0_22, %c0_23] : memref<8x2x16xf32, #tpu.memory_space<vmem>>, vector<1x2x16xf32>
    %77 = vector.shape_cast %76 : vector<1x2x16xf32> to vector<2x16xf32>
    %78 = vector.shape_cast %75 : vector<2x16xf32> to vector<1x2x16xf32>
    tpu.vector_store %arg15[%c1, %c0_22, %c0_23], %78 {strides = array<i32>} : memref<8x2x16xf32, #tpu.memory_space<vmem>>, vector<1x2x16xf32>,
    %cst_24 = arith.constant dense<0.000000e+00> : vector<2x48xf32>
    %79 = tpu.matmul %75, %8, %cst_24 {dimension_numbers = #tpu.dot_dimension_numbers<[1], [0], [0], [1], [0, 0, 1, 1], [], []>} : vector<2x16xf32>, vector<16x48xf32>, vector<2x48xf32> -> vector<2x48xf32>
    %80 = vector.broadcast %9 : vector<1x48xf32> to vector<2x48xf32>
    %81 = arith.addf %79, %80 : vector<2x48xf32>
    %82 = vector.extract_strided_slice %7 {offsets = [2, 0, 0], sizes = [1, 2, 48], strides = [1, 1, 1]} : vector<8x2x48xf32> to vector<1x2x48xf32>
    %83 = vector.shape_cast %82 : vector<1x2x48xf32> to vector<2x48xf32>
    %84 = vector.extract_strided_slice %83 {offsets = [0, 0], sizes = [2, 16], strides = [1, 1]} : vector<2x48xf32> to vector<2x16xf32>
    %85 = vector.extract_strided_slice %81 {offsets = [0, 0], sizes = [2, 16], strides = [1, 1]} : vector<2x48xf32> to vector<2x16xf32>
    %86 = arith.addf %84, %85 : vector<2x16xf32>
    %87 = arith.negf %86 : vector<2x16xf32>
    %88 = math.exp %87 : vector<2x16xf32>
    %cst_25 = arith.constant 1.000000e+00 : f32
    %89 = vector.broadcast %cst_25 : f32 to vector<2x16xf32>
    %90 = arith.addf %89, %88 : vector<2x16xf32>
    %91 = arith.divf %89, %90 : vector<2x16xf32>
    %92 = vector.extract_strided_slice %83 {offsets = [0, 16], sizes = [2, 16], strides = [1, 1]} : vector<2x48xf32> to vector<2x16xf32>
    %93 = vector.extract_strided_slice %81 {offsets = [0, 16], sizes = [2, 16], strides = [1, 1]} : vector<2x48xf32> to vector<2x16xf32>
    %94 = arith.addf %92, %93 : vector<2x16xf32>
    %95 = arith.negf %94 : vector<2x16xf32>
    %96 = math.exp %95 : vector<2x16xf32>
    %cst_26 = arith.constant 1.000000e+00 : f32
    %97 = vector.broadcast %cst_26 : f32 to vector<2x16xf32>
    %98 = arith.addf %97, %96 : vector<2x16xf32>
    %99 = arith.divf %97, %98 : vector<2x16xf32>
    %100 = vector.extract_strided_slice %83 {offsets = [0, 32], sizes = [2, 16], strides = [1, 1]} : vector<2x48xf32> to vector<2x16xf32>
    %101 = vector.extract_strided_slice %81 {offsets = [0, 32], sizes = [2, 16], strides = [1, 1]} : vector<2x48xf32> to vector<2x16xf32>
    %102 = arith.mulf %91, %101 : vector<2x16xf32>
    %103 = arith.addf %100, %102 : vector<2x16xf32>
    %104 = math.tanh %103 : vector<2x16xf32>
    %cst_27 = arith.constant 1.000000e+00 : f32
    %105 = vector.broadcast %cst_27 : f32 to vector<2x16xf32>
    %106 = arith.subf %105, %99 : vector<2x16xf32>
    %107 = arith.mulf %106, %104 : vector<2x16xf32>
    %108 = arith.mulf %99, %75 : vector<2x16xf32>
    %109 = arith.addf %107, %108 : vector<2x16xf32>
    %c2 = arith.constant 2 : index
    %c0_28 = arith.constant 0 : index
    %c0_29 = arith.constant 0 : index
    %110 = vector.load %arg15[%c2, %c0_28, %c0_29] : memref<8x2x16xf32, #tpu.memory_space<vmem>>, vector<1x2x16xf32>
    %111 = vector.shape_cast %110 : vector<1x2x16xf32> to vector<2x16xf32>
    %112 = vector.shape_cast %109 : vector<2x16xf32> to vector<1x2x16xf32>
    tpu.vector_store %arg15[%c2, %c0_28, %c0_29], %112 {strides = array<i32>} : memref<8x2x16xf32, #tpu.memory_space<vmem>>, vector<1x2x16xf32>,
    %cst_30 = arith.constant dense<0.000000e+00> : vector<2x48xf32>
    %113 = tpu.matmul %109, %8, %cst_30 {dimension_numbers = #tpu.dot_dimension_numbers<[1], [0], [0], [1], [0, 0, 1, 1], [], []>} : vector<2x16xf32>, vector<16x48xf32>, vector<2x48xf32> -> vector<2x48xf32>
    %114 = vector.broadcast %9 : vector<1x48xf32> to vector<2x48xf32>
    %115 = arith.addf %113, %114 : vector<2x48xf32>
    %116 = vector.extract_strided_slice %7 {offsets = [3, 0, 0], sizes = [1, 2, 48], strides = [1, 1, 1]} : vector<8x2x48xf32> to vector<1x2x48xf32>
    %117 = vector.shape_cast %116 : vector<1x2x48xf32> to vector<2x48xf32>
    %118 = vector.extract_strided_slice %117 {offsets = [0, 0], sizes = [2, 16], strides = [1, 1]} : vector<2x48xf32> to vector<2x16xf32>
    %119 = vector.extract_strided_slice %115 {offsets = [0, 0], sizes = [2, 16], strides = [1, 1]} : vector<2x48xf32> to vector<2x16xf32>
    %120 = arith.addf %118, %119 : vector<2x16xf32>
    %121 = arith.negf %120 : vector<2x16xf32>
    %122 = math.exp %121 : vector<2x16xf32>
    %cst_31 = arith.constant 1.000000e+00 : f32
    %123 = vector.broadcast %cst_31 : f32 to vector<2x16xf32>
    %124 = arith.addf %123, %122 : vector<2x16xf32>
    %125 = arith.divf %123, %124 : vector<2x16xf32>
    %126 = vector.extract_strided_slice %117 {offsets = [0, 16], sizes = [2, 16], strides = [1, 1]} : vector<2x48xf32> to vector<2x16xf32>
    %127 = vector.extract_strided_slice %115 {offsets = [0, 16], sizes = [2, 16], strides = [1, 1]} : vector<2x48xf32> to vector<2x16xf32>
    %128 = arith.addf %126, %127 : vector<2x16xf32>
    %129 = arith.negf %128 : vector<2x16xf32>
    %130 = math.exp %129 : vector<2x16xf32>
    %cst_32 = arith.constant 1.000000e+00 : f32
    %131 = vector.broadcast %cst_32 : f32 to vector<2x16xf32>
    %132 = arith.addf %131, %130 : vector<2x16xf32>
    %133 = arith.divf %131, %132 : vector<2x16xf32>
    %134 = vector.extract_strided_slice %117 {offsets = [0, 32], sizes = [2, 16], strides = [1, 1]} : vector<2x48xf32> to vector<2x16xf32>
    %135 = vector.extract_strided_slice %115 {offsets = [0, 32], sizes = [2, 16], strides = [1, 1]} : vector<2x48xf32> to vector<2x16xf32>
    %136 = arith.mulf %125, %135 : vector<2x16xf32>
    %137 = arith.addf %134, %136 : vector<2x16xf32>
    %138 = math.tanh %137 : vector<2x16xf32>
    %cst_33 = arith.constant 1.000000e+00 : f32
    %139 = vector.broadcast %cst_33 : f32 to vector<2x16xf32>
    %140 = arith.subf %139, %133 : vector<2x16xf32>
    %141 = arith.mulf %140, %138 : vector<2x16xf32>
    %142 = arith.mulf %133, %109 : vector<2x16xf32>
    %143 = arith.addf %141, %142 : vector<2x16xf32>
    %c3 = arith.constant 3 : index
    %c0_34 = arith.constant 0 : index
    %c0_35 = arith.constant 0 : index
    %144 = vector.load %arg15[%c3, %c0_34, %c0_35] : memref<8x2x16xf32, #tpu.memory_space<vmem>>, vector<1x2x16xf32>
    %145 = vector.shape_cast %144 : vector<1x2x16xf32> to vector<2x16xf32>
    %146 = vector.shape_cast %143 : vector<2x16xf32> to vector<1x2x16xf32>
    tpu.vector_store %arg15[%c3, %c0_34, %c0_35], %146 {strides = array<i32>} : memref<8x2x16xf32, #tpu.memory_space<vmem>>, vector<1x2x16xf32>,
    %cst_36 = arith.constant dense<0.000000e+00> : vector<2x48xf32>
    %147 = tpu.matmul %143, %8, %cst_36 {dimension_numbers = #tpu.dot_dimension_numbers<[1], [0], [0], [1], [0, 0, 1, 1], [], []>} : vector<2x16xf32>, vector<16x48xf32>, vector<2x48xf32> -> vector<2x48xf32>
    %148 = vector.broadcast %9 : vector<1x48xf32> to vector<2x48xf32>
    %149 = arith.addf %147, %148 : vector<2x48xf32>
    %150 = vector.extract_strided_slice %7 {offsets = [4, 0, 0], sizes = [1, 2, 48], strides = [1, 1, 1]} : vector<8x2x48xf32> to vector<1x2x48xf32>
    %151 = vector.shape_cast %150 : vector<1x2x48xf32> to vector<2x48xf32>
    %152 = vector.extract_strided_slice %151 {offsets = [0, 0], sizes = [2, 16], strides = [1, 1]} : vector<2x48xf32> to vector<2x16xf32>
    %153 = vector.extract_strided_slice %149 {offsets = [0, 0], sizes = [2, 16], strides = [1, 1]} : vector<2x48xf32> to vector<2x16xf32>
    %154 = arith.addf %152, %153 : vector<2x16xf32>
    %155 = arith.negf %154 : vector<2x16xf32>
    %156 = math.exp %155 : vector<2x16xf32>
    %cst_37 = arith.constant 1.000000e+00 : f32
    %157 = vector.broadcast %cst_37 : f32 to vector<2x16xf32>
    %158 = arith.addf %157, %156 : vector<2x16xf32>
    %159 = arith.divf %157, %158 : vector<2x16xf32>
    %160 = vector.extract_strided_slice %151 {offsets = [0, 16], sizes = [2, 16], strides = [1, 1]} : vector<2x48xf32> to vector<2x16xf32>
    %161 = vector.extract_strided_slice %149 {offsets = [0, 16], sizes = [2, 16], strides = [1, 1]} : vector<2x48xf32> to vector<2x16xf32>
    %162 = arith.addf %160, %161 : vector<2x16xf32>
    %163 = arith.negf %162 : vector<2x16xf32>
    %164 = math.exp %163 : vector<2x16xf32>
    %cst_38 = arith.constant 1.000000e+00 : f32
    %165 = vector.broadcast %cst_38 : f32 to vector<2x16xf32>
    %166 = arith.addf %165, %164 : vector<2x16xf32>
    %167 = arith.divf %165, %166 : vector<2x16xf32>
    %168 = vector.extract_strided_slice %151 {offsets = [0, 32], sizes = [2, 16], strides = [1, 1]} : vector<2x48xf32> to vector<2x16xf32>
    %169 = vector.extract_strided_slice %149 {offsets = [0, 32], sizes = [2, 16], strides = [1, 1]} : vector<2x48xf32> to vector<2x16xf32>
    %170 = arith.mulf %159, %169 : vector<2x16xf32>
    %171 = arith.addf %168, %170 : vector<2x16xf32>
    %172 = math.tanh %171 : vector<2x16xf32>
    %cst_39 = arith.constant 1.000000e+00 : f32
    %173 = vector.broadcast %cst_39 : f32 to vector<2x16xf32>
    %174 = arith.subf %173, %167 : vector<2x16xf32>
    %175 = arith.mulf %174, %172 : vector<2x16xf32>
    %176 = arith.mulf %167, %143 : vector<2x16xf32>
    %177 = arith.addf %175, %176 : vector<2x16xf32>
    %c4 = arith.constant 4 : index
    %c0_40 = arith.constant 0 : index
    %c0_41 = arith.constant 0 : index
    %178 = vector.load %arg15[%c4, %c0_40, %c0_41] : memref<8x2x16xf32, #tpu.memory_space<vmem>>, vector<1x2x16xf32>
    %179 = vector.shape_cast %178 : vector<1x2x16xf32> to vector<2x16xf32>
    %180 = vector.shape_cast %177 : vector<2x16xf32> to vector<1x2x16xf32>
    tpu.vector_store %arg15[%c4, %c0_40, %c0_41], %180 {strides = array<i32>} : memref<8x2x16xf32, #tpu.memory_space<vmem>>, vector<1x2x16xf32>,
    %cst_42 = arith.constant dense<0.000000e+00> : vector<2x48xf32>
    %181 = tpu.matmul %177, %8, %cst_42 {dimension_numbers = #tpu.dot_dimension_numbers<[1], [0], [0], [1], [0, 0, 1, 1], [], []>} : vector<2x16xf32>, vector<16x48xf32>, vector<2x48xf32> -> vector<2x48xf32>
    %182 = vector.broadcast %9 : vector<1x48xf32> to vector<2x48xf32>
    %183 = arith.addf %181, %182 : vector<2x48xf32>
    %184 = vector.extract_strided_slice %7 {offsets = [5, 0, 0], sizes = [1, 2, 48], strides = [1, 1, 1]} : vector<8x2x48xf32> to vector<1x2x48xf32>
    %185 = vector.shape_cast %184 : vector<1x2x48xf32> to vector<2x48xf32>
    %186 = vector.extract_strided_slice %185 {offsets = [0, 0], sizes = [2, 16], strides = [1, 1]} : vector<2x48xf32> to vector<2x16xf32>
    %187 = vector.extract_strided_slice %183 {offsets = [0, 0], sizes = [2, 16], strides = [1, 1]} : vector<2x48xf32> to vector<2x16xf32>
    %188 = arith.addf %186, %187 : vector<2x16xf32>
    %189 = arith.negf %188 : vector<2x16xf32>
    %190 = math.exp %189 : vector<2x16xf32>
    %cst_43 = arith.constant 1.000000e+00 : f32
    %191 = vector.broadcast %cst_43 : f32 to vector<2x16xf32>
    %192 = arith.addf %191, %190 : vector<2x16xf32>
    %193 = arith.divf %191, %192 : vector<2x16xf32>
    %194 = vector.extract_strided_slice %185 {offsets = [0, 16], sizes = [2, 16], strides = [1, 1]} : vector<2x48xf32> to vector<2x16xf32>
    %195 = vector.extract_strided_slice %183 {offsets = [0, 16], sizes = [2, 16], strides = [1, 1]} : vector<2x48xf32> to vector<2x16xf32>
    %196 = arith.addf %194, %195 : vector<2x16xf32>
    %197 = arith.negf %196 : vector<2x16xf32>
    %198 = math.exp %197 : vector<2x16xf32>
    %cst_44 = arith.constant 1.000000e+00 : f32
    %199 = vector.broadcast %cst_44 : f32 to vector<2x16xf32>
    %200 = arith.addf %199, %198 : vector<2x16xf32>
    %201 = arith.divf %199, %200 : vector<2x16xf32>
    %202 = vector.extract_strided_slice %185 {offsets = [0, 32], sizes = [2, 16], strides = [1, 1]} : vector<2x48xf32> to vector<2x16xf32>
    %203 = vector.extract_strided_slice %183 {offsets = [0, 32], sizes = [2, 16], strides = [1, 1]} : vector<2x48xf32> to vector<2x16xf32>
    %204 = arith.mulf %193, %203 : vector<2x16xf32>
    %205 = arith.addf %202, %204 : vector<2x16xf32>
    %206 = math.tanh %205 : vector<2x16xf32>
    %cst_45 = arith.constant 1.000000e+00 : f32
    %207 = vector.broadcast %cst_45 : f32 to vector<2x16xf32>
    %208 = arith.subf %207, %201 : vector<2x16xf32>
    %209 = arith.mulf %208, %206 : vector<2x16xf32>
    %210 = arith.mulf %201, %177 : vector<2x16xf32>
    %211 = arith.addf %209, %210 : vector<2x16xf32>
    %c5 = arith.constant 5 : index
    %c0_46 = arith.constant 0 : index
    %c0_47 = arith.constant 0 : index
    %212 = vector.load %arg15[%c5, %c0_46, %c0_47] : memref<8x2x16xf32, #tpu.memory_space<vmem>>, vector<1x2x16xf32>
    %213 = vector.shape_cast %212 : vector<1x2x16xf32> to vector<2x16xf32>
    %214 = vector.shape_cast %211 : vector<2x16xf32> to vector<1x2x16xf32>
    tpu.vector_store %arg15[%c5, %c0_46, %c0_47], %214 {strides = array<i32>} : memref<8x2x16xf32, #tpu.memory_space<vmem>>, vector<1x2x16xf32>,
    %cst_48 = arith.constant dense<0.000000e+00> : vector<2x48xf32>
    %215 = tpu.matmul %211, %8, %cst_48 {dimension_numbers = #tpu.dot_dimension_numbers<[1], [0], [0], [1], [0, 0, 1, 1], [], []>} : vector<2x16xf32>, vector<16x48xf32>, vector<2x48xf32> -> vector<2x48xf32>
    %216 = vector.broadcast %9 : vector<1x48xf32> to vector<2x48xf32>
    %217 = arith.addf %215, %216 : vector<2x48xf32>
    %218 = vector.extract_strided_slice %7 {offsets = [6, 0, 0], sizes = [1, 2, 48], strides = [1, 1, 1]} : vector<8x2x48xf32> to vector<1x2x48xf32>
    %219 = vector.shape_cast %218 : vector<1x2x48xf32> to vector<2x48xf32>
    %220 = vector.extract_strided_slice %219 {offsets = [0, 0], sizes = [2, 16], strides = [1, 1]} : vector<2x48xf32> to vector<2x16xf32>
    %221 = vector.extract_strided_slice %217 {offsets = [0, 0], sizes = [2, 16], strides = [1, 1]} : vector<2x48xf32> to vector<2x16xf32>
    %222 = arith.addf %220, %221 : vector<2x16xf32>
    %223 = arith.negf %222 : vector<2x16xf32>
    %224 = math.exp %223 : vector<2x16xf32>
    %cst_49 = arith.constant 1.000000e+00 : f32
    %225 = vector.broadcast %cst_49 : f32 to vector<2x16xf32>
    %226 = arith.addf %225, %224 : vector<2x16xf32>
    %227 = arith.divf %225, %226 : vector<2x16xf32>
    %228 = vector.extract_strided_slice %219 {offsets = [0, 16], sizes = [2, 16], strides = [1, 1]} : vector<2x48xf32> to vector<2x16xf32>
    %229 = vector.extract_strided_slice %217 {offsets = [0, 16], sizes = [2, 16], strides = [1, 1]} : vector<2x48xf32> to vector<2x16xf32>
    %230 = arith.addf %228, %229 : vector<2x16xf32>
    %231 = arith.negf %230 : vector<2x16xf32>
    %232 = math.exp %231 : vector<2x16xf32>
    %cst_50 = arith.constant 1.000000e+00 : f32
    %233 = vector.broadcast %cst_50 : f32 to vector<2x16xf32>
    %234 = arith.addf %233, %232 : vector<2x16xf32>
    %235 = arith.divf %233, %234 : vector<2x16xf32>
    %236 = vector.extract_strided_slice %219 {offsets = [0, 32], sizes = [2, 16], strides = [1, 1]} : vector<2x48xf32> to vector<2x16xf32>
    %237 = vector.extract_strided_slice %217 {offsets = [0, 32], sizes = [2, 16], strides = [1, 1]} : vector<2x48xf32> to vector<2x16xf32>
    %238 = arith.mulf %227, %237 : vector<2x16xf32>
    %239 = arith.addf %236, %238 : vector<2x16xf32>
    %240 = math.tanh %239 : vector<2x16xf32>
    %cst_51 = arith.constant 1.000000e+00 : f32
    %241 = vector.broadcast %cst_51 : f32 to vector<2x16xf32>
    %242 = arith.subf %241, %235 : vector<2x16xf32>
    %243 = arith.mulf %242, %240 : vector<2x16xf32>
    %244 = arith.mulf %235, %211 : vector<2x16xf32>
    %245 = arith.addf %243, %244 : vector<2x16xf32>
    %c6 = arith.constant 6 : index
    %c0_52 = arith.constant 0 : index
    %c0_53 = arith.constant 0 : index
    %246 = vector.load %arg15[%c6, %c0_52, %c0_53] : memref<8x2x16xf32, #tpu.memory_space<vmem>>, vector<1x2x16xf32>
    %247 = vector.shape_cast %246 : vector<1x2x16xf32> to vector<2x16xf32>
    %248 = vector.shape_cast %245 : vector<2x16xf32> to vector<1x2x16xf32>
    tpu.vector_store %arg15[%c6, %c0_52, %c0_53], %248 {strides = array<i32>} : memref<8x2x16xf32, #tpu.memory_space<vmem>>, vector<1x2x16xf32>,
    %cst_54 = arith.constant dense<0.000000e+00> : vector<2x48xf32>
    %249 = tpu.matmul %245, %8, %cst_54 {dimension_numbers = #tpu.dot_dimension_numbers<[1], [0], [0], [1], [0, 0, 1, 1], [], []>} : vector<2x16xf32>, vector<16x48xf32>, vector<2x48xf32> -> vector<2x48xf32>
    %250 = vector.broadcast %9 : vector<1x48xf32> to vector<2x48xf32>
    %251 = arith.addf %249, %250 : vector<2x48xf32>
    %252 = vector.extract_strided_slice %7 {offsets = [7, 0, 0], sizes = [1, 2, 48], strides = [1, 1, 1]} : vector<8x2x48xf32> to vector<1x2x48xf32>
    %253 = vector.shape_cast %252 : vector<1x2x48xf32> to vector<2x48xf32>
    %254 = vector.extract_strided_slice %253 {offsets = [0, 0], sizes = [2, 16], strides = [1, 1]} : vector<2x48xf32> to vector<2x16xf32>
    %255 = vector.extract_strided_slice %251 {offsets = [0, 0], sizes = [2, 16], strides = [1, 1]} : vector<2x48xf32> to vector<2x16xf32>
    %256 = arith.addf %254, %255 : vector<2x16xf32>
    %257 = arith.negf %256 : vector<2x16xf32>
    %258 = math.exp %257 : vector<2x16xf32>
    %cst_55 = arith.constant 1.000000e+00 : f32
    %259 = vector.broadcast %cst_55 : f32 to vector<2x16xf32>
    %260 = arith.addf %259, %258 : vector<2x16xf32>
    %261 = arith.divf %259, %260 : vector<2x16xf32>
    %262 = vector.extract_strided_slice %253 {offsets = [0, 16], sizes = [2, 16], strides = [1, 1]} : vector<2x48xf32> to vector<2x16xf32>
    %263 = vector.extract_strided_slice %251 {offsets = [0, 16], sizes = [2, 16], strides = [1, 1]} : vector<2x48xf32> to vector<2x16xf32>
    %264 = arith.addf %262, %263 : vector<2x16xf32>
    %265 = arith.negf %264 : vector<2x16xf32>
    %266 = math.exp %265 : vector<2x16xf32>
    %cst_56 = arith.constant 1.000000e+00 : f32
    %267 = vector.broadcast %cst_56 : f32 to vector<2x16xf32>
    %268 = arith.addf %267, %266 : vector<2x16xf32>
    %269 = arith.divf %267, %268 : vector<2x16xf32>
    %270 = vector.extract_strided_slice %253 {offsets = [0, 32], sizes = [2, 16], strides = [1, 1]} : vector<2x48xf32> to vector<2x16xf32>
    %271 = vector.extract_strided_slice %251 {offsets = [0, 32], sizes = [2, 16], strides = [1, 1]} : vector<2x48xf32> to vector<2x16xf32>
    %272 = arith.mulf %261, %271 : vector<2x16xf32>
    %273 = arith.addf %270, %272 : vector<2x16xf32>
    %274 = math.tanh %273 : vector<2x16xf32>
    %cst_57 = arith.constant 1.000000e+00 : f32
    %275 = vector.broadcast %cst_57 : f32 to vector<2x16xf32>
    %276 = arith.subf %275, %269 : vector<2x16xf32>
    %277 = arith.mulf %276, %274 : vector<2x16xf32>
    %278 = arith.mulf %269, %245 : vector<2x16xf32>
    %279 = arith.addf %277, %278 : vector<2x16xf32>
    %c7 = arith.constant 7 : index
    %c0_58 = arith.constant 0 : index
    %c0_59 = arith.constant 0 : index
    %280 = vector.load %arg15[%c7, %c0_58, %c0_59] : memref<8x2x16xf32, #tpu.memory_space<vmem>>, vector<1x2x16xf32>
    %281 = vector.shape_cast %280 : vector<1x2x16xf32> to vector<2x16xf32>
    %282 = vector.shape_cast %279 : vector<2x16xf32> to vector<1x2x16xf32>
    tpu.vector_store %arg15[%c7, %c0_58, %c0_59], %282 {strides = array<i32>} : memref<8x2x16xf32, #tpu.memory_space<vmem>>, vector<1x2x16xf32>,
    %c0_60 = arith.constant 0 : index
    %c0_61 = arith.constant 0 : index
    %c0_62 = arith.constant 0 : index
    %283 = vector.load %arg15[%c0_60, %c0_61, %c0_62] : memref<8x2x16xf32, #tpu.memory_space<vmem>>, vector<8x2x16xf32>
    %284 = vector.shape_cast %283 : vector<8x2x16xf32> to vector<16x16xf32>
    %cst_63 = arith.constant dense<0.000000e+00> : vector<16xf32>
    %285 = vector.multi_reduction <add>, %284, %cst_63 [0] : vector<16x16xf32> to vector<16xf32>
    %286 = vector.shape_cast %285 : vector<16xf32> to vector<1x16xf32>
    %cst_64 = arith.constant 1.600000e+01 : f32
    %287 = vector.broadcast %cst_64 : f32 to vector<1x16xf32>
    %288 = arith.divf %286, %287 : vector<1x16xf32>
    %289 = vector.broadcast %288 : vector<1x16xf32> to vector<16x16xf32>
    %290 = arith.subf %284, %289 : vector<16x16xf32>
    %291 = arith.mulf %290, %290 : vector<16x16xf32>
    %cst_65 = arith.constant dense<0.000000e+00> : vector<16xf32>
    %292 = vector.multi_reduction <add>, %291, %cst_65 [0] : vector<16x16xf32> to vector<16xf32>
    %293 = vector.shape_cast %292 : vector<16xf32> to vector<1x16xf32>
    %cst_66 = arith.constant 1.600000e+01 : f32
    %294 = vector.broadcast %cst_66 : f32 to vector<1x16xf32>
    %295 = arith.divf %293, %294 : vector<1x16xf32>
    %c0_67 = arith.constant 0 : index
    %c0_68 = arith.constant 0 : index
    %296 = vector.load %arg6[%c0_67, %c0_68] : memref<1x16xf32, #tpu.memory_space<vmem>>, vector<1x16xf32>
    %cst_69 = arith.constant 9.99999974E-6 : f32
    %297 = vector.broadcast %cst_69 : f32 to vector<1x16xf32>
    %298 = arith.addf %295, %297 : vector<1x16xf32>
    %299 = math.rsqrt %298 : vector<1x16xf32>
    %300 = arith.mulf %296, %299 : vector<1x16xf32>
    %c0_70 = arith.constant 0 : index
    %c0_71 = arith.constant 0 : index
    %301 = vector.load %arg7[%c0_70, %c0_71] : memref<1x16xf32, #tpu.memory_space<vmem>>, vector<1x16xf32>
    %302 = arith.mulf %288, %300 : vector<1x16xf32>
    %303 = arith.subf %301, %302 : vector<1x16xf32>
    %c0_72 = arith.constant 0 : index
    %c0_73 = arith.constant 0 : index
    %304 = vector.load %arg8[%c0_72, %c0_73] : memref<16x24xf32, #tpu.memory_space<vmem>>, vector<16x24xf32>
    %cst_74 = arith.constant dense<0.000000e+00> : vector<1x24xf32>
    %305 = tpu.matmul %303, %304, %cst_74 {dimension_numbers = #tpu.dot_dimension_numbers<[1], [0], [0], [1], [0, 0, 1, 1], [], []>} : vector<1x16xf32>, vector<16x24xf32>, vector<1x24xf32> -> vector<1x24xf32>
    %c0_75 = arith.constant 0 : index
    %c0_76 = arith.constant 0 : index
    %306 = vector.load %arg9[%c0_75, %c0_76] : memref<1x24xf32, #tpu.memory_space<vmem>>, vector<1x24xf32>
    %307 = arith.addf %305, %306 : vector<1x24xf32>
    %308 = vector.broadcast %300 : vector<1x16xf32> to vector<16x16xf32>
    %309 = arith.mulf %284, %308 : vector<16x16xf32>
    %c0_77 = arith.constant 0 : index
    %c0_78 = arith.constant 0 : index
    %310 = vector.load %arg8[%c0_77, %c0_78] : memref<16x24xf32, #tpu.memory_space<vmem>>, vector<16x24xf32>
    %cst_79 = arith.constant dense<0.000000e+00> : vector<16x24xf32>
    %311 = tpu.matmul %309, %310, %cst_79 {dimension_numbers = #tpu.dot_dimension_numbers<[1], [0], [0], [1], [0, 0, 1, 1], [], []>} : vector<16x16xf32>, vector<16x24xf32>, vector<16x24xf32> -> vector<16x24xf32>
    %312 = vector.broadcast %307 : vector<1x24xf32> to vector<16x24xf32>
    %313 = arith.addf %311, %312 : vector<16x24xf32>
    %cst_80 = arith.constant dense<0.000000e+00> : vector<24xf32>
    %314 = vector.multi_reduction <add>, %313, %cst_80 [0] : vector<16x24xf32> to vector<24xf32>
    %315 = vector.shape_cast %314 : vector<24xf32> to vector<1x24xf32>
    %cst_81 = arith.constant 1.600000e+01 : f32
    %316 = vector.broadcast %cst_81 : f32 to vector<1x24xf32>
    %317 = arith.divf %315, %316 : vector<1x24xf32>
    %318 = vector.broadcast %317 : vector<1x24xf32> to vector<16x24xf32>
    %319 = arith.subf %313, %318 : vector<16x24xf32>
    %320 = arith.mulf %319, %319 : vector<16x24xf32>
    %cst_82 = arith.constant dense<0.000000e+00> : vector<24xf32>
    %321 = vector.multi_reduction <add>, %320, %cst_82 [0] : vector<16x24xf32> to vector<24xf32>
    %322 = vector.shape_cast %321 : vector<24xf32> to vector<1x24xf32>
    %cst_83 = arith.constant 1.600000e+01 : f32
    %323 = vector.broadcast %cst_83 : f32 to vector<1x24xf32>
    %324 = arith.divf %322, %323 : vector<1x24xf32>
    %325 = vector.broadcast %317 : vector<1x24xf32> to vector<16x24xf32>
    %326 = arith.subf %313, %325 : vector<16x24xf32>
    %c0_84 = arith.constant 0 : index
    %c0_85 = arith.constant 0 : index
    %327 = vector.load %arg10[%c0_84, %c0_85] : memref<1x24xf32, #tpu.memory_space<vmem>>, vector<1x24xf32>
    %cst_86 = arith.constant 9.99999974E-6 : f32
    %328 = vector.broadcast %cst_86 : f32 to vector<1x24xf32>
    %329 = arith.addf %324, %328 : vector<1x24xf32>
    %330 = math.rsqrt %329 : vector<1x24xf32>
    %331 = arith.mulf %327, %330 : vector<1x24xf32>
    %332 = vector.broadcast %331 : vector<1x24xf32> to vector<16x24xf32>
    %333 = arith.mulf %326, %332 : vector<16x24xf32>
    %c0_87 = arith.constant 0 : index
    %c0_88 = arith.constant 0 : index
    %334 = vector.load %arg11[%c0_87, %c0_88] : memref<1x24xf32, #tpu.memory_space<vmem>>, vector<1x24xf32>
    %335 = vector.broadcast %334 : vector<1x24xf32> to vector<16x24xf32>
    %336 = arith.addf %333, %335 : vector<16x24xf32>
    %cst_89 = arith.constant 0.000000e+00 : f32
    %337 = vector.broadcast %cst_89 : f32 to vector<16x24xf32>
    %338 = arith.cmpf ogt, %336, %337 : vector<16x24xf32>
    %339 = math.exp %336 : vector<16x24xf32>
    %cst_90 = arith.constant 1.000000e+00 : f32
    %340 = vector.broadcast %cst_90 : f32 to vector<16x24xf32>
    %341 = arith.subf %339, %340 : vector<16x24xf32>
    %342 = arith.select %338, %336, %341 : vector<16x24xi1>, vector<16x24xf32>
    %c0_91 = arith.constant 0 : index
    %c0_92 = arith.constant 0 : index
    %343 = vector.load %arg12[%c0_91, %c0_92] : memref<24x6xf32, #tpu.memory_space<vmem>>, vector<24x6xf32>
    %cst_93 = arith.constant dense<0.000000e+00> : vector<16x6xf32>
    %344 = tpu.matmul %342, %343, %cst_93 {dimension_numbers = #tpu.dot_dimension_numbers<[1], [0], [0], [1], [0, 0, 1, 1], [], []>} : vector<16x24xf32>, vector<24x6xf32>, vector<16x6xf32> -> vector<16x6xf32>
    %c0_94 = arith.constant 0 : index
    %c0_95 = arith.constant 0 : index
    %345 = vector.load %arg13[%c0_94, %c0_95] : memref<1x6xf32, #tpu.memory_space<vmem>>, vector<1x6xf32>
    %346 = vector.broadcast %345 : vector<1x6xf32> to vector<16x6xf32>
    %347 = arith.addf %344, %346 : vector<16x6xf32>
    %c0_96 = arith.constant 0 : index
    %c0_97 = arith.constant 0 : index
    %348 = vector.load %arg0[%c0_96, %c0_97] : memref<2x2xf32, #tpu.memory_space<vmem>>, vector<2x2xf32>
    %349 = vector.shape_cast %348 : vector<2x2xf32> to vector<1x2x2xf32>
    %350 = vector.shape_cast %349 : vector<1x2x2xf32> to vector<1x2x2xf32>
    %351 = vector.broadcast %350 : vector<1x2x2xf32> to vector<8x2x2xf32>
    %352 = vector.shape_cast %351 : vector<8x2x2xf32> to vector<16x2xf32>
    %c0_98 = arith.constant 0 : index
    %c0_99 = arith.constant 0 : index
    %353 = vector.load %arg14[%c0_98, %c0_99] : memref<16x8xf32, #tpu.memory_space<vmem>>, vector<16x2xf32>
    tpu.vector_store %arg14[%c0_98, %c0_99], %352 {strides = array<i32>} : memref<16x8xf32, #tpu.memory_space<vmem>>, vector<16x2xf32>,
    %c0_100 = arith.constant 0 : index
    %c2_101 = arith.constant 2 : index
    %354 = vector.load %arg14[%c0_100, %c2_101] : memref<16x8xf32, #tpu.memory_space<vmem>>, vector<16x6xf32>
    tpu.vector_store %arg14[%c0_100, %c2_101], %347 {strides = array<i32>} : memref<16x8xf32, #tpu.memory_space<vmem>>, vector<16x6xf32>,
    return
  }
}

module attributes {stable_mosaic.version = 11 : i64} {
  func.func @_flow_loss_kernel(%arg0: memref<16x8xf32, #tpu.memory_space<vmem>>, %arg1: memref<16x8xf32, #tpu.memory_space<vmem>>, %arg2: memref<16x4xf32, #tpu.memory_space<vmem>>, %arg3: memref<1x4xf32, #tpu.memory_space<vmem>>, %arg4: memref<20x64xf32, #tpu.memory_space<vmem>>, %arg5: memref<1x64xf32, #tpu.memory_space<vmem>>, %arg6: memref<64x64xf32, #tpu.memory_space<vmem>>, %arg7: memref<1x64xf32, #tpu.memory_space<vmem>>, %arg8: memref<64x8xf32, #tpu.memory_space<vmem>>, %arg9: memref<1x8xf32, #tpu.memory_space<vmem>>, %arg10: memref<1x1x4xf32, #tpu.memory_space<vmem>>, %arg11: memref<1x1x4xf32, #tpu.memory_space<vmem>>, %arg12: memref<1x4xf32, #tpu.memory_space<vmem>>, %arg13: memref<20x64xf32, #tpu.memory_space<vmem>>, %arg14: memref<1x64xf32, #tpu.memory_space<vmem>>, %arg15: memref<64x64xf32, #tpu.memory_space<vmem>>, %arg16: memref<1x64xf32, #tpu.memory_space<vmem>>, %arg17: memref<64x8xf32, #tpu.memory_space<vmem>>, %arg18: memref<1x8xf32, #tpu.memory_space<vmem>>, %arg19: memref<1x1x4xf32, #tpu.memory_space<vmem>>, %arg20: memref<1x1x4xf32, #tpu.memory_space<vmem>>, %arg21: memref<1x1xf32, #tpu.memory_space<smem>>, %arg22: memref<16x20xf32, #tpu.memory_space<vmem>>) attributes {dimension_semantics = [], scalar_prefetch = 0 : i64, scratch_operands = 1 : i64, tpu.core_type = #tpu.core_type<tc>} {
    %c0 = arith.constant 0 : index
    %c0_0 = arith.constant 0 : index
    %0 = vector.load %arg0[%c0, %c0_0] : memref<16x8xf32, #tpu.memory_space<vmem>>, vector<16x8xf32>
    %c0_1 = arith.constant 0 : index
    %c0_2 = arith.constant 0 : index
    %1 = vector.load %arg22[%c0_1, %c0_2] : memref<16x20xf32, #tpu.memory_space<vmem>>, vector<16x8xf32>
    tpu.vector_store %arg22[%c0_1, %c0_2], %0 {strides = array<i32>} : memref<16x20xf32, #tpu.memory_space<vmem>>, vector<16x8xf32>,
    %c0_3 = arith.constant 0 : index
    %c0_4 = arith.constant 0 : index
    %2 = vector.load %arg1[%c0_3, %c0_4] : memref<16x8xf32, #tpu.memory_space<vmem>>, vector<16x8xf32>
    %c0_5 = arith.constant 0 : index
    %c8 = arith.constant 8 : index
    %3 = vector.load %arg22[%c0_5, %c8] : memref<16x20xf32, #tpu.memory_space<vmem>>, vector<16x8xf32>
    tpu.vector_store %arg22[%c0_5, %c8], %2 {strides = array<i32>} : memref<16x20xf32, #tpu.memory_space<vmem>>, vector<16x8xf32>,
    %c0_6 = arith.constant 0 : index
    %c0_7 = arith.constant 0 : index
    %4 = vector.load %arg2[%c0_6, %c0_7] : memref<16x4xf32, #tpu.memory_space<vmem>>, vector<16x4xf32>
    %cst = arith.constant 0.000000e+00 : f32
    %5 = vector.broadcast %cst : f32 to vector<8x2x4xf32>
    %c0_8 = arith.constant 0 : index
    %c0_9 = arith.constant 0 : index
    %6 = vector.load %arg3[%c0_8, %c0_9] : memref<1x4xf32, #tpu.memory_space<vmem>>, vector<1x4xf32>
    %c0_10 = arith.constant 0 : index
    %c0_11 = arith.constant 0 : index
    %7 = vector.load %arg4[%c0_10, %c0_11] : memref<20x64xf32, #tpu.memory_space<vmem>>, vector<20x64xf32>
    %c0_12 = arith.constant 0 : index
    %c0_13 = arith.constant 0 : index
    %8 = vector.load %arg6[%c0_12, %c0_13] : memref<64x64xf32, #tpu.memory_space<vmem>>, vector<64x64xf32>
    %c0_14 = arith.constant 0 : index
    %c0_15 = arith.constant 0 : index
    %9 = vector.load %arg8[%c0_14, %c0_15] : memref<64x8xf32, #tpu.memory_space<vmem>>, vector<64x8xf32>
    %c0_16 = arith.constant 0 : index
    %c0_17 = arith.constant 0 : index
    %10 = vector.load %arg5[%c0_16, %c0_17] : memref<1x64xf32, #tpu.memory_space<vmem>>, vector<1x64xf32>
    %c0_18 = arith.constant 0 : index
    %c0_19 = arith.constant 0 : index
    %11 = vector.load %arg7[%c0_18, %c0_19] : memref<1x64xf32, #tpu.memory_space<vmem>>, vector<1x64xf32>
    %c0_20 = arith.constant 0 : index
    %c0_21 = arith.constant 0 : index
    %12 = vector.load %arg9[%c0_20, %c0_21] : memref<1x8xf32, #tpu.memory_space<vmem>>, vector<1x8xf32>
    %c0_22 = arith.constant 0 : index
    %c0_23 = arith.constant 0 : index
    %c0_24 = arith.constant 0 : index
    %13 = vector.load %arg10[%c0_22, %c0_23, %c0_24] : memref<1x1x4xf32, #tpu.memory_space<vmem>>, vector<1x1x4xf32>
    %c0_25 = arith.constant 0 : index
    %c0_26 = arith.constant 0 : index
    %c0_27 = arith.constant 0 : index
    %14 = vector.load %arg11[%c0_25, %c0_26, %c0_27] : memref<1x1x4xf32, #tpu.memory_space<vmem>>, vector<1x1x4xf32>
    %15 = vector.broadcast %6 : vector<1x4xf32> to vector<16x4xf32>
    %16 = arith.mulf %4, %15 : vector<16x4xf32>
    %c0_28 = arith.constant 0 : index
    %c16 = arith.constant 16 : index
    %17 = vector.load %arg22[%c0_28, %c16] : memref<16x20xf32, #tpu.memory_space<vmem>>, vector<16x4xf32>
    tpu.vector_store %arg22[%c0_28, %c16], %16 {strides = array<i32>} : memref<16x20xf32, #tpu.memory_space<vmem>>, vector<16x4xf32>,
    %c0_29 = arith.constant 0 : index
    %c0_30 = arith.constant 0 : index
    %18 = vector.load %arg22[%c0_29, %c0_30] : memref<16x20xf32, #tpu.memory_space<vmem>>, vector<16x20xf32>
    %cst_31 = arith.constant dense<0.000000e+00> : vector<16x64xf32>
    %19 = tpu.matmul %18, %7, %cst_31 {dimension_numbers = #tpu.dot_dimension_numbers<[1], [0], [0], [1], [0, 0, 1, 1], [], []>} : vector<16x20xf32>, vector<20x64xf32>, vector<16x64xf32> -> vector<16x64xf32>
    %20 = vector.broadcast %10 : vector<1x64xf32> to vector<16x64xf32>
    %21 = arith.addf %19, %20 : vector<16x64xf32>
    %22 = tpu.iota {dimensions = array<i32: 1>} : vector<16x64xi32>
    %c32_i32 = arith.constant 32 : i32
    %23 = vector.broadcast %c32_i32 : i32 to vector<16x64xi32>
    %24 = arith.cmpi slt, %22, %23 : vector<16x64xi32>
    %25 = math.tanh %21 : vector<16x64xf32>
    %cst_32 = arith.constant 0.000000e+00 : f32
    %26 = vector.broadcast %cst_32 : f32 to vector<16x64xf32>
    %27 = arith.maximumf %21, %26 : vector<16x64xf32>
    %28 = arith.select %24, %25, %27 : vector<16x64xi1>, vector<16x64xf32>
    %cst_33 = arith.constant dense<0.000000e+00> : vector<16x64xf32>
    %29 = tpu.matmul %28, %8, %cst_33 {dimension_numbers = #tpu.dot_dimension_numbers<[1], [0], [0], [1], [0, 0, 1, 1], [], []>} : vector<16x64xf32>, vector<64x64xf32>, vector<16x64xf32> -> vector<16x64xf32>
    %30 = vector.broadcast %11 : vector<1x64xf32> to vector<16x64xf32>
    %31 = arith.addf %29, %30 : vector<16x64xf32>
    %32 = tpu.iota {dimensions = array<i32: 1>} : vector<16x64xi32>
    %c32_i32_34 = arith.constant 32 : i32
    %33 = vector.broadcast %c32_i32_34 : i32 to vector<16x64xi32>
    %34 = arith.cmpi slt, %32, %33 : vector<16x64xi32>
    %35 = math.tanh %31 : vector<16x64xf32>
    %cst_35 = arith.constant 0.000000e+00 : f32
    %36 = vector.broadcast %cst_35 : f32 to vector<16x64xf32>
    %37 = arith.maximumf %31, %36 : vector<16x64xf32>
    %38 = arith.select %34, %35, %37 : vector<16x64xi1>, vector<16x64xf32>
    %cst_36 = arith.constant dense<0.000000e+00> : vector<16x8xf32>
    %39 = tpu.matmul %38, %9, %cst_36 {dimension_numbers = #tpu.dot_dimension_numbers<[1], [0], [0], [1], [0, 0, 1, 1], [], []>} : vector<16x64xf32>, vector<64x8xf32>, vector<16x8xf32> -> vector<16x8xf32>
    %40 = vector.broadcast %12 : vector<1x8xf32> to vector<16x8xf32>
    %41 = arith.addf %39, %40 : vector<16x8xf32>
    %42 = vector.extract_strided_slice %41 {offsets = [0, 0], sizes = [16, 4], strides = [1, 1]} : vector<16x8xf32> to vector<16x4xf32>
    %43 = vector.extract_strided_slice %41 {offsets = [0, 4], sizes = [16, 4], strides = [1, 1]} : vector<16x8xf32> to vector<16x4xf32>
    %cst_37 = arith.constant 1.000000e+00 : f32
    %44 = vector.broadcast %cst_37 : f32 to vector<1x4xf32>
    %45 = arith.subf %44, %6 : vector<1x4xf32>
    %46 = arith.subf %4, %43 : vector<16x4xf32>
    %47 = vector.broadcast %45 : vector<1x4xf32> to vector<16x4xf32>
    %48 = arith.mulf %47, %46 : vector<16x4xf32>
    %cst_38 = arith.constant 0.000000e+00 : f32
    %49 = vector.broadcast %cst_38 : f32 to vector<16x4xf32>
    %50 = arith.subf %49, %42 : vector<16x4xf32>
    %51 = math.exp %50 : vector<16x4xf32>
    %52 = arith.mulf %48, %51 : vector<16x4xf32>
    %53 = arith.addf %16, %52 : vector<16x4xf32>
    %cst_39 = arith.constant 1.000000e+00 : f32
    %54 = vector.broadcast %cst_39 : f32 to vector<1x4xf32>
    %55 = arith.subf %54, %6 : vector<1x4xf32>
    %cst_40 = arith.constant 0.000000e+00 : f32
    %56 = vector.broadcast %cst_40 : f32 to vector<1x4xf32>
    %57 = arith.subf %56, %55 : vector<1x4xf32>
    %58 = vector.broadcast %57 : vector<1x4xf32> to vector<16x4xf32>
    %59 = arith.mulf %58, %42 : vector<16x4xf32>
    %60 = vector.shape_cast %59 : vector<16x4xf32> to vector<8x2x4xf32>
    %61 = arith.addf %5, %60 : vector<8x2x4xf32>
    %62 = vector.shape_cast %53 : vector<16x4xf32> to vector<8x2x4xf32>
    %cst_41 = arith.constant dense<0.000000e+00> : vector<8x4xf32>
    %63 = vector.multi_reduction <add>, %62, %cst_41 [1] : vector<8x2x4xf32> to vector<8x4xf32>
    %64 = vector.shape_cast %63 : vector<8x4xf32> to vector<8x1x4xf32>
    %cst_42 = arith.constant 2.000000e+00 : f32
    %65 = vector.broadcast %cst_42 : f32 to vector<8x1x4xf32>
    %66 = arith.divf %64, %65 : vector<8x1x4xf32>
    %67 = vector.broadcast %66 : vector<8x1x4xf32> to vector<8x2x4xf32>
    %68 = arith.subf %62, %67 : vector<8x2x4xf32>
    %69 = arith.mulf %68, %68 : vector<8x2x4xf32>
    %cst_43 = arith.constant dense<0.000000e+00> : vector<8x4xf32>
    %70 = vector.multi_reduction <add>, %69, %cst_43 [1] : vector<8x2x4xf32> to vector<8x4xf32>
    %71 = vector.shape_cast %70 : vector<8x4xf32> to vector<8x1x4xf32>
    %cst_44 = arith.constant 1.000000e+00 : f32
    %72 = vector.broadcast %cst_44 : f32 to vector<8x1x4xf32>
    %73 = arith.divf %71, %72 : vector<8x1x4xf32>
    %74 = math.exp %13 : vector<1x1x4xf32>
    %75 = vector.broadcast %66 : vector<8x1x4xf32> to vector<8x2x4xf32>
    %76 = arith.subf %62, %75 : vector<8x2x4xf32>
    %77 = vector.broadcast %74 : vector<1x1x4xf32> to vector<8x2x4xf32>
    %78 = arith.mulf %77, %76 : vector<8x2x4xf32>
    %cst_45 = arith.constant 9.99999974E-6 : f32
    %79 = vector.broadcast %cst_45 : f32 to vector<8x1x4xf32>
    %80 = arith.addf %73, %79 : vector<8x1x4xf32>
    %81 = math.rsqrt %80 : vector<8x1x4xf32>
    %82 = vector.broadcast %81 : vector<8x1x4xf32> to vector<8x2x4xf32>
    %83 = arith.mulf %78, %82 : vector<8x2x4xf32>
    %84 = vector.broadcast %14 : vector<1x1x4xf32> to vector<8x2x4xf32>
    %85 = arith.addf %83, %84 : vector<8x2x4xf32>
    %86 = vector.shape_cast %85 : vector<8x2x4xf32> to vector<16x4xf32>
    %cst_46 = arith.constant 9.99999974E-6 : f32
    %87 = vector.broadcast %cst_46 : f32 to vector<8x1x4xf32>
    %88 = arith.addf %73, %87 : vector<8x1x4xf32>
    %89 = math.log %88 : vector<8x1x4xf32>
    %cst_47 = arith.constant 5.000000e-01 : f32
    %90 = vector.broadcast %cst_47 : f32 to vector<8x1x4xf32>
    %91 = arith.mulf %90, %89 : vector<8x1x4xf32>
    %92 = vector.broadcast %13 : vector<1x1x4xf32> to vector<8x1x4xf32>
    %93 = arith.subf %92, %91 : vector<8x1x4xf32>
    %94 = vector.broadcast %93 : vector<8x1x4xf32> to vector<8x2x4xf32>
    %95 = arith.addf %61, %94 : vector<8x2x4xf32>
    %c0_48 = arith.constant 0 : index
    %c0_49 = arith.constant 0 : index
    %96 = vector.load %arg12[%c0_48, %c0_49] : memref<1x4xf32, #tpu.memory_space<vmem>>, vector<1x4xf32>
    %c0_50 = arith.constant 0 : index
    %c0_51 = arith.constant 0 : index
    %97 = vector.load %arg13[%c0_50, %c0_51] : memref<20x64xf32, #tpu.memory_space<vmem>>, vector<20x64xf32>
    %c0_52 = arith.constant 0 : index
    %c0_53 = arith.constant 0 : index
    %98 = vector.load %arg15[%c0_52, %c0_53] : memref<64x64xf32, #tpu.memory_space<vmem>>, vector<64x64xf32>
    %c0_54 = arith.constant 0 : index
    %c0_55 = arith.constant 0 : index
    %99 = vector.load %arg17[%c0_54, %c0_55] : memref<64x8xf32, #tpu.memory_space<vmem>>, vector<64x8xf32>
    %c0_56 = arith.constant 0 : index
    %c0_57 = arith.constant 0 : index
    %100 = vector.load %arg14[%c0_56, %c0_57] : memref<1x64xf32, #tpu.memory_space<vmem>>, vector<1x64xf32>
    %c0_58 = arith.constant 0 : index
    %c0_59 = arith.constant 0 : index
    %101 = vector.load %arg16[%c0_58, %c0_59] : memref<1x64xf32, #tpu.memory_space<vmem>>, vector<1x64xf32>
    %c0_60 = arith.constant 0 : index
    %c0_61 = arith.constant 0 : index
    %102 = vector.load %arg18[%c0_60, %c0_61] : memref<1x8xf32, #tpu.memory_space<vmem>>, vector<1x8xf32>
    %c0_62 = arith.constant 0 : index
    %c0_63 = arith.constant 0 : index
    %c0_64 = arith.constant 0 : index
    %103 = vector.load %arg19[%c0_62, %c0_63, %c0_64] : memref<1x1x4xf32, #tpu.memory_space<vmem>>, vector<1x1x4xf32>
    %c0_65 = arith.constant 0 : index
    %c0_66 = arith.constant 0 : index
    %c0_67 = arith.constant 0 : index
    %104 = vector.load %arg20[%c0_65, %c0_66, %c0_67] : memref<1x1x4xf32, #tpu.memory_space<vmem>>, vector<1x1x4xf32>
    %105 = vector.broadcast %96 : vector<1x4xf32> to vector<16x4xf32>
    %106 = arith.mulf %86, %105 : vector<16x4xf32>
    %c0_68 = arith.constant 0 : index
    %c16_69 = arith.constant 16 : index
    %107 = vector.load %arg22[%c0_68, %c16_69] : memref<16x20xf32, #tpu.memory_space<vmem>>, vector<16x4xf32>
    tpu.vector_store %arg22[%c0_68, %c16_69], %106 {strides = array<i32>} : memref<16x20xf32, #tpu.memory_space<vmem>>, vector<16x4xf32>,
    %c0_70 = arith.constant 0 : index
    %c0_71 = arith.constant 0 : index
    %108 = vector.load %arg22[%c0_70, %c0_71] : memref<16x20xf32, #tpu.memory_space<vmem>>, vector<16x20xf32>
    %cst_72 = arith.constant dense<0.000000e+00> : vector<16x64xf32>
    %109 = tpu.matmul %108, %97, %cst_72 {dimension_numbers = #tpu.dot_dimension_numbers<[1], [0], [0], [1], [0, 0, 1, 1], [], []>} : vector<16x20xf32>, vector<20x64xf32>, vector<16x64xf32> -> vector<16x64xf32>
    %110 = vector.broadcast %100 : vector<1x64xf32> to vector<16x64xf32>
    %111 = arith.addf %109, %110 : vector<16x64xf32>
    %112 = tpu.iota {dimensions = array<i32: 1>} : vector<16x64xi32>
    %c32_i32_73 = arith.constant 32 : i32
    %113 = vector.broadcast %c32_i32_73 : i32 to vector<16x64xi32>
    %114 = arith.cmpi slt, %112, %113 : vector<16x64xi32>
    %115 = math.tanh %111 : vector<16x64xf32>
    %cst_74 = arith.constant 0.000000e+00 : f32
    %116 = vector.broadcast %cst_74 : f32 to vector<16x64xf32>
    %117 = arith.maximumf %111, %116 : vector<16x64xf32>
    %118 = arith.select %114, %115, %117 : vector<16x64xi1>, vector<16x64xf32>
    %cst_75 = arith.constant dense<0.000000e+00> : vector<16x64xf32>
    %119 = tpu.matmul %118, %98, %cst_75 {dimension_numbers = #tpu.dot_dimension_numbers<[1], [0], [0], [1], [0, 0, 1, 1], [], []>} : vector<16x64xf32>, vector<64x64xf32>, vector<16x64xf32> -> vector<16x64xf32>
    %120 = vector.broadcast %101 : vector<1x64xf32> to vector<16x64xf32>
    %121 = arith.addf %119, %120 : vector<16x64xf32>
    %122 = tpu.iota {dimensions = array<i32: 1>} : vector<16x64xi32>
    %c32_i32_76 = arith.constant 32 : i32
    %123 = vector.broadcast %c32_i32_76 : i32 to vector<16x64xi32>
    %124 = arith.cmpi slt, %122, %123 : vector<16x64xi32>
    %125 = math.tanh %121 : vector<16x64xf32>
    %cst_77 = arith.constant 0.000000e+00 : f32
    %126 = vector.broadcast %cst_77 : f32 to vector<16x64xf32>
    %127 = arith.maximumf %121, %126 : vector<16x64xf32>
    %128 = arith.select %124, %125, %127 : vector<16x64xi1>, vector<16x64xf32>
    %cst_78 = arith.constant dense<0.000000e+00> : vector<16x8xf32>
    %129 = tpu.matmul %128, %99, %cst_78 {dimension_numbers = #tpu.dot_dimension_numbers<[1], [0], [0], [1], [0, 0, 1, 1], [], []>} : vector<16x64xf32>, vector<64x8xf32>, vector<16x8xf32> -> vector<16x8xf32>
    %130 = vector.broadcast %102 : vector<1x8xf32> to vector<16x8xf32>
    %131 = arith.addf %129, %130 : vector<16x8xf32>
    %132 = vector.extract_strided_slice %131 {offsets = [0, 0], sizes = [16, 4], strides = [1, 1]} : vector<16x8xf32> to vector<16x4xf32>
    %133 = vector.extract_strided_slice %131 {offsets = [0, 4], sizes = [16, 4], strides = [1, 1]} : vector<16x8xf32> to vector<16x4xf32>
    %cst_79 = arith.constant 1.000000e+00 : f32
    %134 = vector.broadcast %cst_79 : f32 to vector<1x4xf32>
    %135 = arith.subf %134, %96 : vector<1x4xf32>
    %136 = arith.subf %86, %133 : vector<16x4xf32>
    %137 = vector.broadcast %135 : vector<1x4xf32> to vector<16x4xf32>
    %138 = arith.mulf %137, %136 : vector<16x4xf32>
    %cst_80 = arith.constant 0.000000e+00 : f32
    %139 = vector.broadcast %cst_80 : f32 to vector<16x4xf32>
    %140 = arith.subf %139, %132 : vector<16x4xf32>
    %141 = math.exp %140 : vector<16x4xf32>
    %142 = arith.mulf %138, %141 : vector<16x4xf32>
    %143 = arith.addf %106, %142 : vector<16x4xf32>
    %cst_81 = arith.constant 1.000000e+00 : f32
    %144 = vector.broadcast %cst_81 : f32 to vector<1x4xf32>
    %145 = arith.subf %144, %96 : vector<1x4xf32>
    %cst_82 = arith.constant 0.000000e+00 : f32
    %146 = vector.broadcast %cst_82 : f32 to vector<1x4xf32>
    %147 = arith.subf %146, %145 : vector<1x4xf32>
    %148 = vector.broadcast %147 : vector<1x4xf32> to vector<16x4xf32>
    %149 = arith.mulf %148, %132 : vector<16x4xf32>
    %150 = vector.shape_cast %149 : vector<16x4xf32> to vector<8x2x4xf32>
    %151 = arith.addf %95, %150 : vector<8x2x4xf32>
    %152 = vector.shape_cast %143 : vector<16x4xf32> to vector<8x2x4xf32>
    %cst_83 = arith.constant dense<0.000000e+00> : vector<8x4xf32>
    %153 = vector.multi_reduction <add>, %152, %cst_83 [1] : vector<8x2x4xf32> to vector<8x4xf32>
    %154 = vector.shape_cast %153 : vector<8x4xf32> to vector<8x1x4xf32>
    %cst_84 = arith.constant 2.000000e+00 : f32
    %155 = vector.broadcast %cst_84 : f32 to vector<8x1x4xf32>
    %156 = arith.divf %154, %155 : vector<8x1x4xf32>
    %157 = vector.broadcast %156 : vector<8x1x4xf32> to vector<8x2x4xf32>
    %158 = arith.subf %152, %157 : vector<8x2x4xf32>
    %159 = arith.mulf %158, %158 : vector<8x2x4xf32>
    %cst_85 = arith.constant dense<0.000000e+00> : vector<8x4xf32>
    %160 = vector.multi_reduction <add>, %159, %cst_85 [1] : vector<8x2x4xf32> to vector<8x4xf32>
    %161 = vector.shape_cast %160 : vector<8x4xf32> to vector<8x1x4xf32>
    %cst_86 = arith.constant 1.000000e+00 : f32
    %162 = vector.broadcast %cst_86 : f32 to vector<8x1x4xf32>
    %163 = arith.divf %161, %162 : vector<8x1x4xf32>
    %164 = math.exp %103 : vector<1x1x4xf32>
    %165 = vector.broadcast %156 : vector<8x1x4xf32> to vector<8x2x4xf32>
    %166 = arith.subf %152, %165 : vector<8x2x4xf32>
    %167 = vector.broadcast %164 : vector<1x1x4xf32> to vector<8x2x4xf32>
    %168 = arith.mulf %167, %166 : vector<8x2x4xf32>
    %cst_87 = arith.constant 9.99999974E-6 : f32
    %169 = vector.broadcast %cst_87 : f32 to vector<8x1x4xf32>
    %170 = arith.addf %163, %169 : vector<8x1x4xf32>
    %171 = math.rsqrt %170 : vector<8x1x4xf32>
    %172 = vector.broadcast %171 : vector<8x1x4xf32> to vector<8x2x4xf32>
    %173 = arith.mulf %168, %172 : vector<8x2x4xf32>
    %174 = vector.broadcast %104 : vector<1x1x4xf32> to vector<8x2x4xf32>
    %175 = arith.addf %173, %174 : vector<8x2x4xf32>
    %176 = vector.shape_cast %175 : vector<8x2x4xf32> to vector<16x4xf32>
    %cst_88 = arith.constant 9.99999974E-6 : f32
    %177 = vector.broadcast %cst_88 : f32 to vector<8x1x4xf32>
    %178 = arith.addf %163, %177 : vector<8x1x4xf32>
    %179 = math.log %178 : vector<8x1x4xf32>
    %cst_89 = arith.constant 5.000000e-01 : f32
    %180 = vector.broadcast %cst_89 : f32 to vector<8x1x4xf32>
    %181 = arith.mulf %180, %179 : vector<8x1x4xf32>
    %182 = vector.broadcast %103 : vector<1x1x4xf32> to vector<8x1x4xf32>
    %183 = arith.subf %182, %181 : vector<8x1x4xf32>
    %184 = vector.broadcast %183 : vector<8x1x4xf32> to vector<8x2x4xf32>
    %185 = arith.addf %151, %184 : vector<8x2x4xf32>
    %186 = vector.shape_cast %176 : vector<16x4xf32> to vector<8x2x4xf32>
    %cst_90 = arith.constant 0.000000e+00 : f32
    %187 = vector.broadcast %cst_90 : f32 to vector<2x4xf32>
    %188 = vector.extract_strided_slice %186 {offsets = [0, 0, 0], sizes = [1, 2, 4], strides = [1, 1, 1]} : vector<8x2x4xf32> to vector<1x2x4xf32>
    %189 = vector.shape_cast %188 : vector<1x2x4xf32> to vector<2x4xf32>
    %cst_91 = arith.constant 5.000000e+01 : f32
    %190 = vector.broadcast %cst_91 : f32 to vector<2x4xf32>
    %191 = arith.mulf %190, %189 : vector<2x4xf32>
    %192 = vector.extract_strided_slice %186 {offsets = [0, 0, 0], sizes = [1, 2, 4], strides = [1, 1, 1]} : vector<8x2x4xf32> to vector<1x2x4xf32>
    %193 = vector.shape_cast %192 : vector<1x2x4xf32> to vector<2x4xf32>
    %194 = arith.mulf %191, %193 : vector<2x4xf32>
    %195 = arith.addf %187, %194 : vector<2x4xf32>
    %196 = vector.extract_strided_slice %186 {offsets = [1, 0, 0], sizes = [1, 2, 4], strides = [1, 1, 1]} : vector<8x2x4xf32> to vector<1x2x4xf32>
    %197 = vector.shape_cast %196 : vector<1x2x4xf32> to vector<2x4xf32>
    %cst_92 = arith.constant 1.250000e+01 : f32
    %198 = vector.broadcast %cst_92 : f32 to vector<2x4xf32>
    %199 = arith.mulf %198, %197 : vector<2x4xf32>
    %200 = vector.extract_strided_slice %186 {offsets = [1, 0, 0], sizes = [1, 2, 4], strides = [1, 1, 1]} : vector<8x2x4xf32> to vector<1x2x4xf32>
    %201 = vector.shape_cast %200 : vector<1x2x4xf32> to vector<2x4xf32>
    %202 = arith.mulf %199, %201 : vector<2x4xf32>
    %203 = arith.addf %195, %202 : vector<2x4xf32>
    %204 = vector.extract_strided_slice %186 {offsets = [2, 0, 0], sizes = [1, 2, 4], strides = [1, 1, 1]} : vector<8x2x4xf32> to vector<1x2x4xf32>
    %205 = vector.shape_cast %204 : vector<1x2x4xf32> to vector<2x4xf32>
    %cst_93 = arith.constant 5.55555534 : f32
    %206 = vector.broadcast %cst_93 : f32 to vector<2x4xf32>
    %207 = arith.mulf %206, %205 : vector<2x4xf32>
    %208 = vector.extract_strided_slice %186 {offsets = [2, 0, 0], sizes = [1, 2, 4], strides = [1, 1, 1]} : vector<8x2x4xf32> to vector<1x2x4xf32>
    %209 = vector.shape_cast %208 : vector<1x2x4xf32> to vector<2x4xf32>
    %210 = arith.mulf %207, %209 : vector<2x4xf32>
    %211 = arith.addf %203, %210 : vector<2x4xf32>
    %212 = vector.extract_strided_slice %186 {offsets = [3, 0, 0], sizes = [1, 2, 4], strides = [1, 1, 1]} : vector<8x2x4xf32> to vector<1x2x4xf32>
    %213 = vector.shape_cast %212 : vector<1x2x4xf32> to vector<2x4xf32>
    %cst_94 = arith.constant 3.125000e+00 : f32
    %214 = vector.broadcast %cst_94 : f32 to vector<2x4xf32>
    %215 = arith.mulf %214, %213 : vector<2x4xf32>
    %216 = vector.extract_strided_slice %186 {offsets = [3, 0, 0], sizes = [1, 2, 4], strides = [1, 1, 1]} : vector<8x2x4xf32> to vector<1x2x4xf32>
    %217 = vector.shape_cast %216 : vector<1x2x4xf32> to vector<2x4xf32>
    %218 = arith.mulf %215, %217 : vector<2x4xf32>
    %219 = arith.addf %211, %218 : vector<2x4xf32>
    %220 = vector.extract_strided_slice %186 {offsets = [4, 0, 0], sizes = [1, 2, 4], strides = [1, 1, 1]} : vector<8x2x4xf32> to vector<1x2x4xf32>
    %221 = vector.shape_cast %220 : vector<1x2x4xf32> to vector<2x4xf32>
    %cst_95 = arith.constant 2.000000e+00 : f32
    %222 = vector.broadcast %cst_95 : f32 to vector<2x4xf32>
    %223 = arith.mulf %222, %221 : vector<2x4xf32>
    %224 = vector.extract_strided_slice %186 {offsets = [4, 0, 0], sizes = [1, 2, 4], strides = [1, 1, 1]} : vector<8x2x4xf32> to vector<1x2x4xf32>
    %225 = vector.shape_cast %224 : vector<1x2x4xf32> to vector<2x4xf32>
    %226 = arith.mulf %223, %225 : vector<2x4xf32>
    %227 = arith.addf %219, %226 : vector<2x4xf32>
    %228 = vector.extract_strided_slice %186 {offsets = [5, 0, 0], sizes = [1, 2, 4], strides = [1, 1, 1]} : vector<8x2x4xf32> to vector<1x2x4xf32>
    %229 = vector.shape_cast %228 : vector<1x2x4xf32> to vector<2x4xf32>
    %cst_96 = arith.constant 1.38888884 : f32
    %230 = vector.broadcast %cst_96 : f32 to vector<2x4xf32>
    %231 = arith.mulf %230, %229 : vector<2x4xf32>
    %232 = vector.extract_strided_slice %186 {offsets = [5, 0, 0], sizes = [1, 2, 4], strides = [1, 1, 1]} : vector<8x2x4xf32> to vector<1x2x4xf32>
    %233 = vector.shape_cast %232 : vector<1x2x4xf32> to vector<2x4xf32>
    %234 = arith.mulf %231, %233 : vector<2x4xf32>
    %235 = arith.addf %227, %234 : vector<2x4xf32>
    %236 = vector.extract_strided_slice %186 {offsets = [6, 0, 0], sizes = [1, 2, 4], strides = [1, 1, 1]} : vector<8x2x4xf32> to vector<1x2x4xf32>
    %237 = vector.shape_cast %236 : vector<1x2x4xf32> to vector<2x4xf32>
    %cst_97 = arith.constant 1.02040815 : f32
    %238 = vector.broadcast %cst_97 : f32 to vector<2x4xf32>
    %239 = arith.mulf %238, %237 : vector<2x4xf32>
    %240 = vector.extract_strided_slice %186 {offsets = [6, 0, 0], sizes = [1, 2, 4], strides = [1, 1, 1]} : vector<8x2x4xf32> to vector<1x2x4xf32>
    %241 = vector.shape_cast %240 : vector<1x2x4xf32> to vector<2x4xf32>
    %242 = arith.mulf %239, %241 : vector<2x4xf32>
    %243 = arith.addf %235, %242 : vector<2x4xf32>
    %244 = vector.extract_strided_slice %186 {offsets = [7, 0, 0], sizes = [1, 2, 4], strides = [1, 1, 1]} : vector<8x2x4xf32> to vector<1x2x4xf32>
    %245 = vector.shape_cast %244 : vector<1x2x4xf32> to vector<2x4xf32>
    %cst_98 = arith.constant 7.812500e-01 : f32
    %246 = vector.broadcast %cst_98 : f32 to vector<2x4xf32>
    %247 = arith.mulf %246, %245 : vector<2x4xf32>
    %248 = vector.extract_strided_slice %186 {offsets = [7, 0, 0], sizes = [1, 2, 4], strides = [1, 1, 1]} : vector<8x2x4xf32> to vector<1x2x4xf32>
    %249 = vector.shape_cast %248 : vector<1x2x4xf32> to vector<2x4xf32>
    %250 = arith.mulf %247, %249 : vector<2x4xf32>
    %251 = arith.addf %243, %250 : vector<2x4xf32>
    %cst_99 = arith.constant dense<0.000000e+00> : vector<2x4xf32>
    %252 = vector.multi_reduction <add>, %185, %cst_99 [0] : vector<8x2x4xf32> to vector<2x4xf32>
    %253 = arith.subf %251, %252 : vector<2x4xf32>
    %cst_100 = arith.constant 8.000000e+00 : f32
    %254 = vector.broadcast %cst_100 : f32 to vector<2x4xf32>
    %255 = arith.divf %253, %254 : vector<2x4xf32>
    %256 = vector.shape_cast %255 : vector<2x4xf32> to vector<1x2x4xf32>
    %cst_101 = arith.constant dense<0.000000e+00> : vector<1xf32>
    %257 = vector.multi_reduction <add>, %256, %cst_101 [1, 2] : vector<1x2x4xf32> to vector<1xf32>
    %258 = vector.shape_cast %257 : vector<1xf32> to vector<1x1x1xf32>
    %259 = vector.extract %258[0, 0, 0] : f32 from vector<1x1x1xf32>
    %cst_102 = arith.constant 2.000000e+00 : f32
    %260 = arith.divf %259, %cst_102 : f32
    %c0_103 = arith.constant 0 : index
    %c0_104 = arith.constant 0 : index
    %261 = memref.load %arg21[%c0_103, %c0_104] : memref<1x1xf32, #tpu.memory_space<smem>>
    memref.store %260, %arg21[%c0_103, %c0_104] : memref<1x1xf32, #tpu.memory_space<smem>>
    return
  }
}

</mosaic_0001>

<llo_original>
// kernel: tcnf_forward.4
$region0: #{tcnf_forward.4}
  #allocation0 [shape = 'u32[]', space=smem, size = 0x4, offset = 0x4, fixed_abs, tag = 'smem constant byte address 0x4 - core index']
  #allocation1 [shape = 'u32[144,128]{1,0:T(1,128)}', space=vmem, size = 0x12000, scoped, tag = 'internal scratch']
  %s0 = inlined_call_operand.vmem [shape: f32[16,8], index: 0, kind: input, shape index: {}]
  %s1 = inlined_call_operand.vmem [shape: f32[1,8], index: 1, kind: input, shape index: {}]
  %s2 = inlined_call_operand.vmem [shape: f32[1,8], index: 2, kind: input, shape index: {}]
  %s3 = inlined_call_operand.vmem [shape: f32[8,24], index: 3, kind: input, shape index: {}]
  %s4 = inlined_call_operand.vmem [shape: f32[1,24], index: 4, kind: input, shape index: {}]
  %s5 = inlined_call_operand.vmem [shape: f32[1,24], index: 5, kind: input, shape index: {}]
  %s6 = inlined_call_operand.vmem [shape: f32[1,24], index: 6, kind: input, shape index: {}]
  %s7 = inlined_call_operand.vmem [shape: f32[24,8], index: 7, kind: input, shape index: {}]
  %s8 = inlined_call_operand.vmem [shape: f32[1,8], index: 8, kind: input, shape index: {}]
  %s9 = inlined_call_operand.vmem [shape: f32[16,8], index: 9, kind: output, shape index: {}]
  %s10 = sld [smem:[#allocation0]]
  $region46: #{tcnf_forward.4} parent=0
    _
  %s12 = ssub.s32 1, %s10
  %s13 = scalar_select 0, %s12, %s10
  // Predicated region
  $region2: #{tcnf_forward.4} parent=0 // pred_check
    _
  $region3: #{tcnf_forward.4} parent=0 // pred_check_branch
    %15 = sbr.rel (0) target = $region5
  $region4: #{tcnf_forward.4} parent=0 // pred_region
    _
  $region5: #{tcnf_forward.4} parent=0 // pred_fallthru
    _
  // Predicated region
  $region6: #{tcnf_forward.4} parent=0 // pred_check
    _
  $region7: #{tcnf_forward.4} parent=0 // pred_check_branch
    %17 = sbr.rel (0) target = $region9
  $region8: #{tcnf_forward.4} parent=0 // pred_region
    _
  $region9: #{tcnf_forward.4} parent=0 // pred_fallthru
    _
  // Predicated region
  $region10: #{tcnf_forward.4} parent=0 // pred_check
    _
  $region11: #{tcnf_forward.4} parent=0 // pred_check_branch
    %19 = sbr.rel (0) target = $region13
  $region12: #{tcnf_forward.4} parent=0 // pred_region
    _
  $region13: #{tcnf_forward.4} parent=0 // pred_fallthru
    _
  // Predicated region
  $region14: #{tcnf_forward.4} parent=0 // pred_check
    _
  $region15: #{tcnf_forward.4} parent=0 // pred_check_branch
    %21 = sbr.rel (0) target = $region17
  $region16: #{tcnf_forward.4} parent=0 // pred_region
    _
  $region17: #{tcnf_forward.4} parent=0 // pred_fallthru
    _
  // Predicated region
  $region18: #{tcnf_forward.4} parent=0 // pred_check
    _
  $region19: #{tcnf_forward.4} parent=0 // pred_check_branch
    %23 = sbr.rel (0) target = $region21
  $region20: #{tcnf_forward.4} parent=0 // pred_region
    _
  $region21: #{tcnf_forward.4} parent=0 // pred_fallthru
    _
  // Predicated region
  $region22: #{tcnf_forward.4} parent=0 // pred_check
    _
  $region23: #{tcnf_forward.4} parent=0 // pred_check_branch
    %25 = sbr.rel (0) target = $region25
  $region24: #{tcnf_forward.4} parent=0 // pred_region
    _
  $region25: #{tcnf_forward.4} parent=0 // pred_fallthru
    _
  // Predicated region
  $region26: #{tcnf_forward.4} parent=0 // pred_check
    _
  $region27: #{tcnf_forward.4} parent=0 // pred_check_branch
    %27 = sbr.rel (0) target = $region29
  $region28: #{tcnf_forward.4} parent=0 // pred_region
    _
  $region29: #{tcnf_forward.4} parent=0 // pred_fallthru
    _
  // Predicated region
  $region30: #{tcnf_forward.4} parent=0 // pred_check
    _
  $region31: #{tcnf_forward.4} parent=0 // pred_check_branch
    %29 = sbr.rel (0) target = $region33
  $region32: #{tcnf_forward.4} parent=0 // pred_region
    _
  $region33: #{tcnf_forward.4} parent=0 // pred_fallthru
    _
  // Predicated region
  $region34: #{tcnf_forward.4} parent=0 // pred_check
    _
  $region35: #{tcnf_forward.4} parent=0 // pred_check_branch
    %31 = sbr.rel (0) target = $region37
  $region36: #{tcnf_forward.4} parent=0 // pred_region
    _
  $region37: #{tcnf_forward.4} parent=0 // pred_fallthru
    _
  %v32 = vld [vmem:[%s0] sm:$0xff]
  %v33 = vld [vmem:[%s0 + $0x8] sm:$0xff]
  %vm34 = vcmask 64512
  %v35 = vsel %vm34, %v32, 0.0
  %v36 = vsel %vm34, %v33, 0.0
  %v37 = vadd.f32 %v35, %v36
  %v38 = vrot.slane %v37, 4
  %v39 = vadd.f32 %v37, %v38
  %v40 = vrot.slane %v39, 2
  %v41 = vadd.f32 %v39, %v40
  %v42 = vrot.slane %v41, 1
  %v43 = vadd.f32 %v41, %v42
  %v44 = vrcp.pop 16.0
  %v45 = vmul.f32 %v43, %v44
  %v46 = vsub.f32 %v32, %v45
  %v47 = vsub.f32 %v33, %v45
  %v48 = vmul.f32 %v46, %v46
  %v49 = vmul.f32 %v47, %v47
  %v50 = vsel %vm34, %v48, 0.0
  %v51 = vsel %vm34, %v49, 0.0
  %v52 = vadd.f32 %v50, %v51
  %v53 = vrot.slane %v52, 4
  %v54 = vadd.f32 %v52, %v53
  %v55 = vrot.slane %v54, 2
  %v56 = vadd.f32 %v54, %v55
  %v57 = vrot.slane %v56, 1
  %v58 = vadd.f32 %v56, %v57
  %v59 = vmul.f32 %v58, %v44
  %v60 = vld [vmem:[%s1] sm:$0x1]
  %v61 = vadd.f32 %v59, 1e-05
  %v62 = vrsqrt.pop %v61
  %v63 = vmul.f32 %v60, %v62
  %v64 = vld [vmem:[%s2] sm:$0x1]
  %v65 = vmul.f32 %v45, %v63
  %v66 = vsub.f32 %v64, %v65
  %v67 = vld [vmem:[%s3] sm:$0xff]
  %v68 = vld [vmem:[%s4] sm:$0x1]
  %v70 = vsel %vm34, %v66, 0
  %72 = vmatprep.subr.mxu0 0.0
  %73 = vmatpush1.msra.mxu0 %v67
  %74 = vmatprep.subr.mxu0 0.0
  %75 = vmatpush1.msra.mxu0 0.0
  %76 = vmatprep.subr.mxu0 0.0
  %77 = vmatpush1.msra.mxu0 0.0
  %78 = vmatprep.subr.mxu0 0.0
  %79 = vmatpush1.msra.mxu0 0.0
  %80 = vmatprep.subr.mxu0 0.0
  %81 = vmatpush1.msra.mxu0 0.0
  %82 = vmatprep.subr.mxu0 0.0
  %83 = vmatpush1.msra.mxu0 0.0
  %84 = vmatprep.subr.mxu0 0.0
  %85 = vmatpush1.msra.mxu0 0.0
  %86 = vmatprep.subr.mxu0 0.0
  %87 = vmatpush1.msra.mxu0 0.0
  %88 = vmatprep.subr.mxu0 0.0
  %89 = vmatpush1.msra.mxu0 0.0
  %90 = vmatprep.subr.mxu0 0.0
  %91 = vmatpush1.msra.mxu0 0.0
  %92 = vmatprep.subr.mxu0 0.0
  %93 = vmatpush1.msra.mxu0 0.0
  %94 = vmatprep.subr.mxu0 0.0
  %95 = vmatpush1.msra.mxu0 0.0
  %96 = vmatprep.subr.mxu0 0.0
  %97 = vmatpush1.msra.mxu0 0.0
  %98 = vmatprep.subr.mxu0 0.0
  %99 = vmatpush1.msra.mxu0 0.0
  %100 = vmatprep.subr.mxu0 0.0
  %101 = vmatpush1.msra.mxu0 0.0
  %102 = vmatprep.subr.mxu0 0.0
  %103 = vmatpush1.msra.mxu0 0.0
  %104 = vmatprep.subr.mxu0 0.0
  %105 = vmatpush1.msra.mxu0 0.0
  %106 = vmatprep.subr.mxu0 0.0
  %107 = vmatpush1.msra.mxu0 0.0
  %108 = vmatprep.subr.mxu0 0.0
  %109 = vmatpush1.msra.mxu0 0.0
  %110 = vmatprep.subr.mxu0 0.0
  %111 = vmatpush1.msra.mxu0 0.0
  %112 = vmatprep.subr.mxu0 0.0
  %113 = vmatpush1.msra.mxu0 0.0
  %114 = vmatprep.subr.mxu0 0.0
  %115 = vmatpush1.msra.mxu0 0.0
  %116 = vmatprep.subr.mxu0 0.0
  %117 = vmatpush1.msra.mxu0 0.0
  %118 = vmatprep.subr.mxu0 0.0
  %119 = vmatpush1.msra.mxu0 0.0
  %120 = vmatprep.subr.mxu0 0.0
  %121 = vmatpush1.msra.mxu0 0.0
  %122 = vmatprep.subr.mxu0 0.0
  %123 = vmatpush1.msra.mxu0 0.0
  %124 = vmatprep.subr.mxu0 0.0
  %125 = vmatpush1.msra.mxu0 0.0
  %126 = vmatprep.subr.mxu0 0.0
  %127 = vmatpush1.msra.mxu0 0.0
  %128 = vmatprep.subr.mxu0 0.0
  %129 = vmatpush1.msra.mxu0 0.0
  %130 = vmatprep.subr.mxu0 0.0
  %131 = vmatpush1.msra.mxu0 0.0
  %132 = vmatprep.subr.mxu0 0.0
  %133 = vmatpush1.msra.mxu0 0.0
  %134 = vmatprep.subr.mxu0 0.0
  %135 = vmatpush1.msra.mxu0 0.0
  %136 = vmatprep.mubr.f32.mxu0 0.0
  %137 = vmatmul.mubr.f32.gmra.mrb[0].mxu0 %v70
  %v138 = vpop.f32.mrb[0].mxu0
  %v139 = vadd.f32 %v68, %v138
  %v140 = vpop.f32.mrb[0].mxu0
  %141 = vdwg.mxu0
  %v143 = vlaneseq
  %v144 = vshrl.u32 %v143, 7
  %v145 = vsub.s32 0, %v144
  %v146 = vrot.slane %v63, %v145
  %v148 = vmul.f32 %v32, %v146
  %v149 = vmul.f32 %v33, %v146
  %v150 = vlaneseq
  %v151 = vshrl.u32 %v150, 7
  %v152 = vsub.s32 0, %v151
  %v153 = vrot.slane %v139, %v152
  %v155 = vsel %vm34, %v148, 0
  %v158 = vsel %vm34, %v149, 0
  %160 = vmatprep.subr.mxu0 0.0
  %161 = vmatpush1.msra.mxu0 %v67
  %162 = vmatprep.subr.mxu0 0.0
  %163 = vmatpush1.msra.mxu0 0.0
  %164 = vmatprep.subr.mxu0 0.0
  %165 = vmatpush1.msra.mxu0 0.0
  %166 = vmatprep.subr.mxu0 0.0
  %167 = vmatpush1.msra.mxu0 0.0
  %168 = vmatprep.subr.mxu0 0.0
  %169 = vmatpush1.msra.mxu0 0.0
  %170 = vmatprep.subr.mxu0 0.0
  %171 = vmatpush1.msra.mxu0 0.0
  %172 = vmatprep.subr.mxu0 0.0
  %173 = vmatpush1.msra.mxu0 0.0
  %174 = vmatprep.subr.mxu0 0.0
  %175 = vmatpush1.msra.mxu0 0.0
  %176 = vmatprep.subr.mxu0 0.0
  %177 = vmatpush1.msra.mxu0 0.0
  %178 = vmatprep.subr.mxu0 0.0
  %179 = vmatpush1.msra.mxu0 0.0
  %180 = vmatprep.subr.mxu0 0.0
  %181 = vmatpush1.msra.mxu0 0.0
  %182 = vmatprep.subr.mxu0 0.0
  %183 = vmatpush1.msra.mxu0 0.0
  %184 = vmatprep.subr.mxu0 0.0
  %185 = vmatpush1.msra.mxu0 0.0
  %186 = vmatprep.subr.mxu0 0.0
  %187 = vmatpush1.msra.mxu0 0.0
  %188 = vmatprep.subr.mxu0 0.0
  %189 = vmatpush1.msra.mxu0 0.0
  %190 = vmatprep.subr.mxu0 0.0
  %191 = vmatpush1.msra.mxu0 0.0
  %192 = vmatprep.subr.mxu0 0.0
  %193 = vmatpush1.msra.mxu0 0.0
  %194 = vmatprep.subr.mxu0 0.0
  %195 = vmatpush1.msra.mxu0 0.0
  %196 = vmatprep.subr.mxu0 0.0
  %197 = vmatpush1.msra.mxu0 0.0
  %198 = vmatprep.subr.mxu0 0.0
  %199 = vmatpush1.msra.mxu0 0.0
  %200 = vmatprep.subr.mxu0 0.0
  %201 = vmatpush1.msra.mxu0 0.0
  %202 = vmatprep.subr.mxu0 0.0
  %203 = vmatpush1.msra.mxu0 0.0
  %204 = vmatprep.subr.mxu0 0.0
  %205 = vmatpush1.msra.mxu0 0.0
  %206 = vmatprep.subr.mxu0 0.0
  %207 = vmatpush1.msra.mxu0 0.0
  %208 = vmatprep.subr.mxu0 0.0
  %209 = vmatpush1.msra.mxu0 0.0
  %210 = vmatprep.subr.mxu0 0.0
  %211 = vmatpush1.msra.mxu0 0.0
  %212 = vmatprep.subr.mxu0 0.0
  %213 = vmatpush1.msra.mxu0 0.0
  %214 = vmatprep.subr.mxu0 0.0
  %215 = vmatpush1.msra.mxu0 0.0
  %216 = vmatprep.subr.mxu0 0.0
  %217 = vmatpush1.msra.mxu0 0.0
  %218 = vmatprep.subr.mxu0 0.0
  %219 = vmatpush1.msra.mxu0 0.0
  %220 = vmatprep.subr.mxu0 0.0
  %221 = vmatpush1.msra.mxu0 0.0
  %222 = vmatprep.subr.mxu0 0.0
  %223 = vmatpush1.msra.mxu0 0.0
  %224 = vmatprep.mubr.f32.mxu0 0.0
  %225 = vmatmul.mubr.f32.gmra.mrb[0].mxu0 %v155
  %v226 = vpop.f32.mrb[0].mxu0
  %v227 = vadd.f32 %v153, %v226
  %v228 = vpop.f32.mrb[0].mxu0
  %229 = vmatprep.mubr.f32.mxu0 0.0
  %230 = vmatmul.mubr.f32.gmra.mrb[0].mxu0 %v158
  %v231 = vpop.f32.mrb[0].mxu0
  %v232 = vadd.f32 %v153, %v231
  %v233 = vpop.f32.mrb[0].mxu0
  %234 = vdwg.mxu0
  %vm235 = vcmask 195584
  %v236 = vsel %vm235, %v227, 0.0
  %v237 = vsel %vm235, %v232, 0.0
  %v238 = vadd.f32 %v236, %v237
  %v239 = vrot.slane %v238, 4
  %v240 = vadd.f32 %v238, %v239
  %v241 = vrot.slane %v240, 2
  %v242 = vadd.f32 %v240, %v241
  %v243 = vrot.slane %v242, 1
  %v244 = vadd.f32 %v242, %v243
  %v245 = vmul.f32 %v244, %v44
  %v246 = vsub.f32 %v227, %v245
  %v247 = vsub.f32 %v232, %v245
  %v248 = vmul.f32 %v246, %v246
  %v249 = vmul.f32 %v247, %v247
  %v250 = vsel %vm235, %v248, 0.0
  %v251 = vsel %vm235, %v249, 0.0
  %v252 = vadd.f32 %v250, %v251
  %v253 = vrot.slane %v252, 4
  %v254 = vadd.f32 %v252, %v253
  %v255 = vrot.slane %v254, 2
  %v256 = vadd.f32 %v254, %v255
  %v257 = vrot.slane %v256, 1
  %v258 = vadd.f32 %v256, %v257
  %v259 = vmul.f32 %v258, %v44
  %v260 = vld [vmem:[%s5] sm:$0x1]
  %v261 = vadd.f32 %v259, 1e-05
  %v262 = vrsqrt.pop %v261
  %v263 = vmul.f32 %v260, %v262
  %v265 = vlaneseq
  %v266 = vshrl.u32 %v265, 7
  %v267 = vsub.s32 0, %v266
  %v268 = vrot.slane %v263, %v267
  %v270 = vmul.f32 %v246, %v268
  %v271 = vmul.f32 %v247, %v268
  %v272 = vld [vmem:[%s6] sm:$0x1]
  %v274 = vlaneseq
  %v275 = vshrl.u32 %v274, 7
  %v276 = vsub.s32 0, %v275
  %v277 = vrot.slane %v272, %v276
  %v279 = vadd.f32 %v270, %v277
  %v280 = vadd.f32 %v271, %v277
  %vm281 = vcmp.gt.f32.partialorder %v279, 0.0
  %vm282 = vcmp.gt.f32.partialorder %v280, 0.0
  %v283 = vmul.f32 %v279, 1.442695
  %v284 = vpow.pop %v283
  %v285 = vmul.f32 %v280, 1.442695
  %v286 = vpow.pop %v285
  %v287 = vsub.f32 %v284, 1.0
  %v288 = vsub.f32 %v286, 1.0
  %v289 = vsel %vm281, %v279, %v287
  %v290 = vsel %vm282, %v280, %v288
  %v291 = vld [vmem:[%s7] sm:$0xff]
  %v292 = vld [vmem:[%s7 + $0x8] sm:$0xff]
  %v293 = vld [vmem:[%s7 + $0x10] sm:$0xff]
  %v294 = vld [vmem:[%s8] sm:$0x1]
  %v296 = vlaneseq
  %v297 = vshrl.u32 %v296, 7
  %v298 = vsub.s32 0, %v297
  %v299 = vrot.slane %v294, %v298
  %v302 = vsel %vm235, %v289, 0
  %v305 = vsel %vm235, %v290, 0
  %307 = vmatprep.subr.mxu0 0.0
  %308 = vmatpush1.msra.mxu0 %v291
  %309 = vmatprep.subr.mxu0 0.0
  %310 = vmatpush1.msra.mxu0 %v292
  %311 = vmatprep.subr.mxu0 0.0
  %312 = vmatpush1.msra.mxu0 %v293
  %313 = vmatprep.subr.mxu0 0.0
  %314 = vmatpush1.msra.mxu0 0.0
  %315 = vmatprep.subr.mxu0 0.0
  %316 = vmatpush1.msra.mxu0 0.0
  %317 = vmatprep.subr.mxu0 0.0
  %318 = vmatpush1.msra.mxu0 0.0
  %319 = vmatprep.subr.mxu0 0.0
  %320 = vmatpush1.msra.mxu0 0.0
  %321 = vmatprep.subr.mxu0 0.0
  %322 = vmatpush1.msra.mxu0 0.0
  %323 = vmatprep.subr.mxu0 0.0
  %324 = vmatpush1.msra.mxu0 0.0
  %325 = vmatprep.subr.mxu0 0.0
  %326 = vmatpush1.msra.mxu0 0.0
  %327 = vmatprep.subr.mxu0 0.0
  %328 = vmatpush1.msra.mxu0 0.0
  %329 = vmatprep.subr.mxu0 0.0
  %330 = vmatpush1.msra.mxu0 0.0
  %331 = vmatprep.subr.mxu0 0.0
  %332 = vmatpush1.msra.mxu0 0.0
  %333 = vmatprep.subr.mxu0 0.0
  %334 = vmatpush1.msra.mxu0 0.0
  %335 = vmatprep.subr.mxu0 0.0
  %336 = vmatpush1.msra.mxu0 0.0
  %337 = vmatprep.subr.mxu0 0.0
  %338 = vmatpush1.msra.mxu0 0.0
  %339 = vmatprep.subr.mxu0 0.0
  %340 = vmatpush1.msra.mxu0 0.0
  %341 = vmatprep.subr.mxu0 0.0
  %342 = vmatpush1.msra.mxu0 0.0
  %343 = vmatprep.subr.mxu0 0.0
  %344 = vmatpush1.msra.mxu0 0.0
  %345 = vmatprep.subr.mxu0 0.0
  %346 = vmatpush1.msra.mxu0 0.0
  %347 = vmatprep.subr.mxu0 0.0
  %348 = vmatpush1.msra.mxu0 0.0
  %349 = vmatprep.subr.mxu0 0.0
  %350 = vmatpush1.msra.mxu0 0.0
  %351 = vmatprep.subr.mxu0 0.0
  %352 = vmatpush1.msra.mxu0 0.0
  %353 = vmatprep.subr.mxu0 0.0
  %354 = vmatpush1.msra.mxu0 0.0
  %355 = vmatprep.subr.mxu0 0.0
  %356 = vmatpush1.msra.mxu0 0.0
  %357 = vmatprep.subr.mxu0 0.0
  %358 = vmatpush1.msra.mxu0 0.0
  %359 = vmatprep.subr.mxu0 0.0
  %360 = vmatpush1.msra.mxu0 0.0
  %361 = vmatprep.subr.mxu0 0.0
  %362 = vmatpush1.msra.mxu0 0.0
  %363 = vmatprep.subr.mxu0 0.0
  %364 = vmatpush1.msra.mxu0 0.0
  %365 = vmatprep.subr.mxu0 0.0
  %366 = vmatpush1.msra.mxu0 0.0
  %367 = vmatprep.subr.mxu0 0.0
  %368 = vmatpush1.msra.mxu0 0.0
  %369 = vmatprep.subr.mxu0 0.0
  %370 = vmatpush1.msra.mxu0 0.0
  %371 = vmatprep.mubr.f32.mxu0 0.0
  %372 = vmatmul.mubr.f32.gmra.mrb[0].mxu0 %v302
  %v373 = vpop.f32.mrb[0].mxu0
  %v374 = vadd.f32 %v299, %v373
  %v375 = vpop.f32.mrb[0].mxu0
  %376 = vmatprep.mubr.f32.mxu0 0.0
  %377 = vmatmul.mubr.f32.gmra.mrb[0].mxu0 %v305
  %v378 = vpop.f32.mrb[0].mxu0
  %v379 = vadd.f32 %v299, %v378
  %v380 = vpop.f32.mrb[0].mxu0
  %381 = vdwg.mxu0
  %382 = vst.msk [vmem:[%s9] sm:$0xff] %vm34, %v374
  %383 = vst.msk [vmem:[%s9 + $0x8] sm:$0xff] %vm34, %v379
  // Predicated region
  $region38: #{tcnf_forward.4} parent=0 // pred_check
    _
  $region39: #{tcnf_forward.4} parent=0 // pred_check_branch
    %385 = sbr.rel (0) target = $region41
  $region40: #{tcnf_forward.4} parent=0 // pred_region
    _
  $region41: #{tcnf_forward.4} parent=0 // pred_fallthru
    _
  // Predicated region
  $region42: #{tcnf_forward.4} parent=0 // pred_check
    _
  $region43: #{tcnf_forward.4} parent=0 // pred_check_branch
    %387 = sbr.rel (0) target = $region45
  $region44: #{tcnf_forward.4} parent=0 // pred_region
    _
  $region45: #{tcnf_forward.4} parent=0 // pred_fallthru
    _

// kernel: tcnf_forward.3
$region0: #{tcnf_forward.3}
  #allocation0 [shape = 'u32[]', space=smem, size = 0x4, offset = 0x4, fixed_abs, tag = 'smem constant byte address 0x4 - core index']
  #allocation1 [shape = 'u32[144,128]{1,0:T(1,128)}', space=vmem, size = 0x12000, scoped, tag = 'internal scratch']
  #allocation2 [shape = 'f32[8,2,16]{2,1,0:T(2,128)}', space=vmem, size = 0x2000, scoped, tag = 'scratch operand']
  %s0 = inlined_call_operand.vmem [shape: f32[2,2], index: 0, kind: input, shape index: {}]
  %s1 = inlined_call_operand.vmem [shape: f32[8,2,3], index: 1, kind: input, shape index: {}]
  %s2 = inlined_call_operand.vmem [shape: f32[3,48], index: 2, kind: input, shape index: {}]
  %s3 = inlined_call_operand.vmem [shape: f32[16,48], index: 3, kind: input, shape index: {}]
  %s4 = inlined_call_operand.vmem [shape: f32[1,48], index: 4, kind: input, shape index: {}]
  %s5 = inlined_call_operand.vmem [shape: f32[1,48], index: 5, kind: input, shape index: {}]
  %s6 = inlined_call_operand.vmem [shape: f32[1,16], index: 6, kind: input, shape index: {}]
  %s7 = inlined_call_operand.vmem [shape: f32[1,16], index: 7, kind: input, shape index: {}]
  %s8 = inlined_call_operand.vmem [shape: f32[16,24], index: 8, kind: input, shape index: {}]
  %s9 = inlined_call_operand.vmem [shape: f32[1,24], index: 9, kind: input, shape index: {}]
  %s10 = inlined_call_operand.vmem [shape: f32[1,24], index: 10, kind: input, shape index: {}]
  %s11 = inlined_call_operand.vmem [shape: f32[1,24], index: 11, kind: input, shape index: {}]
  %s12 = inlined_call_operand.vmem [shape: f32[24,6], index: 12, kind: input, shape index: {}]
  %s13 = inlined_call_operand.vmem [shape: f32[1,6], index: 13, kind: input, shape index: {}]
  %s14 = inlined_call_operand.vmem [shape: f32[16,8], index: 14, kind: output, shape index: {}]
  %s15 = sld [smem:[#allocation0]]
  $region66: #{tcnf_forward.3} parent=0
    _
  %s17 = ssub.s32 1, %s15
  %s18 = scalar_select 0, %s17, %s15
  // Predicated region
  $region2: #{tcnf_forward.3} parent=0 // pred_check
    _
  $region3: #{tcnf_forward.3} parent=0 // pred_check_branch
    %20 = sbr.rel (0) target = $region5
  $region4: #{tcnf_forward.3} parent=0 // pred_region
    _
  $region5: #{tcnf_forward.3} parent=0 // pred_fallthru
    _
  // Predicated region
  $region6: #{tcnf_forward.3} parent=0 // pred_check
    _
  $region7: #{tcnf_forward.3} parent=0 // pred_check_branch
    %22 = sbr.rel (0) target = $region9
  $region8: #{tcnf_forward.3} parent=0 // pred_region
    _
  $region9: #{tcnf_forward.3} parent=0 // pred_fallthru
    _
  // Predicated region
  $region10: #{tcnf_forward.3} parent=0 // pred_check
    _
  $region11: #{tcnf_forward.3} parent=0 // pred_check_branch
    %24 = sbr.rel (0) target = $region13
  $region12: #{tcnf_forward.3} parent=0 // pred_region
    _
  $region13: #{tcnf_forward.3} parent=0 // pred_fallthru
    _
  // Predicated region
  $region14: #{tcnf_forward.3} parent=0 // pred_check
    _
  $region15: #{tcnf_forward.3} parent=0 // pred_check_branch
    %26 = sbr.rel (0) target = $region17
  $region16: #{tcnf_forward.3} parent=0 // pred_region
    _
  $region17: #{tcnf_forward.3} parent=0 // pred_fallthru
    _
  // Predicated region
  $region18: #{tcnf_forward.3} parent=0 // pred_check
    _
  $region19: #{tcnf_forward.3} parent=0 // pred_check_branch
    %28 = sbr.rel (0) target = $region21
  $region20: #{tcnf_forward.3} parent=0 // pred_region
    _
  $region21: #{tcnf_forward.3} parent=0 // pred_fallthru
    _
  // Predicated region
  $region22: #{tcnf_forward.3} parent=0 // pred_check
    _
  $region23: #{tcnf_forward.3} parent=0 // pred_check_branch
    %30 = sbr.rel (0) target = $region25
  $region24: #{tcnf_forward.3} parent=0 // pred_region
    _
  $region25: #{tcnf_forward.3} parent=0 // pred_fallthru
    _
  // Predicated region
  $region26: #{tcnf_forward.3} parent=0 // pred_check
    _
  $region27: #{tcnf_forward.3} parent=0 // pred_check_branch
    %32 = sbr.rel (0) target = $region29
  $region28: #{tcnf_forward.3} parent=0 // pred_region
    _
  $region29: #{tcnf_forward.3} parent=0 // pred_fallthru
    _
  // Predicated region
  $region30: #{tcnf_forward.3} parent=0 // pred_check
    _
  $region31: #{tcnf_forward.3} parent=0 // pred_check_branch
    %34 = sbr.rel (0) target = $region33
  $region32: #{tcnf_forward.3} parent=0 // pred_region
    _
  $region33: #{tcnf_forward.3} parent=0 // pred_fallthru
    _
  // Predicated region
  $region34: #{tcnf_forward.3} parent=0 // pred_check
    _
  $region35: #{tcnf_forward.3} parent=0 // pred_check_branch
    %36 = sbr.rel (0) target = $region37
  $region36: #{tcnf_forward.3} parent=0 // pred_region
    _
  $region37: #{tcnf_forward.3} parent=0 // pred_fallthru
    _
  // Predicated region
  $region38: #{tcnf_forward.3} parent=0 // pred_check
    _
  $region39: #{tcnf_forward.3} parent=0 // pred_check_branch
    %38 = sbr.rel (0) target = $region41
  $region40: #{tcnf_forward.3} parent=0 // pred_region
    _
  $region41: #{tcnf_forward.3} parent=0 // pred_fallthru
    _
  // Predicated region
  $region42: #{tcnf_forward.3} parent=0 // pred_check
    _
  $region43: #{tcnf_forward.3} parent=0 // pred_check_branch
    %40 = sbr.rel (0) target = $region45
  $region44: #{tcnf_forward.3} parent=0 // pred_region
    _
  $region45: #{tcnf_forward.3} parent=0 // pred_fallthru
    _
  // Predicated region
  $region46: #{tcnf_forward.3} parent=0 // pred_check
    _
  $region47: #{tcnf_forward.3} parent=0 // pred_check_branch
    %42 = sbr.rel (0) target = $region49
  $region48: #{tcnf_forward.3} parent=0 // pred_region
    _
  $region49: #{tcnf_forward.3} parent=0 // pred_fallthru
    _
  // Predicated region
  $region50: #{tcnf_forward.3} parent=0 // pred_check
    _
  $region51: #{tcnf_forward.3} parent=0 // pred_check_branch
    %44 = sbr.rel (0) target = $region53
  $region52: #{tcnf_forward.3} parent=0 // pred_region
    _
  $region53: #{tcnf_forward.3} parent=0 // pred_fallthru
    _
  // Predicated region
  $region54: #{tcnf_forward.3} parent=0 // pred_check
    _
  $region55: #{tcnf_forward.3} parent=0 // pred_check_branch
    %46 = sbr.rel (0) target = $region57
  $region56: #{tcnf_forward.3} parent=0 // pred_region
    _
  $region57: #{tcnf_forward.3} parent=0 // pred_fallthru
    _
  %v47 = vld [vmem:[%s1] sm:$0x3]
  %v48 = vld [vmem:[%s1 + $0x2] sm:$0x3]
  %v49 = vld [vmem:[%s1 + $0x4] sm:$0x3]
  %v50 = vld [vmem:[%s1 + $0x6] sm:$0x3]
  %v51 = vld [vmem:[%s1 + $0x8] sm:$0x3]
  %v52 = vld [vmem:[%s1 + $0xa] sm:$0x3]
  %v53 = vld [vmem:[%s1 + $0xc] sm:$0x3]
  %v54 = vld [vmem:[%s1 + $0xe] sm:$0x3]
  %v55 = vld [vmem:[%s2] sm:$0x7]
  %v56 = vld [vmem:[%s4] sm:$0x1]
  %v58 = vlaneseq
  %v59 = vshrl.u32 %v58, 7
  %v60 = vsub.s32 0, %v59
  %v61 = vrot.slane %v56, %v60
  %v71 = vcombine.low %v47, %v48
  %v72 = vcombine.low %v49, %v50
  %v74 = vunpack.c.l.s4 1983009808
  %v75 = vunpack.c.0.s8 %v74
  %v76 = vlaneseq
  %v77 = vshrl.u32 %v76, 7
  %v78 = vsub.s32 %v75, %v77
  %v79 = vrot.slane %v71, %v78
  %v81 = vunpack.c.l.s4 1983009808
  %v82 = vunpack.c.0.s8 %v81
  %v83 = vlaneseq
  %v84 = vshrl.u32 %v83, 7
  %v85 = vsub.s32 %v82, %v84
  %v86 = vrot.slane %v72, %v85
  %v87 = vcombine.low %v79, %v86
  %v88 = vcombine.low %v51, %v52
  %v89 = vcombine.low %v53, %v54
  %v91 = vunpack.c.l.s4 1983009808
  %v92 = vunpack.c.0.s8 %v91
  %v93 = vlaneseq
  %v94 = vshrl.u32 %v93, 7
  %v95 = vsub.s32 %v92, %v94
  %v96 = vrot.slane %v88, %v95
  %v98 = vunpack.c.l.s4 1983009808
  %v99 = vunpack.c.0.s8 %v98
  %v100 = vlaneseq
  %v101 = vshrl.u32 %v100, 7
  %v102 = vsub.s32 %v99, %v101
  %v103 = vrot.slane %v89, %v102
  %v104 = vcombine.low %v96, %v103
  %vm105 = vcmask 23552
  %v106 = vsel %vm105, %v87, 0
  %v108 = vsel %vm105, %v104, 0
  %vm110 = vcmask 1042432
  %v112 = vsel %vm110, %v55, 0
  %114 = vmatprep.subr.mxu0 0.0
  %115 = vmatpush1.msra.mxu0 %v112
  %116 = vmatprep.subr.mxu0 0.0
  %117 = vmatpush1.msra.mxu0 0.0
  %118 = vmatprep.subr.mxu0 0.0
  %119 = vmatpush1.msra.mxu0 0.0
  %120 = vmatprep.subr.mxu0 0.0
  %121 = vmatpush1.msra.mxu0 0.0
  %122 = vmatprep.subr.mxu0 0.0
  %123 = vmatpush1.msra.mxu0 0.0
  %124 = vmatprep.subr.mxu0 0.0
  %125 = vmatpush1.msra.mxu0 0.0
  %126 = vmatprep.subr.mxu0 0.0
  %127 = vmatpush1.msra.mxu0 0.0
  %128 = vmatprep.subr.mxu0 0.0
  %129 = vmatpush1.msra.mxu0 0.0
  %130 = vmatprep.subr.mxu0 0.0
  %131 = vmatpush1.msra.mxu0 0.0
  %132 = vmatprep.subr.mxu0 0.0
  %133 = vmatpush1.msra.mxu0 0.0
  %134 = vmatprep.subr.mxu0 0.0
  %135 = vmatpush1.msra.mxu0 0.0
  %136 = vmatprep.subr.mxu0 0.0
  %137 = vmatpush1.msra.mxu0 0.0
  %138 = vmatprep.subr.mxu0 0.0
  %139 = vmatpush1.msra.mxu0 0.0
  %140 = vmatprep.subr.mxu0 0.0
  %141 = vmatpush1.msra.mxu0 0.0
  %142 = vmatprep.subr.mxu0 0.0
  %143 = vmatpush1.msra.mxu0 0.0
  %144 = vmatprep.subr.mxu0 0.0
  %145 = vmatpush1.msra.mxu0 0.0
  %146 = vmatprep.subr.mxu0 0.0
  %147 = vmatpush1.msra.mxu0 0.0
  %148 = vmatprep.subr.mxu0 0.0
  %149 = vmatpush1.msra.mxu0 0.0
  %150 = vmatprep.subr.mxu0 0.0
  %151 = vmatpush1.msra.mxu0 0.0
  %152 = vmatprep.subr.mxu0 0.0
  %153 = vmatpush1.msra.mxu0 0.0
  %154 = vmatprep.subr.mxu0 0.0
  %155 = vmatpush1.msra.mxu0 0.0
  %156 = vmatprep.subr.mxu0 0.0
  %157 = vmatpush1.msra.mxu0 0.0
  %158 = vmatprep.subr.mxu0 0.0
  %159 = vmatpush1.msra.mxu0 0.0
  %160 = vmatprep.subr.mxu0 0.0
  %161 = vmatpush1.msra.mxu0 0.0
  %162 = vmatprep.subr.mxu0 0.0
  %163 = vmatpush1.msra.mxu0 0.0
  %164 = vmatprep.subr.mxu0 0.0
  %165 = vmatpush1.msra.mxu0 0.0
  %166 = vmatprep.subr.mxu0 0.0
  %167 = vmatpush1.msra.mxu0 0.0
  %168 = vmatprep.subr.mxu0 0.0
  %169 = vmatpush1.msra.mxu0 0.0
  %170 = vmatprep.subr.mxu0 0.0
  %171 = vmatpush1.msra.mxu0 0.0
  %172 = vmatprep.subr.mxu0 0.0
  %173 = vmatpush1.msra.mxu0 0.0
  %174 = vmatprep.subr.mxu0 0.0
  %175 = vmatpush1.msra.mxu0 0.0
  %176 = vmatprep.subr.mxu0 0.0
  %177 = vmatpush1.msra.mxu0 0.0
  %178 = vmatprep.mubr.f32.mxu0 0.0
  %179 = vmatmul.mubr.f32.gmra.mrb[0].mxu0 %v106
  %v180 = vpop.f32.mrb[0].mxu0
  %v181 = vadd.f32 %v61, %v180
  %v182 = vpop.f32.mrb[0].mxu0
  %183 = vmatprep.mubr.f32.mxu0 0.0
  %184 = vmatmul.mubr.f32.gmra.mrb[0].mxu0 %v108
  %v185 = vpop.f32.mrb[0].mxu0
  %v186 = vadd.f32 %v61, %v185
  %v187 = vpop.f32.mrb[0].mxu0
  %188 = vdwg.mxu0
  %v191 = vcombine.high %v181, %v181
  %v193 = vunpack.c.l.s4 1983009808
  %v194 = vunpack.c.0.s8 %v193
  %v195 = vlaneseq
  %v196 = vshrl.u32 %v195, 7
  %v197 = vsub.s32 %v194, %v196
  %v198 = vrot.slane %v181, %v197
  %v200 = vunpack.c.l.s4 1983009808
  %v201 = vunpack.c.0.s8 %v200
  %v202 = vlaneseq
  %v203 = vshrl.u32 %v202, 7
  %v204 = vsub.s32 %v201, %v203
  %v205 = vrot.slane %v191, %v204
  %v206 = vcombine.high %v198, %v198
  %v207 = vcombine.high %v205, %v205
  %v208 = vcombine.high %v186, %v186
  %v210 = vunpack.c.l.s4 1983009808
  %v211 = vunpack.c.0.s8 %v210
  %v212 = vlaneseq
  %v213 = vshrl.u32 %v212, 7
  %v214 = vsub.s32 %v211, %v213
  %v215 = vrot.slane %v186, %v214
  %v217 = vunpack.c.l.s4 1983009808
  %v218 = vunpack.c.0.s8 %v217
  %v219 = vlaneseq
  %v220 = vshrl.u32 %v219, 7
  %v221 = vsub.s32 %v218, %v220
  %v222 = vrot.slane %v208, %v221
  %v223 = vcombine.high %v215, %v215
  %v224 = vcombine.high %v222, %v222
  %v233 = vld [vmem:[%s3] sm:$0xff]
  %v234 = vld [vmem:[%s3 + $0x8] sm:$0xff]
  %v235 = vld [vmem:[%s5] sm:$0x1]
  %v237 = vlaneseq
  %v238 = vshrl.u32 %v237, 7
  %v239 = vsub.s32 0, %v238
  %v240 = vrot.slane %v235, %v239
  %vm242 = vcmask 130048
  %v244 = vsel %vm242, 0.0, 0
  %246 = vmatprep.subr.mxu0 0.0
  %247 = vmatpush1.msra.mxu0 %v233
  %248 = vmatprep.subr.mxu0 0.0
  %249 = vmatpush1.msra.mxu0 %v234
  %250 = vmatprep.subr.mxu0 0.0
  %251 = vmatpush1.msra.mxu0 0.0
  %252 = vmatprep.subr.mxu0 0.0
  %253 = vmatpush1.msra.mxu0 0.0
  %254 = vmatprep.subr.mxu0 0.0
  %255 = vmatpush1.msra.mxu0 0.0
  %256 = vmatprep.subr.mxu0 0.0
  %257 = vmatpush1.msra.mxu0 0.0
  %258 = vmatprep.subr.mxu0 0.0
  %259 = vmatpush1.msra.mxu0 0.0
  %260 = vmatprep.subr.mxu0 0.0
  %261 = vmatpush1.msra.mxu0 0.0
  %262 = vmatprep.subr.mxu0 0.0
  %263 = vmatpush1.msra.mxu0 0.0
  %264 = vmatprep.subr.mxu0 0.0
  %265 = vmatpush1.msra.mxu0 0.0
  %266 = vmatprep.subr.mxu0 0.0
  %267 = vmatpush1.msra.mxu0 0.0
  %268 = vmatprep.subr.mxu0 0.0
  %269 = vmatpush1.msra.mxu0 0.0
  %270 = vmatprep.subr.mxu0 0.0
  %271 = vmatpush1.msra.mxu0 0.0
  %272 = vmatprep.subr.mxu0 0.0
  %273 = vmatpush1.msra.mxu0 0.0
  %274 = vmatprep.subr.mxu0 0.0
  %275 = vmatpush1.msra.mxu0 0.0
  %276 = vmatprep.subr.mxu0 0.0
  %277 = vmatpush1.msra.mxu0 0.0
  %278 = vmatprep.subr.mxu0 0.0
  %279 = vmatpush1.msra.mxu0 0.0
  %280 = vmatprep.subr.mxu0 0.0
  %281 = vmatpush1.msra.mxu0 0.0
  %282 = vmatprep.subr.mxu0 0.0
  %283 = vmatpush1.msra.mxu0 0.0
  %284 = vmatprep.subr.mxu0 0.0
  %285 = vmatpush1.msra.mxu0 0.0
  %286 = vmatprep.subr.mxu0 0.0
  %287 = vmatpush1.msra.mxu0 0.0
  %288 = vmatprep.subr.mxu0 0.0
  %289 = vmatpush1.msra.mxu0 0.0
  %290 = vmatprep.subr.mxu0 0.0
  %291 = vmatpush1.msra.mxu0 0.0
  %292 = vmatprep.subr.mxu0 0.0
  %293 = vmatpush1.msra.mxu0 0.0
  %294 = vmatprep.subr.mxu0 0.0
  %295 = vmatpush1.msra.mxu0 0.0
  %296 = vmatprep.subr.mxu0 0.0
  %297 = vmatpush1.msra.mxu0 0.0
  %298 = vmatprep.subr.mxu0 0.0
  %299 = vmatpush1.msra.mxu0 0.0
  %300 = vmatprep.subr.mxu0 0.0
  %301 = vmatpush1.msra.mxu0 0.0
  %302 = vmatprep.subr.mxu0 0.0
  %303 = vmatpush1.msra.mxu0 0.0
  %304 = vmatprep.subr.mxu0 0.0
  %305 = vmatpush1.msra.mxu0 0.0
  %306 = vmatprep.subr.mxu0 0.0
  %307 = vmatpush1.msra.mxu0 0.0
  %308 = vmatprep.subr.mxu0 0.0
  %309 = vmatpush1.msra.mxu0 0.0
  %310 = vmatprep.mubr.f32.mxu0 0.0
  %311 = vmatmul.mubr.f32.gmra.mrb[0].mxu0 %v244
  %v312 = vpop.f32.mrb[0].mxu0
  %v313 = vadd.f32 %v240, %v312
  %v314 = vpop.f32.mrb[0].mxu0
  %315 = vdwg.mxu0
  %v316 = vadd.f32 %v198, %v313
  %v317 = vxor.u32 %v316, 2147483648
  %v318 = vmul.f32 %v317, 1.442695
  %v319 = vpow.pop %v318
  %v320 = vadd.f32 %v319, 1.0
  %v321 = vrcp.pop %v320
  %v322 = vmul.f32 1.0, %v321
  %v325 = vunpack.c.l.s4 1983009808
  %v326 = vunpack.c.0.s8 %v325
  %v327 = vlaneseq
  %v328 = vshrl.u32 %v327, 7
  %v329 = vsub.s32 %v326, %v328
  %v330 = vrot.slane %v313, %v329
  %331 = vrot.lane.b32.xlu0 %v330, 96
  %v332 = vpop.permute.xlu0 %331
  %v334 = vmul.f32 %v322, %v332
  %336 = vrot.lane.b32.xlu0 %v334, 32
  %v337 = vpop.permute.xlu0 %336
  %v339 = vadd.f32 %v198, %v337
  %v340 = vtanh.pop %v339
  %v341 = vsub.f32 1.0, %v322
  %343 = vrot.lane.b32.xlu0 %v340, 112
  %v344 = vpop.permute.xlu0 %343
  %v346 = vmul.f32 %v341, %v344
  %v347 = vmul.f32 %v322, 0.0
  %v348 = vadd.f32 %v346, %v347
  %v351 = vunpack.c.l.s4 1983009808
  %v352 = vunpack.c.0.s8 %v351
  %v353 = vlaneseq
  %v354 = vshrl.u32 %v353, 7
  %v355 = vsub.s32 %v352, %v354
  %v356 = vrot.slane %v348, %v355
  %357 = vrot.lane.b32.xlu0 %v356, 112
  %v358 = vpop.permute.xlu0 %357
  %vm360 = vcmask 123904
  %361 = vst.msk [vmem:[#allocation2] sm:$0x3] %vm360, %v358
  %v362 = vsel %vm242, %v358, 0
  %364 = vmatprep.subr.mxu0 0.0
  %365 = vmatpush1.msra.mxu0 %v233
  %366 = vmatprep.subr.mxu0 0.0
  %367 = vmatpush1.msra.mxu0 %v234
  %368 = vmatprep.subr.mxu0 0.0
  %369 = vmatpush1.msra.mxu0 0.0
  %370 = vmatprep.subr.mxu0 0.0
  %371 = vmatpush1.msra.mxu0 0.0
  %372 = vmatprep.subr.mxu0 0.0
  %373 = vmatpush1.msra.mxu0 0.0
  %374 = vmatprep.subr.mxu0 0.0
  %375 = vmatpush1.msra.mxu0 0.0
  %376 = vmatprep.subr.mxu0 0.0
  %377 = vmatpush1.msra.mxu0 0.0
  %378 = vmatprep.subr.mxu0 0.0
  %379 = vmatpush1.msra.mxu0 0.0
  %380 = vmatprep.subr.mxu0 0.0
  %381 = vmatpush1.msra.mxu0 0.0
  %382 = vmatprep.subr.mxu0 0.0
  %383 = vmatpush1.msra.mxu0 0.0
  %384 = vmatprep.subr.mxu0 0.0
  %385 = vmatpush1.msra.mxu0 0.0
  %386 = vmatprep.subr.mxu0 0.0
  %387 = vmatpush1.msra.mxu0 0.0
  %388 = vmatprep.subr.mxu0 0.0
  %389 = vmatpush1.msra.mxu0 0.0
  %390 = vmatprep.subr.mxu0 0.0
  %391 = vmatpush1.msra.mxu0 0.0
  %392 = vmatprep.subr.mxu0 0.0
  %393 = vmatpush1.msra.mxu0 0.0
  %394 = vmatprep.subr.mxu0 0.0
  %395 = vmatpush1.msra.mxu0 0.0
  %396 = vmatprep.subr.mxu0 0.0
  %397 = vmatpush1.msra.mxu0 0.0
  %398 = vmatprep.subr.mxu0 0.0
  %399 = vmatpush1.msra.mxu0 0.0
  %400 = vmatprep.subr.mxu0 0.0
  %401 = vmatpush1.msra.mxu0 0.0
  %402 = vmatprep.subr.mxu0 0.0
  %403 = vmatpush1.msra.mxu0 0.0
  %404 = vmatprep.subr.mxu0 0.0
  %405 = vmatpush1.msra.mxu0 0.0
  %406 = vmatprep.subr.mxu0 0.0
  %407 = vmatpush1.msra.mxu0 0.0
  %408 = vmatprep.subr.mxu0 0.0
  %409 = vmatpush1.msra.mxu0 0.0
  %410 = vmatprep.subr.mxu0 0.0
  %411 = vmatpush1.msra.mxu0 0.0
  %412 = vmatprep.subr.mxu0 0.0
  %413 = vmatpush1.msra.mxu0 0.0
  %414 = vmatprep.subr.mxu0 0.0
  %415 = vmatpush1.msra.mxu0 0.0
  %416 = vmatprep.subr.mxu0 0.0
  %417 = vmatpush1.msra.mxu0 0.0
  %418 = vmatprep.subr.mxu0 0.0
  %419 = vmatpush1.msra.mxu0 0.0
  %420 = vmatprep.subr.mxu0 0.0
  %421 = vmatpush1.msra.mxu0 0.0
  %422 = vmatprep.subr.mxu0 0.0
  %423 = vmatpush1.msra.mxu0 0.0
  %424 = vmatprep.subr.mxu0 0.0
  %425 = vmatpush1.msra.mxu0 0.0
  %426 = vmatprep.subr.mxu0 0.0
  %427 = vmatpush1.msra.mxu0 0.0
  %428 = vmatprep.mubr.f32.mxu0 0.0
  %429 = vmatmul.mubr.f32.gmra.mrb[0].mxu0 %v362
  %v430 = vpop.f32.mrb[0].mxu0
  %v431 = vadd.f32 %v240, %v430
  %v432 = vpop.f32.mrb[0].mxu0
  %433 = vdwg.mxu0
  %v434 = vadd.f32 %v206, %v431
  %v435 = vxor.u32 %v434, 2147483648
  %v436 = vmul.f32 %v435, 1.442695
  %v437 = vpow.pop %v436
  %v438 = vadd.f32 %v437, 1.0
  %v439 = vrcp.pop %v438
  %v440 = vmul.f32 1.0, %v439
  %v443 = vunpack.c.l.s4 1983009808
  %v444 = vunpack.c.0.s8 %v443
  %v445 = vlaneseq
  %v446 = vshrl.u32 %v445, 7
  %v447 = vsub.s32 %v444, %v446
  %v448 = vrot.slane %v431, %v447
  %449 = vrot.lane.b32.xlu0 %v448, 96
  %v450 = vpop.permute.xlu0 %449
  %v452 = vmul.f32 %v440, %v450
  %454 = vrot.lane.b32.xlu0 %v452, 32
  %v455 = vpop.permute.xlu0 %454
  %v457 = vadd.f32 %v206, %v455
  %v458 = vtanh.pop %v457
  %v459 = vsub.f32 1.0, %v440
  %461 = vrot.lane.b32.xlu0 %v458, 112
  %v462 = vpop.permute.xlu0 %461
  %v464 = vmul.f32 %v459, %v462
  %v465 = vmul.f32 %v440, %v348
  %v466 = vadd.f32 %v464, %v465
  %v469 = vunpack.c.l.s4 1983009808
  %v470 = vunpack.c.0.s8 %v469
  %v471 = vlaneseq
  %v472 = vshrl.u32 %v471, 7
  %v473 = vsub.s32 %v470, %v472
  %v474 = vrot.slane %v466, %v473
  %475 = vrot.lane.b32.xlu0 %v474, 112
  %v476 = vpop.permute.xlu0 %475
  %s478 = scalar_lea.vmem [#allocation2], 2
  %479 = vst.msk [vmem:[%s478] sm:$0x3] %vm360, %v476
  %v480 = vsel %vm242, %v476, 0
  %482 = vmatprep.subr.mxu0 0.0
  %483 = vmatpush1.msra.mxu0 %v233
  %484 = vmatprep.subr.mxu0 0.0
  %485 = vmatpush1.msra.mxu0 %v234
  %486 = vmatprep.subr.mxu0 0.0
  %487 = vmatpush1.msra.mxu0 0.0
  %488 = vmatprep.subr.mxu0 0.0
  %489 = vmatpush1.msra.mxu0 0.0
  %490 = vmatprep.subr.mxu0 0.0
  %491 = vmatpush1.msra.mxu0 0.0
  %492 = vmatprep.subr.mxu0 0.0
  %493 = vmatpush1.msra.mxu0 0.0
  %494 = vmatprep.subr.mxu0 0.0
  %495 = vmatpush1.msra.mxu0 0.0
  %496 = vmatprep.subr.mxu0 0.0
  %497 = vmatpush1.msra.mxu0 0.0
  %498 = vmatprep.subr.mxu0 0.0
  %499 = vmatpush1.msra.mxu0 0.0
  %500 = vmatprep.subr.mxu0 0.0
  %501 = vmatpush1.msra.mxu0 0.0
  %502 = vmatprep.subr.mxu0 0.0
  %503 = vmatpush1.msra.mxu0 0.0
  %504 = vmatprep.subr.mxu0 0.0
  %505 = vmatpush1.msra.mxu0 0.0
  %506 = vmatprep.subr.mxu0 0.0
  %507 = vmatpush1.msra.mxu0 0.0
  %508 = vmatprep.subr.mxu0 0.0
  %509 = vmatpush1.msra.mxu0 0.0
  %510 = vmatprep.subr.mxu0 0.0
  %511 = vmatpush1.msra.mxu0 0.0
  %512 = vmatprep.subr.mxu0 0.0
  %513 = vmatpush1.msra.mxu0 0.0
  %514 = vmatprep.subr.mxu0 0.0
  %515 = vmatpush1.msra.mxu0 0.0
  %516 = vmatprep.subr.mxu0 0.0
  %517 = vmatpush1.msra.mxu0 0.0
  %518 = vmatprep.subr.mxu0 0.0
  %519 = vmatpush1.msra.mxu0 0.0
  %520 = vmatprep.subr.mxu0 0.0
  %521 = vmatpush1.msra.mxu0 0.0
  %522 = vmatprep.subr.mxu0 0.0
  %523 = vmatpush1.msra.mxu0 0.0
  %524 = vmatprep.subr.mxu0 0.0
  %525 = vmatpush1.msra.mxu0 0.0
  %526 = vmatprep.subr.mxu0 0.0
  %527 = vmatpush1.msra.mxu0 0.0
  %528 = vmatprep.subr.mxu0 0.0
  %529 = vmatpush1.msra.mxu0 0.0
  %530 = vmatprep.subr.mxu0 0.0
  %531 = vmatpush1.msra.mxu0 0.0
  %532 = vmatprep.subr.mxu0 0.0
  %533 = vmatpush1.msra.mxu0 0.0
  %534 = vmatprep.subr.mxu0 0.0
  %535 = vmatpush1.msra.mxu0 0.0
  %536 = vmatprep.subr.mxu0 0.0
  %537 = vmatpush1.msra.mxu0 0.0
  %538 = vmatprep.subr.mxu0 0.0
  %539 = vmatpush1.msra.mxu0 0.0
  %540 = vmatprep.subr.mxu0 0.0
  %541 = vmatpush1.msra.mxu0 0.0
  %542 = vmatprep.subr.mxu0 0.0
  %543 = vmatpush1.msra.mxu0 0.0
  %544 = vmatprep.subr.mxu0 0.0
  %545 = vmatpush1.msra.mxu0 0.0
  %546 = vmatprep.mubr.f32.mxu0 0.0
  %547 = vmatmul.mubr.f32.gmra.mrb[0].mxu0 %v480
  %v548 = vpop.f32.mrb[0].mxu0
  %v549 = vadd.f32 %v240, %v548
  %v550 = vpop.f32.mrb[0].mxu0
  %551 = vdwg.mxu0
  %v552 = vadd.f32 %v205, %v549
  %v553 = vxor.u32 %v552, 2147483648
  %v554 = vmul.f32 %v553, 1.442695
  %v555 = vpow.pop %v554
  %v556 = vadd.f32 %v555, 1.0
  %v557 = vrcp.pop %v556
  %v558 = vmul.f32 1.0, %v557
  %v561 = vunpack.c.l.s4 1983009808
  %v562 = vunpack.c.0.s8 %v561
  %v563 = vlaneseq
  %v564 = vshrl.u32 %v563, 7
  %v565 = vsub.s32 %v562, %v564
  %v566 = vrot.slane %v549, %v565
  %567 = vrot.lane.b32.xlu0 %v566, 96
  %v568 = vpop.permute.xlu0 %567
  %v570 = vmul.f32 %v558, %v568
  %572 = vrot.lane.b32.xlu0 %v570, 32
  %v573 = vpop.permute.xlu0 %572
  %v575 = vadd.f32 %v205, %v573
  %v576 = vtanh.pop %v575
  %v577 = vsub.f32 1.0, %v558
  %579 = vrot.lane.b32.xlu0 %v576, 112
  %v580 = vpop.permute.xlu0 %579
  %v582 = vmul.f32 %v577, %v580
  %v583 = vmul.f32 %v558, %v466
  %v584 = vadd.f32 %v582, %v583
  %v587 = vunpack.c.l.s4 1983009808
  %v588 = vunpack.c.0.s8 %v587
  %v589 = vlaneseq
  %v590 = vshrl.u32 %v589, 7
  %v591 = vsub.s32 %v588, %v590
  %v592 = vrot.slane %v584, %v591
  %593 = vrot.lane.b32.xlu0 %v592, 112
  %v594 = vpop.permute.xlu0 %593
  %s596 = scalar_lea.vmem [#allocation2], 4
  %597 = vst.msk [vmem:[%s596] sm:$0x3] %vm360, %v594
  %v598 = vsel %vm242, %v594, 0
  %600 = vmatprep.subr.mxu0 0.0
  %601 = vmatpush1.msra.mxu0 %v233
  %602 = vmatprep.subr.mxu0 0.0
  %603 = vmatpush1.msra.mxu0 %v234
  %604 = vmatprep.subr.mxu0 0.0
  %605 = vmatpush1.msra.mxu0 0.0
  %606 = vmatprep.subr.mxu0 0.0
  %607 = vmatpush1.msra.mxu0 0.0
  %608 = vmatprep.subr.mxu0 0.0
  %609 = vmatpush1.msra.mxu0 0.0
  %610 = vmatprep.subr.mxu0 0.0
  %611 = vmatpush1.msra.mxu0 0.0
  %612 = vmatprep.subr.mxu0 0.0
  %613 = vmatpush1.msra.mxu0 0.0
  %614 = vmatprep.subr.mxu0 0.0
  %615 = vmatpush1.msra.mxu0 0.0
  %616 = vmatprep.subr.mxu0 0.0
  %617 = vmatpush1.msra.mxu0 0.0
  %618 = vmatprep.subr.mxu0 0.0
  %619 = vmatpush1.msra.mxu0 0.0
  %620 = vmatprep.subr.mxu0 0.0
  %621 = vmatpush1.msra.mxu0 0.0
  %622 = vmatprep.subr.mxu0 0.0
  %623 = vmatpush1.msra.mxu0 0.0
  %624 = vmatprep.subr.mxu0 0.0
  %625 = vmatpush1.msra.mxu0 0.0
  %626 = vmatprep.subr.mxu0 0.0
  %627 = vmatpush1.msra.mxu0 0.0
  %628 = vmatprep.subr.mxu0 0.0
  %629 = vmatpush1.msra.mxu0 0.0
  %630 = vmatprep.subr.mxu0 0.0
  %631 = vmatpush1.msra.mxu0 0.0
  %632 = vmatprep.subr.mxu0 0.0
  %633 = vmatpush1.msra.mxu0 0.0
  %634 = vmatprep.subr.mxu0 0.0
  %635 = vmatpush1.msra.mxu0 0.0
  %636 = vmatprep.subr.mxu0 0.0
  %637 = vmatpush1.msra.mxu0 0.0
  %638 = vmatprep.subr.mxu0 0.0
  %639 = vmatpush1.msra.mxu0 0.0
  %640 = vmatprep.subr.mxu0 0.0
  %641 = vmatpush1.msra.mxu0 0.0
  %642 = vmatprep.subr.mxu0 0.0
  %643 = vmatpush1.msra.mxu0 0.0
  %644 = vmatprep.subr.mxu0 0.0
  %645 = vmatpush1.msra.mxu0 0.0
  %646 = vmatprep.subr.mxu0 0.0
  %647 = vmatpush1.msra.mxu0 0.0
  %648 = vmatprep.subr.mxu0 0.0
  %649 = vmatpush1.msra.mxu0 0.0
  %650 = vmatprep.subr.mxu0 0.0
  %651 = vmatpush1.msra.mxu0 0.0
  %652 = vmatprep.subr.mxu0 0.0
  %653 = vmatpush1.msra.mxu0 0.0
  %654 = vmatprep.subr.mxu0 0.0
  %655 = vmatpush1.msra.mxu0 0.0
  %656 = vmatprep.subr.mxu0 0.0
  %657 = vmatpush1.msra.mxu0 0.0
  %658 = vmatprep.subr.mxu0 0.0
  %659 = vmatpush1.msra.mxu0 0.0
  %660 = vmatprep.subr.mxu0 0.0
  %661 = vmatpush1.msra.mxu0 0.0
  %662 = vmatprep.subr.mxu0 0.0
  %663 = vmatpush1.msra.mxu0 0.0
  %664 = vmatprep.mubr.f32.mxu0 0.0
  %665 = vmatmul.mubr.f32.gmra.mrb[0].mxu0 %v598
  %v666 = vpop.f32.mrb[0].mxu0
  %v667 = vadd.f32 %v240, %v666
  %v668 = vpop.f32.mrb[0].mxu0
  %669 = vdwg.mxu0
  %v670 = vadd.f32 %v207, %v667
  %v671 = vxor.u32 %v670, 2147483648
  %v672 = vmul.f32 %v671, 1.442695
  %v673 = vpow.pop %v672
  %v674 = vadd.f32 %v673, 1.0
  %v675 = vrcp.pop %v674
  %v676 = vmul.f32 1.0, %v675
  %v679 = vunpack.c.l.s4 1983009808
  %v680 = vunpack.c.0.s8 %v679
  %v681 = vlaneseq
  %v682 = vshrl.u32 %v681, 7
  %v683 = vsub.s32 %v680, %v682
  %v684 = vrot.slane %v667, %v683
  %685 = vrot.lane.b32.xlu0 %v684, 96
  %v686 = vpop.permute.xlu0 %685
  %v688 = vmul.f32 %v676, %v686
  %690 = vrot.lane.b32.xlu0 %v688, 32
  %v691 = vpop.permute.xlu0 %690
  %v693 = vadd.f32 %v207, %v691
  %v694 = vtanh.pop %v693
  %v695 = vsub.f32 1.0, %v676
  %697 = vrot.lane.b32.xlu0 %v694, 112
  %v698 = vpop.permute.xlu0 %697
  %v700 = vmul.f32 %v695, %v698
  %v701 = vmul.f32 %v676, %v584
  %v702 = vadd.f32 %v700, %v701
  %v705 = vunpack.c.l.s4 1983009808
  %v706 = vunpack.c.0.s8 %v705
  %v707 = vlaneseq
  %v708 = vshrl.u32 %v707, 7
  %v709 = vsub.s32 %v706, %v708
  %v710 = vrot.slane %v702, %v709
  %711 = vrot.lane.b32.xlu0 %v710, 112
  %v712 = vpop.permute.xlu0 %711
  %s714 = scalar_lea.vmem [#allocation2], 6
  %715 = vst.msk [vmem:[%s714] sm:$0x3] %vm360, %v712
  %v716 = vsel %vm242, %v712, 0
  %718 = vmatprep.subr.mxu0 0.0
  %719 = vmatpush1.msra.mxu0 %v233
  %720 = vmatprep.subr.mxu0 0.0
  %721 = vmatpush1.msra.mxu0 %v234
  %722 = vmatprep.subr.mxu0 0.0
  %723 = vmatpush1.msra.mxu0 0.0
  %724 = vmatprep.subr.mxu0 0.0
  %725 = vmatpush1.msra.mxu0 0.0
  %726 = vmatprep.subr.mxu0 0.0
  %727 = vmatpush1.msra.mxu0 0.0
  %728 = vmatprep.subr.mxu0 0.0
  %729 = vmatpush1.msra.mxu0 0.0
  %730 = vmatprep.subr.mxu0 0.0
  %731 = vmatpush1.msra.mxu0 0.0
  %732 = vmatprep.subr.mxu0 0.0
  %733 = vmatpush1.msra.mxu0 0.0
  %734 = vmatprep.subr.mxu0 0.0
  %735 = vmatpush1.msra.mxu0 0.0
  %736 = vmatprep.subr.mxu0 0.0
  %737 = vmatpush1.msra.mxu0 0.0
  %738 = vmatprep.subr.mxu0 0.0
  %739 = vmatpush1.msra.mxu0 0.0
  %740 = vmatprep.subr.mxu0 0.0
  %741 = vmatpush1.msra.mxu0 0.0
  %742 = vmatprep.subr.mxu0 0.0
  %743 = vmatpush1.msra.mxu0 0.0
  %744 = vmatprep.subr.mxu0 0.0
  %745 = vmatpush1.msra.mxu0 0.0
  %746 = vmatprep.subr.mxu0 0.0
  %747 = vmatpush1.msra.mxu0 0.0
  %748 = vmatprep.subr.mxu0 0.0
  %749 = vmatpush1.msra.mxu0 0.0
  %750 = vmatprep.subr.mxu0 0.0
  %751 = vmatpush1.msra.mxu0 0.0
  %752 = vmatprep.subr.mxu0 0.0
  %753 = vmatpush1.msra.mxu0 0.0
  %754 = vmatprep.subr.mxu0 0.0
  %755 = vmatpush1.msra.mxu0 0.0
  %756 = vmatprep.subr.mxu0 0.0
  %757 = vmatpush1.msra.mxu0 0.0
  %758 = vmatprep.subr.mxu0 0.0
  %759 = vmatpush1.msra.mxu0 0.0
  %760 = vmatprep.subr.mxu0 0.0
  %761 = vmatpush1.msra.mxu0 0.0
  %762 = vmatprep.subr.mxu0 0.0
  %763 = vmatpush1.msra.mxu0 0.0
  %764 = vmatprep.subr.mxu0 0.0
  %765 = vmatpush1.msra.mxu0 0.0
  %766 = vmatprep.subr.mxu0 0.0
  %767 = vmatpush1.msra.mxu0 0.0
  %768 = vmatprep.subr.mxu0 0.0
  %769 = vmatpush1.msra.mxu0 0.0
  %770 = vmatprep.subr.mxu0 0.0
  %771 = vmatpush1.msra.mxu0 0.0
  %772 = vmatprep.subr.mxu0 0.0
  %773 = vmatpush1.msra.mxu0 0.0
  %774 = vmatprep.subr.mxu0 0.0
  %775 = vmatpush1.msra.mxu0 0.0
  %776 = vmatprep.subr.mxu0 0.0
  %777 = vmatpush1.msra.mxu0 0.0
  %778 = vmatprep.subr.mxu0 0.0
  %779 = vmatpush1.msra.mxu0 0.0
  %780 = vmatprep.subr.mxu0 0.0
  %781 = vmatpush1.msra.mxu0 0.0
  %782 = vmatprep.mubr.f32.mxu0 0.0
  %783 = vmatmul.mubr.f32.gmra.mrb[0].mxu0 %v716
  %v784 = vpop.f32.mrb[0].mxu0
  %v785 = vadd.f32 %v240, %v784
  %v786 = vpop.f32.mrb[0].mxu0
  %787 = vdwg.mxu0
  %v788 = vadd.f32 %v215, %v785
  %v789 = vxor.u32 %v788, 2147483648
  %v790 = vmul.f32 %v789, 1.442695
  %v791 = vpow.pop %v790
  %v792 = vadd.f32 %v791, 1.0
  %v793 = vrcp.pop %v792
  %v794 = vmul.f32 1.0, %v793
  %v797 = vunpack.c.l.s4 1983009808
  %v798 = vunpack.c.0.s8 %v797
  %v799 = vlaneseq
  %v800 = vshrl.u32 %v799, 7
  %v801 = vsub.s32 %v798, %v800
  %v802 = vrot.slane %v785, %v801
  %803 = vrot.lane.b32.xlu0 %v802, 96
  %v804 = vpop.permute.xlu0 %803
  %v806 = vmul.f32 %v794, %v804
  %808 = vrot.lane.b32.xlu0 %v806, 32
  %v809 = vpop.permute.xlu0 %808
  %v811 = vadd.f32 %v215, %v809
  %v812 = vtanh.pop %v811
  %v813 = vsub.f32 1.0, %v794
  %815 = vrot.lane.b32.xlu0 %v812, 112
  %v816 = vpop.permute.xlu0 %815
  %v818 = vmul.f32 %v813, %v816
  %v819 = vmul.f32 %v794, %v702
  %v820 = vadd.f32 %v818, %v819
  %v823 = vunpack.c.l.s4 1983009808
  %v824 = vunpack.c.0.s8 %v823
  %v825 = vlaneseq
  %v826 = vshrl.u32 %v825, 7
  %v827 = vsub.s32 %v824, %v826
  %v828 = vrot.slane %v820, %v827
  %829 = vrot.lane.b32.xlu0 %v828, 112
  %v830 = vpop.permute.xlu0 %829
  %s832 = scalar_lea.vmem [#allocation2], 8
  %833 = vst.msk [vmem:[%s832] sm:$0x3] %vm360, %v830
  %v834 = vsel %vm242, %v830, 0
  %836 = vmatprep.subr.mxu0 0.0
  %837 = vmatpush1.msra.mxu0 %v233
  %838 = vmatprep.subr.mxu0 0.0
  %839 = vmatpush1.msra.mxu0 %v234
  %840 = vmatprep.subr.mxu0 0.0
  %841 = vmatpush1.msra.mxu0 0.0
  %842 = vmatprep.subr.mxu0 0.0
  %843 = vmatpush1.msra.mxu0 0.0
  %844 = vmatprep.subr.mxu0 0.0
  %845 = vmatpush1.msra.mxu0 0.0
  %846 = vmatprep.subr.mxu0 0.0
  %847 = vmatpush1.msra.mxu0 0.0
  %848 = vmatprep.subr.mxu0 0.0
  %849 = vmatpush1.msra.mxu0 0.0
  %850 = vmatprep.subr.mxu0 0.0
  %851 = vmatpush1.msra.mxu0 0.0
  %852 = vmatprep.subr.mxu0 0.0
  %853 = vmatpush1.msra.mxu0 0.0
  %854 = vmatprep.subr.mxu0 0.0
  %855 = vmatpush1.msra.mxu0 0.0
  %856 = vmatprep.subr.mxu0 0.0
  %857 = vmatpush1.msra.mxu0 0.0
  %858 = vmatprep.subr.mxu0 0.0
  %859 = vmatpush1.msra.mxu0 0.0
  %860 = vmatprep.subr.mxu0 0.0
  %861 = vmatpush1.msra.mxu0 0.0
  %862 = vmatprep.subr.mxu0 0.0
  %863 = vmatpush1.msra.mxu0 0.0
  %864 = vmatprep.subr.mxu0 0.0
  %865 = vmatpush1.msra.mxu0 0.0
  %866 = vmatprep.subr.mxu0 0.0
  %867 = vmatpush1.msra.mxu0 0.0
  %868 = vmatprep.subr.mxu0 0.0
  %869 = vmatpush1.msra.mxu0 0.0
  %870 = vmatprep.subr.mxu0 0.0
  %871 = vmatpush1.msra.mxu0 0.0
  %872 = vmatprep.subr.mxu0 0.0
  %873 = vmatpush1.msra.mxu0 0.0
  %874 = vmatprep.subr.mxu0 0.0
  %875 = vmatpush1.msra.mxu0 0.0
  %876 = vmatprep.subr.mxu0 0.0
  %877 = vmatpush1.msra.mxu0 0.0
  %878 = vmatprep.subr.mxu0 0.0
  %879 = vmatpush1.msra.mxu0 0.0
  %880 = vmatprep.subr.mxu0 0.0
  %881 = vmatpush1.msra.mxu0 0.0
  %882 = vmatprep.subr.mxu0 0.0
  %883 = vmatpush1.msra.mxu0 0.0
  %884 = vmatprep.subr.mxu0 0.0
  %885 = vmatpush1.msra.mxu0 0.0
  %886 = vmatprep.subr.mxu0 0.0
  %887 = vmatpush1.msra.mxu0 0.0
  %888 = vmatprep.subr.mxu0 0.0
  %889 = vmatpush1.msra.mxu0 0.0
  %890 = vmatprep.subr.mxu0 0.0
  %891 = vmatpush1.msra.mxu0 0.0
  %892 = vmatprep.subr.mxu0 0.0
  %893 = vmatpush1.msra.mxu0 0.0
  %894 = vmatprep.subr.mxu0 0.0
  %895 = vmatpush1.msra.mxu0 0.0
  %896 = vmatprep.subr.mxu0 0.0
  %897 = vmatpush1.msra.mxu0 0.0
  %898 = vmatprep.subr.mxu0 0.0
  %899 = vmatpush1.msra.mxu0 0.0
  %900 = vmatprep.mubr.f32.mxu0 0.0
  %901 = vmatmul.mubr.f32.gmra.mrb[0].mxu0 %v834
  %v902 = vpop.f32.mrb[0].mxu0
  %v903 = vadd.f32 %v240, %v902
  %v904 = vpop.f32.mrb[0].mxu0
  %905 = vdwg.mxu0
  %v906 = vadd.f32 %v223, %v903
  %v907 = vxor.u32 %v906, 2147483648
  %v908 = vmul.f32 %v907, 1.442695
  %v909 = vpow.pop %v908
  %v910 = vadd.f32 %v909, 1.0
  %v911 = vrcp.pop %v910
  %v912 = vmul.f32 1.0, %v911
  %v915 = vunpack.c.l.s4 1983009808
  %v916 = vunpack.c.0.s8 %v915
  %v917 = vlaneseq
  %v918 = vshrl.u32 %v917, 7
  %v919 = vsub.s32 %v916, %v918
  %v920 = vrot.slane %v903, %v919
  %921 = vrot.lane.b32.xlu0 %v920, 96
  %v922 = vpop.permute.xlu0 %921
  %v924 = vmul.f32 %v912, %v922
  %926 = vrot.lane.b32.xlu0 %v924, 32
  %v927 = vpop.permute.xlu0 %926
  %v929 = vadd.f32 %v223, %v927
  %v930 = vtanh.pop %v929
  %v931 = vsub.f32 1.0, %v912
  %933 = vrot.lane.b32.xlu0 %v930, 112
  %v934 = vpop.permute.xlu0 %933
  %v936 = vmul.f32 %v931, %v934
  %v937 = vmul.f32 %v912, %v820
  %v938 = vadd.f32 %v936, %v937
  %v941 = vunpack.c.l.s4 1983009808
  %v942 = vunpack.c.0.s8 %v941
  %v943 = vlaneseq
  %v944 = vshrl.u32 %v943, 7
  %v945 = vsub.s32 %v942, %v944
  %v946 = vrot.slane %v938, %v945
  %947 = vrot.lane.b32.xlu0 %v946, 112
  %v948 = vpop.permute.xlu0 %947
  %s950 = scalar_lea.vmem [#allocation2], 10
  %951 = vst.msk [vmem:[%s950] sm:$0x3] %vm360, %v948
  %v952 = vsel %vm242, %v948, 0
  %954 = vmatprep.subr.mxu0 0.0
  %955 = vmatpush1.msra.mxu0 %v233
  %956 = vmatprep.subr.mxu0 0.0
  %957 = vmatpush1.msra.mxu0 %v234
  %958 = vmatprep.subr.mxu0 0.0
  %959 = vmatpush1.msra.mxu0 0.0
  %960 = vmatprep.subr.mxu0 0.0
  %961 = vmatpush1.msra.mxu0 0.0
  %962 = vmatprep.subr.mxu0 0.0
  %963 = vmatpush1.msra.mxu0 0.0
  %964 = vmatprep.subr.mxu0 0.0
  %965 = vmatpush1.msra.mxu0 0.0
  %966 = vmatprep.subr.mxu0 0.0
  %967 = vmatpush1.msra.mxu0 0.0
  %968 = vmatprep.subr.mxu0 0.0
  %969 = vmatpush1.msra.mxu0 0.0
  %970 = vmatprep.subr.mxu0 0.0
  %971 = vmatpush1.msra.mxu0 0.0
  %972 = vmatprep.subr.mxu0 0.0
  %973 = vmatpush1.msra.mxu0 0.0
  %974 = vmatprep.subr.mxu0 0.0
  %975 = vmatpush1.msra.mxu0 0.0
  %976 = vmatprep.subr.mxu0 0.0
  %977 = vmatpush1.msra.mxu0 0.0
  %978 = vmatprep.subr.mxu0 0.0
  %979 = vmatpush1.msra.mxu0 0.0
  %980 = vmatprep.subr.mxu0 0.0
  %981 = vmatpush1.msra.mxu0 0.0
  %982 = vmatprep.subr.mxu0 0.0
  %983 = vmatpush1.msra.mxu0 0.0
  %984 = vmatprep.subr.mxu0 0.0
  %985 = vmatpush1.msra.mxu0 0.0
  %986 = vmatprep.subr.mxu0 0.0
  %987 = vmatpush1.msra.mxu0 0.0
  %988 = vmatprep.subr.mxu0 0.0
  %989 = vmatpush1.msra.mxu0 0.0
  %990 = vmatprep.subr.mxu0 0.0
  %991 = vmatpush1.msra.mxu0 0.0
  %992 = vmatprep.subr.mxu0 0.0
  %993 = vmatpush1.msra.mxu0 0.0
  %994 = vmatprep.subr.mxu0 0.0
  %995 = vmatpush1.msra.mxu0 0.0
  %996 = vmatprep.subr.mxu0 0.0
  %997 = vmatpush1.msra.mxu0 0.0
  %998 = vmatprep.subr.mxu0 0.0
  %999 = vmatpush1.msra.mxu0 0.0
  %1000 = vmatprep.subr.mxu0 0.0
  %1001 = vmatpush1.msra.mxu0 0.0
  %1002 = vmatprep.subr.mxu0 0.0
  %1003 = vmatpush1.msra.mxu0 0.0
  %1004 = vmatprep.subr.mxu0 0.0
  %1005 = vmatpush1.msra.mxu0 0.0
  %1006 = vmatprep.subr.mxu0 0.0
  %1007 = vmatpush1.msra.mxu0 0.0
  %1008 = vmatprep.subr.mxu0 0.0
  %1009 = vmatpush1.msra.mxu0 0.0
  %1010 = vmatprep.subr.mxu0 0.0
  %1011 = vmatpush1.msra.mxu0 0.0
  %1012 = vmatprep.subr.mxu0 0.0
  %1013 = vmatpush1.msra.mxu0 0.0
  %1014 = vmatprep.subr.mxu0 0.0
  %1015 = vmatpush1.msra.mxu0 0.0
  %1016 = vmatprep.subr.mxu0 0.0
  %1017 = vmatpush1.msra.mxu0 0.0
  %1018 = vmatprep.mubr.f32.mxu0 0.0
  %1019 = vmatmul.mubr.f32.gmra.mrb[0].mxu0 %v952
  %v1020 = vpop.f32.mrb[0].mxu0
  %v1021 = vadd.f32 %v240, %v1020
  %v1022 = vpop.f32.mrb[0].mxu0
  %1023 = vdwg.mxu0
  %v1024 = vadd.f32 %v222, %v1021
  %v1025 = vxor.u32 %v1024, 2147483648
  %v1026 = vmul.f32 %v1025, 1.442695
  %v1027 = vpow.pop %v1026
  %v1028 = vadd.f32 %v1027, 1.0
  %v1029 = vrcp.pop %v1028
  %v1030 = vmul.f32 1.0, %v1029
  %v1033 = vunpack.c.l.s4 1983009808
  %v1034 = vunpack.c.0.s8 %v1033
  %v1035 = vlaneseq
  %v1036 = vshrl.u32 %v1035, 7
  %v1037 = vsub.s32 %v1034, %v1036
  %v1038 = vrot.slane %v1021, %v1037
  %1039 = vrot.lane.b32.xlu0 %v1038, 96
  %v1040 = vpop.permute.xlu0 %1039
  %v1042 = vmul.f32 %v1030, %v1040
  %1044 = vrot.lane.b32.xlu0 %v1042, 32
  %v1045 = vpop.permute.xlu0 %1044
  %v1047 = vadd.f32 %v222, %v1045
  %v1048 = vtanh.pop %v1047
  %v1049 = vsub.f32 1.0, %v1030
  %1051 = vrot.lane.b32.xlu0 %v1048, 112
  %v1052 = vpop.permute.xlu0 %1051
  %v1054 = vmul.f32 %v1049, %v1052
  %v1055 = vmul.f32 %v1030, %v938
  %v1056 = vadd.f32 %v1054, %v1055
  %v1059 = vunpack.c.l.s4 1983009808
  %v1060 = vunpack.c.0.s8 %v1059
  %v1061 = vlaneseq
  %v1062 = vshrl.u32 %v1061, 7
  %v1063 = vsub.s32 %v1060, %v1062
  %v1064 = vrot.slane %v1056, %v1063
  %1065 = vrot.lane.b32.xlu0 %v1064, 112
  %v1066 = vpop.permute.xlu0 %1065
  %s1068 = scalar_lea.vmem [#allocation2], 12
  %1069 = vst.msk [vmem:[%s1068] sm:$0x3] %vm360, %v1066
  %v1070 = vsel %vm242, %v1066, 0
  %1072 = vmatprep.subr.mxu0 0.0
  %1073 = vmatpush1.msra.mxu0 %v233
  %1074 = vmatprep.subr.mxu0 0.0
  %1075 = vmatpush1.msra.mxu0 %v234
  %1076 = vmatprep.subr.mxu0 0.0
  %1077 = vmatpush1.msra.mxu0 0.0
  %1078 = vmatprep.subr.mxu0 0.0
  %1079 = vmatpush1.msra.mxu0 0.0
  %1080 = vmatprep.subr.mxu0 0.0
  %1081 = vmatpush1.msra.mxu0 0.0
  %1082 = vmatprep.subr.mxu0 0.0
  %1083 = vmatpush1.msra.mxu0 0.0
  %1084 = vmatprep.subr.mxu0 0.0
  %1085 = vmatpush1.msra.mxu0 0.0
  %1086 = vmatprep.subr.mxu0 0.0
  %1087 = vmatpush1.msra.mxu0 0.0
  %1088 = vmatprep.subr.mxu0 0.0
  %1089 = vmatpush1.msra.mxu0 0.0
  %1090 = vmatprep.subr.mxu0 0.0
  %1091 = vmatpush1.msra.mxu0 0.0
  %1092 = vmatprep.subr.mxu0 0.0
  %1093 = vmatpush1.msra.mxu0 0.0
  %1094 = vmatprep.subr.mxu0 0.0
  %1095 = vmatpush1.msra.mxu0 0.0
  %1096 = vmatprep.subr.mxu0 0.0
  %1097 = vmatpush1.msra.mxu0 0.0
  %1098 = vmatprep.subr.mxu0 0.0
  %1099 = vmatpush1.msra.mxu0 0.0
  %1100 = vmatprep.subr.mxu0 0.0
  %1101 = vmatpush1.msra.mxu0 0.0
  %1102 = vmatprep.subr.mxu0 0.0
  %1103 = vmatpush1.msra.mxu0 0.0
  %1104 = vmatprep.subr.mxu0 0.0
  %1105 = vmatpush1.msra.mxu0 0.0
  %1106 = vmatprep.subr.mxu0 0.0
  %1107 = vmatpush1.msra.mxu0 0.0
  %1108 = vmatprep.subr.mxu0 0.0
  %1109 = vmatpush1.msra.mxu0 0.0
  %1110 = vmatprep.subr.mxu0 0.0
  %1111 = vmatpush1.msra.mxu0 0.0
  %1112 = vmatprep.subr.mxu0 0.0
  %1113 = vmatpush1.msra.mxu0 0.0
  %1114 = vmatprep.subr.mxu0 0.0
  %1115 = vmatpush1.msra.mxu0 0.0
  %1116 = vmatprep.subr.mxu0 0.0
  %1117 = vmatpush1.msra.mxu0 0.0
  %1118 = vmatprep.subr.mxu0 0.0
  %1119 = vmatpush1.msra.mxu0 0.0
  %1120 = vmatprep.subr.mxu0 0.0
  %1121 = vmatpush1.msra.mxu0 0.0
  %1122 = vmatprep.subr.mxu0 0.0
  %1123 = vmatpush1.msra.mxu0 0.0
  %1124 = vmatprep.subr.mxu0 0.0
  %1125 = vmatpush1.msra.mxu0 0.0
  %1126 = vmatprep.subr.mxu0 0.0
  %1127 = vmatpush1.msra.mxu0 0.0
  %1128 = vmatprep.subr.mxu0 0.0
  %1129 = vmatpush1.msra.mxu0 0.0
  %1130 = vmatprep.subr.mxu0 0.0
  %1131 = vmatpush1.msra.mxu0 0.0
  %1132 = vmatprep.subr.mxu0 0.0
  %1133 = vmatpush1.msra.mxu0 0.0
  %1134 = vmatprep.subr.mxu0 0.0
  %1135 = vmatpush1.msra.mxu0 0.0
  %1136 = vmatprep.mubr.f32.mxu0 0.0
  %1137 = vmatmul.mubr.f32.gmra.mrb[0].mxu0 %v1070
  %v1138 = vpop.f32.mrb[0].mxu0
  %v1139 = vadd.f32 %v240, %v1138
  %v1140 = vpop.f32.mrb[0].mxu0
  %1141 = vdwg.mxu0
  %v1142 = vadd.f32 %v224, %v1139
  %v1143 = vxor.u32 %v1142, 2147483648
  %v1144 = vmul.f32 %v1143, 1.442695
  %v1145 = vpow.pop %v1144
  %v1146 = vadd.f32 %v1145, 1.0
  %v1147 = vrcp.pop %v1146
  %v1148 = vmul.f32 1.0, %v1147
  %v1151 = vunpack.c.l.s4 1983009808
  %v1152 = vunpack.c.0.s8 %v1151
  %v1153 = vlaneseq
  %v1154 = vshrl.u32 %v1153, 7
  %v1155 = vsub.s32 %v1152, %v1154
  %v1156 = vrot.slane %v1139, %v1155
  %1157 = vrot.lane.b32.xlu0 %v1156, 96
  %v1158 = vpop.permute.xlu0 %1157
  %v1160 = vmul.f32 %v1148, %v1158
  %1162 = vrot.lane.b32.xlu0 %v1160, 32
  %v1163 = vpop.permute.xlu0 %1162
  %v1165 = vadd.f32 %v224, %v1163
  %v1166 = vtanh.pop %v1165
  %v1167 = vsub.f32 1.0, %v1148
  %1169 = vrot.lane.b32.xlu0 %v1166, 112
  %v1170 = vpop.permute.xlu0 %1169
  %v1172 = vmul.f32 %v1167, %v1170
  %v1173 = vmul.f32 %v1148, %v1056
  %v1174 = vadd.f32 %v1172, %v1173
  %v1177 = vunpack.c.l.s4 1983009808
  %v1178 = vunpack.c.0.s8 %v1177
  %v1179 = vlaneseq
  %v1180 = vshrl.u32 %v1179, 7
  %v1181 = vsub.s32 %v1178, %v1180
  %v1182 = vrot.slane %v1174, %v1181
  %1183 = vrot.lane.b32.xlu0 %v1182, 112
  %v1184 = vpop.permute.xlu0 %1183
  %s1186 = scalar_lea.vmem [#allocation2], 14
  %1187 = vst.msk [vmem:[%s1186] sm:$0x3] %vm360, %v1184
  %v1188 = vld [vmem:[#allocation2] sm:$0x3]
  %v1189 = vld [vmem:[#allocation2 + $0x2] sm:$0x3]
  %v1190 = vld [vmem:[#allocation2 + $0x4] sm:$0x3]
  %v1191 = vld [vmem:[#allocation2 + $0x6] sm:$0x3]
  %v1192 = vld [vmem:[#allocation2 + $0x8] sm:$0x3]
  %v1193 = vld [vmem:[#allocation2 + $0xa] sm:$0x3]
  %v1194 = vld [vmem:[#allocation2 + $0xc] sm:$0x3]
  %v1195 = vld [vmem:[#allocation2 + $0xe] sm:$0x3]
  %v1204 = vcombine.low %v1188, %v1189
  %v1205 = vcombine.low %v1190, %v1191
  %v1207 = vunpack.c.l.s4 1983009808
  %v1208 = vunpack.c.0.s8 %v1207
  %v1209 = vlaneseq
  %v1210 = vshrl.u32 %v1209, 7
  %v1211 = vsub.s32 %v1208, %v1210
  %v1212 = vrot.slane %v1204, %v1211
  %v1214 = vunpack.c.l.s4 1983009808
  %v1215 = vunpack.c.0.s8 %v1214
  %v1216 = vlaneseq
  %v1217 = vshrl.u32 %v1216, 7
  %v1218 = vsub.s32 %v1215, %v1217
  %v1219 = vrot.slane %v1205, %v1218
  %v1220 = vcombine.low %v1212, %v1219
  %v1221 = vcombine.low %v1192, %v1193
  %v1222 = vcombine.low %v1194, %v1195
  %v1224 = vunpack.c.l.s4 1983009808
  %v1225 = vunpack.c.0.s8 %v1224
  %v1226 = vlaneseq
  %v1227 = vshrl.u32 %v1226, 7
  %v1228 = vsub.s32 %v1225, %v1227
  %v1229 = vrot.slane %v1221, %v1228
  %v1231 = vunpack.c.l.s4 1983009808
  %v1232 = vunpack.c.0.s8 %v1231
  %v1233 = vlaneseq
  %v1234 = vshrl.u32 %v1233, 7
  %v1235 = vsub.s32 %v1232, %v1234
  %v1236 = vrot.slane %v1222, %v1235
  %v1237 = vcombine.low %v1229, %v1236
  %v1240 = vsel %vm242, %v1220, 0.0
  %v1241 = vsel %vm242, %v1237, 0.0
  %v1242 = vadd.f32 %v1240, %v1241
  %v1243 = vrot.slane %v1242, 4
  %v1244 = vadd.f32 %v1242, %v1243
  %v1245 = vrot.slane %v1244, 2
  %v1246 = vadd.f32 %v1244, %v1245
  %v1247 = vrot.slane %v1246, 1
  %v1248 = vadd.f32 %v1246, %v1247
  %v1249 = vrcp.pop 16.0
  %v1250 = vmul.f32 %v1248, %v1249
  %v1252 = vcombine.high %v1250, %v1250
  %v1254 = vunpack.c.l.s4 1983009808
  %v1255 = vunpack.c.0.s8 %v1254
  %v1256 = vlaneseq
  %v1257 = vshrl.u32 %v1256, 7
  %v1258 = vsub.s32 %v1255, %v1257
  %v1259 = vrot.slane %v1250, %v1258
  %v1261 = vunpack.c.l.s4 1983009808
  %v1262 = vunpack.c.0.s8 %v1261
  %v1263 = vlaneseq
  %v1264 = vshrl.u32 %v1263, 7
  %v1265 = vsub.s32 %v1262, %v1264
  %v1266 = vrot.slane %v1252, %v1265
  %v1267 = vcombine.high %v1259, %v1259
  %v1268 = vcombine.high %v1266, %v1266
  %v1273 = vsub.f32 %v1188, %v1259
  %v1274 = vsub.f32 %v1189, %v1267
  %v1275 = vsub.f32 %v1190, %v1266
  %v1276 = vsub.f32 %v1191, %v1268
  %v1277 = vsub.f32 %v1192, %v1259
  %v1278 = vsub.f32 %v1193, %v1267
  %v1279 = vsub.f32 %v1194, %v1266
  %v1280 = vsub.f32 %v1195, %v1268
  %v1281 = vmul.f32 %v1273, %v1273
  %v1282 = vmul.f32 %v1274, %v1274
  %v1283 = vmul.f32 %v1275, %v1275
  %v1284 = vmul.f32 %v1276, %v1276
  %v1285 = vmul.f32 %v1277, %v1277
  %v1286 = vmul.f32 %v1278, %v1278
  %v1287 = vmul.f32 %v1279, %v1279
  %v1288 = vmul.f32 %v1280, %v1280
  %v1297 = vcombine.low %v1281, %v1282
  %v1298 = vcombine.low %v1283, %v1284
  %v1300 = vunpack.c.l.s4 1983009808
  %v1301 = vunpack.c.0.s8 %v1300
  %v1302 = vlaneseq
  %v1303 = vshrl.u32 %v1302, 7
  %v1304 = vsub.s32 %v1301, %v1303
  %v1305 = vrot.slane %v1297, %v1304
  %v1307 = vunpack.c.l.s4 1983009808
  %v1308 = vunpack.c.0.s8 %v1307
  %v1309 = vlaneseq
  %v1310 = vshrl.u32 %v1309, 7
  %v1311 = vsub.s32 %v1308, %v1310
  %v1312 = vrot.slane %v1298, %v1311
  %v1313 = vcombine.low %v1305, %v1312
  %v1314 = vcombine.low %v1285, %v1286
  %v1315 = vcombine.low %v1287, %v1288
  %v1317 = vunpack.c.l.s4 1983009808
  %v1318 = vunpack.c.0.s8 %v1317
  %v1319 = vlaneseq
  %v1320 = vshrl.u32 %v1319, 7
  %v1321 = vsub.s32 %v1318, %v1320
  %v1322 = vrot.slane %v1314, %v1321
  %v1324 = vunpack.c.l.s4 1983009808
  %v1325 = vunpack.c.0.s8 %v1324
  %v1326 = vlaneseq
  %v1327 = vshrl.u32 %v1326, 7
  %v1328 = vsub.s32 %v1325, %v1327
  %v1329 = vrot.slane %v1315, %v1328
  %v1330 = vcombine.low %v1322, %v1329
  %v1333 = vsel %vm242, %v1313, 0.0
  %v1334 = vsel %vm242, %v1330, 0.0
  %v1335 = vadd.f32 %v1333, %v1334
  %v1336 = vrot.slane %v1335, 4
  %v1337 = vadd.f32 %v1335, %v1336
  %v1338 = vrot.slane %v1337, 2
  %v1339 = vadd.f32 %v1337, %v1338
  %v1340 = vrot.slane %v1339, 1
  %v1341 = vadd.f32 %v1339, %v1340
  %v1342 = vmul.f32 %v1341, %v1249
  %v1343 = vld [vmem:[%s6] sm:$0x1]
  %v1344 = vadd.f32 %v1342, 1e-05
  %v1345 = vrsqrt.pop %v1344
  %v1346 = vmul.f32 %v1343, %v1345
  %v1347 = vld [vmem:[%s7] sm:$0x1]
  %v1348 = vmul.f32 %v1250, %v1346
  %v1349 = vsub.f32 %v1347, %v1348
  %v1350 = vld [vmem:[%s8] sm:$0xff]
  %v1351 = vld [vmem:[%s8 + $0x8] sm:$0xff]
  %v1352 = vld [vmem:[%s9] sm:$0x1]
  %v1354 = vsel %vm242, %v1349, 0
  %1356 = vmatprep.subr.mxu0 0.0
  %1357 = vmatpush1.msra.mxu0 %v1350
  %1358 = vmatprep.subr.mxu0 0.0
  %1359 = vmatpush1.msra.mxu0 %v1351
  %1360 = vmatprep.subr.mxu0 0.0
  %1361 = vmatpush1.msra.mxu0 0.0
  %1362 = vmatprep.subr.mxu0 0.0
  %1363 = vmatpush1.msra.mxu0 0.0
  %1364 = vmatprep.subr.mxu0 0.0
  %1365 = vmatpush1.msra.mxu0 0.0
  %1366 = vmatprep.subr.mxu0 0.0
  %1367 = vmatpush1.msra.mxu0 0.0
  %1368 = vmatprep.subr.mxu0 0.0
  %1369 = vmatpush1.msra.mxu0 0.0
  %1370 = vmatprep.subr.mxu0 0.0
  %1371 = vmatpush1.msra.mxu0 0.0
  %1372 = vmatprep.subr.mxu0 0.0
  %1373 = vmatpush1.msra.mxu0 0.0
  %1374 = vmatprep.subr.mxu0 0.0
  %1375 = vmatpush1.msra.mxu0 0.0
  %1376 = vmatprep.subr.mxu0 0.0
  %1377 = vmatpush1.msra.mxu0 0.0
  %1378 = vmatprep.subr.mxu0 0.0
  %1379 = vmatpush1.msra.mxu0 0.0
  %1380 = vmatprep.subr.mxu0 0.0
  %1381 = vmatpush1.msra.mxu0 0.0
  %1382 = vmatprep.subr.mxu0 0.0
  %1383 = vmatpush1.msra.mxu0 0.0
  %1384 = vmatprep.subr.mxu0 0.0
  %1385 = vmatpush1.msra.mxu0 0.0
  %1386 = vmatprep.subr.mxu0 0.0
  %1387 = vmatpush1.msra.mxu0 0.0
  %1388 = vmatprep.subr.mxu0 0.0
  %1389 = vmatpush1.msra.mxu0 0.0
  %1390 = vmatprep.subr.mxu0 0.0
  %1391 = vmatpush1.msra.mxu0 0.0
  %1392 = vmatprep.subr.mxu0 0.0
  %1393 = vmatpush1.msra.mxu0 0.0
  %1394 = vmatprep.subr.mxu0 0.0
  %1395 = vmatpush1.msra.mxu0 0.0
  %1396 = vmatprep.subr.mxu0 0.0
  %1397 = vmatpush1.msra.mxu0 0.0
  %1398 = vmatprep.subr.mxu0 0.0
  %1399 = vmatpush1.msra.mxu0 0.0
  %1400 = vmatprep.subr.mxu0 0.0
  %1401 = vmatpush1.msra.mxu0 0.0
  %1402 = vmatprep.subr.mxu0 0.0
  %1403 = vmatpush1.msra.mxu0 0.0
  %1404 = vmatprep.subr.mxu0 0.0
  %1405 = vmatpush1.msra.mxu0 0.0
  %1406 = vmatprep.subr.mxu0 0.0
  %1407 = vmatpush1.msra.mxu0 0.0
  %1408 = vmatprep.subr.mxu0 0.0
  %1409 = vmatpush1.msra.mxu0 0.0
  %1410 = vmatprep.subr.mxu0 0.0
  %1411 = vmatpush1.msra.mxu0 0.0
  %1412 = vmatprep.subr.mxu0 0.0
  %1413 = vmatpush1.msra.mxu0 0.0
  %1414 = vmatprep.subr.mxu0 0.0
  %1415 = vmatpush1.msra.mxu0 0.0
  %1416 = vmatprep.subr.mxu0 0.0
  %1417 = vmatpush1.msra.mxu0 0.0
  %1418 = vmatprep.subr.mxu0 0.0
  %1419 = vmatpush1.msra.mxu0 0.0
  %1420 = vmatprep.mubr.f32.mxu0 0.0
  %1421 = vmatmul.mubr.f32.gmra.mrb[0].mxu0 %v1354
  %v1422 = vpop.f32.mrb[0].mxu0
  %v1423 = vadd.f32 %v1352, %v1422
  %v1424 = vpop.f32.mrb[0].mxu0
  %1425 = vdwg.mxu0
  %v1427 = vlaneseq
  %v1428 = vshrl.u32 %v1427, 7
  %v1429 = vsub.s32 0, %v1428
  %v1430 = vrot.slane %v1346, %v1429
  %v1431 = vcombine.high %v1430, %v1430
  %v1433 = vunpack.c.l.s4 1983009808
  %v1434 = vunpack.c.0.s8 %v1433
  %v1435 = vlaneseq
  %v1436 = vshrl.u32 %v1435, 7
  %v1437 = vsub.s32 %v1434, %v1436
  %v1438 = vrot.slane %v1430, %v1437
  %v1440 = vunpack.c.l.s4 1983009808
  %v1441 = vunpack.c.0.s8 %v1440
  %v1442 = vlaneseq
  %v1443 = vshrl.u32 %v1442, 7
  %v1444 = vsub.s32 %v1441, %v1443
  %v1445 = vrot.slane %v1431, %v1444
  %v1446 = vcombine.high %v1438, %v1438
  %v1447 = vcombine.high %v1445, %v1445
  %v1452 = vmul.f32 %v1188, %v1438
  %v1453 = vmul.f32 %v1189, %v1446
  %v1454 = vmul.f32 %v1190, %v1445
  %v1455 = vmul.f32 %v1191, %v1447
  %v1456 = vmul.f32 %v1192, %v1438
  %v1457 = vmul.f32 %v1193, %v1446
  %v1458 = vmul.f32 %v1194, %v1445
  %v1459 = vmul.f32 %v1195, %v1447
  %v1460 = vlaneseq
  %v1461 = vshrl.u32 %v1460, 7
  %v1462 = vsub.s32 0, %v1461
  %v1463 = vrot.slane %v1423, %v1462
  %v1472 = vcombine.low %v1452, %v1453
  %v1473 = vcombine.low %v1454, %v1455
  %v1475 = vunpack.c.l.s4 1983009808
  %v1476 = vunpack.c.0.s8 %v1475
  %v1477 = vlaneseq
  %v1478 = vshrl.u32 %v1477, 7
  %v1479 = vsub.s32 %v1476, %v1478
  %v1480 = vrot.slane %v1472, %v1479
  %v1482 = vunpack.c.l.s4 1983009808
  %v1483 = vunpack.c.0.s8 %v1482
  %v1484 = vlaneseq
  %v1485 = vshrl.u32 %v1484, 7
  %v1486 = vsub.s32 %v1483, %v1485
  %v1487 = vrot.slane %v1473, %v1486
  %v1488 = vcombine.low %v1480, %v1487
  %v1489 = vcombine.low %v1456, %v1457
  %v1490 = vcombine.low %v1458, %v1459
  %v1492 = vunpack.c.l.s4 1983009808
  %v1493 = vunpack.c.0.s8 %v1492
  %v1494 = vlaneseq
  %v1495 = vshrl.u32 %v1494, 7
  %v1496 = vsub.s32 %v1493, %v1495
  %v1497 = vrot.slane %v1489, %v1496
  %v1499 = vunpack.c.l.s4 1983009808
  %v1500 = vunpack.c.0.s8 %v1499
  %v1501 = vlaneseq
  %v1502 = vshrl.u32 %v1501, 7
  %v1503 = vsub.s32 %v1500, %v1502
  %v1504 = vrot.slane %v1490, %v1503
  %v1505 = vcombine.low %v1497, %v1504
  %v1506 = vsel %vm242, %v1488, 0
  %v1508 = vsel %vm242, %v1505, 0
  %1510 = vmatprep.subr.mxu0 0.0
  %1511 = vmatpush1.msra.mxu0 %v1350
  %1512 = vmatprep.subr.mxu0 0.0
  %1513 = vmatpush1.msra.mxu0 %v1351
  %1514 = vmatprep.subr.mxu0 0.0
  %1515 = vmatpush1.msra.mxu0 0.0
  %1516 = vmatprep.subr.mxu0 0.0
  %1517 = vmatpush1.msra.mxu0 0.0
  %1518 = vmatprep.subr.mxu0 0.0
  %1519 = vmatpush1.msra.mxu0 0.0
  %1520 = vmatprep.subr.mxu0 0.0
  %1521 = vmatpush1.msra.mxu0 0.0
  %1522 = vmatprep.subr.mxu0 0.0
  %1523 = vmatpush1.msra.mxu0 0.0
  %1524 = vmatprep.subr.mxu0 0.0
  %1525 = vmatpush1.msra.mxu0 0.0
  %1526 = vmatprep.subr.mxu0 0.0
  %1527 = vmatpush1.msra.mxu0 0.0
  %1528 = vmatprep.subr.mxu0 0.0
  %1529 = vmatpush1.msra.mxu0 0.0
  %1530 = vmatprep.subr.mxu0 0.0
  %1531 = vmatpush1.msra.mxu0 0.0
  %1532 = vmatprep.subr.mxu0 0.0
  %1533 = vmatpush1.msra.mxu0 0.0
  %1534 = vmatprep.subr.mxu0 0.0
  %1535 = vmatpush1.msra.mxu0 0.0
  %1536 = vmatprep.subr.mxu0 0.0
  %1537 = vmatpush1.msra.mxu0 0.0
  %1538 = vmatprep.subr.mxu0 0.0
  %1539 = vmatpush1.msra.mxu0 0.0
  %1540 = vmatprep.subr.mxu0 0.0
  %1541 = vmatpush1.msra.mxu0 0.0
  %1542 = vmatprep.subr.mxu0 0.0
  %1543 = vmatpush1.msra.mxu0 0.0
  %1544 = vmatprep.subr.mxu0 0.0
  %1545 = vmatpush1.msra.mxu0 0.0
  %1546 = vmatprep.subr.mxu0 0.0
  %1547 = vmatpush1.msra.mxu0 0.0
  %1548 = vmatprep.subr.mxu0 0.0
  %1549 = vmatpush1.msra.mxu0 0.0
  %1550 = vmatprep.subr.mxu0 0.0
  %1551 = vmatpush1.msra.mxu0 0.0
  %1552 = vmatprep.subr.mxu0 0.0
  %1553 = vmatpush1.msra.mxu0 0.0
  %1554 = vmatprep.subr.mxu0 0.0
  %1555 = vmatpush1.msra.mxu0 0.0
  %1556 = vmatprep.subr.mxu0 0.0
  %1557 = vmatpush1.msra.mxu0 0.0
  %1558 = vmatprep.subr.mxu0 0.0
  %1559 = vmatpush1.msra.mxu0 0.0
  %1560 = vmatprep.subr.mxu0 0.0
  %1561 = vmatpush1.msra.mxu0 0.0
  %1562 = vmatprep.subr.mxu0 0.0
  %1563 = vmatpush1.msra.mxu0 0.0
  %1564 = vmatprep.subr.mxu0 0.0
  %1565 = vmatpush1.msra.mxu0 0.0
  %1566 = vmatprep.subr.mxu0 0.0
  %1567 = vmatpush1.msra.mxu0 0.0
  %1568 = vmatprep.subr.mxu0 0.0
  %1569 = vmatpush1.msra.mxu0 0.0
  %1570 = vmatprep.subr.mxu0 0.0
  %1571 = vmatpush1.msra.mxu0 0.0
  %1572 = vmatprep.subr.mxu0 0.0
  %1573 = vmatpush1.msra.mxu0 0.0
  %1574 = vmatprep.mubr.f32.mxu0 0.0
  %1575 = vmatmul.mubr.f32.gmra.mrb[0].mxu0 %v1506
  %v1576 = vpop.f32.mrb[0].mxu0
  %v1577 = vadd.f32 %v1463, %v1576
  %v1578 = vpop.f32.mrb[0].mxu0
  %1579 = vmatprep.mubr.f32.mxu0 0.0
  %1580 = vmatmul.mubr.f32.gmra.mrb[0].mxu0 %v1508
  %v1581 = vpop.f32.mrb[0].mxu0
  %v1582 = vadd.f32 %v1463, %v1581
  %v1583 = vpop.f32.mrb[0].mxu0
  %1584 = vdwg.mxu0
  %vm1585 = vcmask 195584
  %v1586 = vsel %vm1585, %v1577, 0.0
  %v1587 = vsel %vm1585, %v1582, 0.0
  %v1588 = vadd.f32 %v1586, %v1587
  %v1589 = vrot.slane %v1588, 4
  %v1590 = vadd.f32 %v1588, %v1589
  %v1591 = vrot.slane %v1590, 2
  %v1592 = vadd.f32 %v1590, %v1591
  %v1593 = vrot.slane %v1592, 1
  %v1594 = vadd.f32 %v1592, %v1593
  %v1595 = vmul.f32 %v1594, %v1249
  %v1596 = vsub.f32 %v1577, %v1595
  %v1597 = vsub.f32 %v1582, %v1595
  %v1598 = vmul.f32 %v1596, %v1596
  %v1599 = vmul.f32 %v1597, %v1597
  %v1600 = vsel %vm1585, %v1598, 0.0
  %v1601 = vsel %vm1585, %v1599, 0.0
  %v1602 = vadd.f32 %v1600, %v1601
  %v1603 = vrot.slane %v1602, 4
  %v1604 = vadd.f32 %v1602, %v1603
  %v1605 = vrot.slane %v1604, 2
  %v1606 = vadd.f32 %v1604, %v1605
  %v1607 = vrot.slane %v1606, 1
  %v1608 = vadd.f32 %v1606, %v1607
  %v1609 = vmul.f32 %v1608, %v1249
  %v1610 = vld [vmem:[%s10] sm:$0x1]
  %v1611 = vadd.f32 %v1609, 1e-05
  %v1612 = vrsqrt.pop %v1611
  %v1613 = vmul.f32 %v1610, %v1612
  %v1615 = vlaneseq
  %v1616 = vshrl.u32 %v1615, 7
  %v1617 = vsub.s32 0, %v1616
  %v1618 = vrot.slane %v1613, %v1617
  %v1620 = vmul.f32 %v1596, %v1618
  %v1621 = vmul.f32 %v1597, %v1618
  %v1622 = vld [vmem:[%s11] sm:$0x1]
  %v1624 = vlaneseq
  %v1625 = vshrl.u32 %v1624, 7
  %v1626 = vsub.s32 0, %v1625
  %v1627 = vrot.slane %v1622, %v1626
  %v1629 = vadd.f32 %v1620, %v1627
  %v1630 = vadd.f32 %v1621, %v1627
  %vm1631 = vcmp.gt.f32.partialorder %v1629, 0.0
  %vm1632 = vcmp.gt.f32.partialorder %v1630, 0.0
  %v1633 = vmul.f32 %v1629, 1.442695
  %v1634 = vpow.pop %v1633
  %v1635 = vmul.f32 %v1630, 1.442695
  %v1636 = vpow.pop %v1635
  %v1637 = vsub.f32 %v1634, 1.0
  %v1638 = vsub.f32 %v1636, 1.0
  %v1639 = vsel %vm1631, %v1629, %v1637
  %v1640 = vsel %vm1632, %v1630, %v1638
  %v1641 = vld [vmem:[%s12] sm:$0xff]
  %v1642 = vld [vmem:[%s12 + $0x8] sm:$0xff]
  %v1643 = vld [vmem:[%s12 + $0x10] sm:$0xff]
  %v1644 = vld [vmem:[%s13] sm:$0x1]
  %v1646 = vlaneseq
  %v1647 = vshrl.u32 %v1646, 7
  %v1648 = vsub.s32 0, %v1647
  %v1649 = vrot.slane %v1644, %v1648
  %v1652 = vsel %vm1585, %v1639, 0
  %v1655 = vsel %vm1585, %v1640, 0
  %1657 = vmatprep.subr.mxu0 0.0
  %1658 = vmatpush1.msra.mxu0 %v1641
  %1659 = vmatprep.subr.mxu0 0.0
  %1660 = vmatpush1.msra.mxu0 %v1642
  %1661 = vmatprep.subr.mxu0 0.0
  %1662 = vmatpush1.msra.mxu0 %v1643
  %1663 = vmatprep.subr.mxu0 0.0
  %1664 = vmatpush1.msra.mxu0 0.0
  %1665 = vmatprep.subr.mxu0 0.0
  %1666 = vmatpush1.msra.mxu0 0.0
  %1667 = vmatprep.subr.mxu0 0.0
  %1668 = vmatpush1.msra.mxu0 0.0
  %1669 = vmatprep.subr.mxu0 0.0
  %1670 = vmatpush1.msra.mxu0 0.0
  %1671 = vmatprep.subr.mxu0 0.0
  %1672 = vmatpush1.msra.mxu0 0.0
  %1673 = vmatprep.subr.mxu0 0.0
  %1674 = vmatpush1.msra.mxu0 0.0
  %1675 = vmatprep.subr.mxu0 0.0
  %1676 = vmatpush1.msra.mxu0 0.0
  %1677 = vmatprep.subr.mxu0 0.0
  %1678 = vmatpush1.msra.mxu0 0.0
  %1679 = vmatprep.subr.mxu0 0.0
  %1680 = vmatpush1.msra.mxu0 0.0
  %1681 = vmatprep.subr.mxu0 0.0
  %1682 = vmatpush1.msra.mxu0 0.0
  %1683 = vmatprep.subr.mxu0 0.0
  %1684 = vmatpush1.msra.mxu0 0.0
  %1685 = vmatprep.subr.mxu0 0.0
  %1686 = vmatpush1.msra.mxu0 0.0
  %1687 = vmatprep.subr.mxu0 0.0
  %1688 = vmatpush1.msra.mxu0 0.0
  %1689 = vmatprep.subr.mxu0 0.0
  %1690 = vmatpush1.msra.mxu0 0.0
  %1691 = vmatprep.subr.mxu0 0.0
  %1692 = vmatpush1.msra.mxu0 0.0
  %1693 = vmatprep.subr.mxu0 0.0
  %1694 = vmatpush1.msra.mxu0 0.0
  %1695 = vmatprep.subr.mxu0 0.0
  %1696 = vmatpush1.msra.mxu0 0.0
  %1697 = vmatprep.subr.mxu0 0.0
  %1698 = vmatpush1.msra.mxu0 0.0
  %1699 = vmatprep.subr.mxu0 0.0
  %1700 = vmatpush1.msra.mxu0 0.0
  %1701 = vmatprep.subr.mxu0 0.0
  %1702 = vmatpush1.msra.mxu0 0.0
  %1703 = vmatprep.subr.mxu0 0.0
  %1704 = vmatpush1.msra.mxu0 0.0
  %1705 = vmatprep.subr.mxu0 0.0
  %1706 = vmatpush1.msra.mxu0 0.0
  %1707 = vmatprep.subr.mxu0 0.0
  %1708 = vmatpush1.msra.mxu0 0.0
  %1709 = vmatprep.subr.mxu0 0.0
  %1710 = vmatpush1.msra.mxu0 0.0
  %1711 = vmatprep.subr.mxu0 0.0
  %1712 = vmatpush1.msra.mxu0 0.0
  %1713 = vmatprep.subr.mxu0 0.0
  %1714 = vmatpush1.msra.mxu0 0.0
  %1715 = vmatprep.subr.mxu0 0.0
  %1716 = vmatpush1.msra.mxu0 0.0
  %1717 = vmatprep.subr.mxu0 0.0
  %1718 = vmatpush1.msra.mxu0 0.0
  %1719 = vmatprep.subr.mxu0 0.0
  %1720 = vmatpush1.msra.mxu0 0.0
  %1721 = vmatprep.mubr.f32.mxu0 0.0
  %1722 = vmatmul.mubr.f32.gmra.mrb[0].mxu0 %v1652
  %v1723 = vpop.f32.mrb[0].mxu0
  %v1724 = vadd.f32 %v1649, %v1723
  %v1725 = vpop.f32.mrb[0].mxu0
  %1726 = vmatprep.mubr.f32.mxu0 0.0
  %1727 = vmatmul.mubr.f32.gmra.mrb[0].mxu0 %v1655
  %v1728 = vpop.f32.mrb[0].mxu0
  %v1729 = vadd.f32 %v1649, %v1728
  %v1730 = vpop.f32.mrb[0].mxu0
  %1731 = vdwg.mxu0
  %v1732 = vld [vmem:[%s0] sm:$0x3]
  %v1734 = vcombine.low %v1732, %v1732
  %v1736 = vunpack.c.l.s4 1983009808
  %v1737 = vunpack.c.0.s8 %v1736
  %v1738 = vlaneseq
  %v1739 = vshrl.u32 %v1738, 7
  %v1740 = vsub.s32 %v1737, %v1739
  %v1741 = vrot.slane %v1734, %v1740
  %v1742 = vcombine.low %v1741, %v1741
  %vm1744 = vcmask 15360
  %1745 = vst.msk [vmem:[%s14] sm:$0xff] %vm1744, %v1742
  %1746 = vst.msk [vmem:[%s14 + $0x8] sm:$0xff] %vm1744, %v1742
  %1749 = vrot.lane.b32.xlu0 %v1724, 2
  %v1750 = vpop.permute.xlu0 %1749
  %1751 = vrot.lane.b32.xlu0 %v1729, 2
  %v1752 = vpop.permute.xlu0 %1751
  %vm1755 = vcmask 64528
  %1756 = vst.msk [vmem:[%s14] sm:$0xff] %vm1755, %v1750
  %1757 = vst.msk [vmem:[%s14 + $0x8] sm:$0xff] %vm1755, %v1752
  // Predicated region
  $region58: #{tcnf_forward.3} parent=0 // pred_check
    _
  $region59: #{tcnf_forward.3} parent=0 // pred_check_branch
    %1759 = sbr.rel (0) target = $region61
  $region60: #{tcnf_forward.3} parent=0 // pred_region
    _
  $region61: #{tcnf_forward.3} parent=0 // pred_fallthru
    _
  // Predicated region
  $region62: #{tcnf_forward.3} parent=0 // pred_check
    _
  $region63: #{tcnf_forward.3} parent=0 // pred_check_branch
    %1761 = sbr.rel (0) target = $region65
  $region64: #{tcnf_forward.3} parent=0 // pred_region
    _
  $region65: #{tcnf_forward.3} parent=0 // pred_fallthru
    _

// kernel: tcnf_forward.5
$region0: #{tcnf_forward.5}
  #allocation0 [shape = 'u32[]', space=smem, size = 0x4, offset = 0x4, fixed_abs, tag = 'smem constant byte address 0x4 - core index']
  #allocation1 [shape = 'u32[144,128]{1,0:T(1,128)}', space=vmem, size = 0x12000, scoped, tag = 'internal scratch']
  #allocation2 [shape = 'f32[16,20]{1,0:T(8,128)}', space=vmem, size = 0x2000, scoped, tag = 'scratch operand']
  %s0 = inlined_call_operand.vmem [shape: f32[16,8], index: 0, kind: input, shape index: {}]
  %s1 = inlined_call_operand.vmem [shape: f32[16,8], index: 1, kind: input, shape index: {}]
  %s2 = inlined_call_operand.vmem [shape: f32[16,4], index: 2, kind: input, shape index: {}]
  %s3 = inlined_call_operand.vmem [shape: f32[1,4], index: 3, kind: input, shape index: {}]
  %s4 = inlined_call_operand.vmem [shape: f32[20,64], index: 4, kind: input, shape index: {}]
  %s5 = inlined_call_operand.vmem [shape: f32[1,64], index: 5, kind: input, shape index: {}]
  %s6 = inlined_call_operand.vmem [shape: f32[64,64], index: 6, kind: input, shape index: {}]
  %s7 = inlined_call_operand.vmem [shape: f32[1,64], index: 7, kind: input, shape index: {}]
  %s8 = inlined_call_operand.vmem [shape: f32[64,8], index: 8, kind: input, shape index: {}]
  %s9 = inlined_call_operand.vmem [shape: f32[1,8], index: 9, kind: input, shape index: {}]
  %s10 = inlined_call_operand.vmem [shape: f32[1,1,4], index: 10, kind: input, shape index: {}]
  %s11 = inlined_call_operand.vmem [shape: f32[1,1,4], index: 11, kind: input, shape index: {}]
  %s12 = inlined_call_operand.vmem [shape: f32[1,4], index: 12, kind: input, shape index: {}]
  %s13 = inlined_call_operand.vmem [shape: f32[20,64], index: 13, kind: input, shape index: {}]
  %s14 = inlined_call_operand.vmem [shape: f32[1,64], index: 14, kind: input, shape index: {}]
  %s15 = inlined_call_operand.vmem [shape: f32[64,64], index: 15, kind: input, shape index: {}]
  %s16 = inlined_call_operand.vmem [shape: f32[1,64], index: 16, kind: input, shape index: {}]
  %s17 = inlined_call_operand.vmem [shape: f32[64,8], index: 17, kind: input, shape index: {}]
  %s18 = inlined_call_operand.vmem [shape: f32[1,8], index: 18, kind: input, shape index: {}]
  %s19 = inlined_call_operand.vmem [shape: f32[1,1,4], index: 19, kind: input, shape index: {}]
  %s20 = inlined_call_operand.vmem [shape: f32[1,1,4], index: 20, kind: input, shape index: {}]
  %s21 = inlined_call_operand.hbm [shape: f32[1,1], index: 21, kind: output, shape index: {}]
  %s22 = sld [smem:[#allocation0]]
  $region94: #{tcnf_forward.5} parent=0
    _
  %s24 = ssub.s32 1, %s22
  %s25 = scalar_select 0, %s24, %s22
  $region1: #{tcnf_forward.5} parent=0
    #allocation3 [shape = 'u8[512]{0}', space=smem, size = 0x200, scoped, tag = 'output window, operand 0, single buffered']
    #allocation4 [shape = 's32[1]{0}', space=sflag, size = 0x4, scoped, tag = 'scoped memory for tcnf_forward.5']
    %26 = vsyncpa [#allocation4], 0
    // Predicated region
    $region2: #{tcnf_forward.5} parent=1 // pred_check
      _
    $region3: #{tcnf_forward.5} parent=1 // pred_check_branch
      %28 = sbr.rel (0) target = $region5
    $region4: #{tcnf_forward.5} parent=1 // pred_region
      _
    $region5: #{tcnf_forward.5} parent=1 // pred_fallthru
      _
    // Predicated region
    $region6: #{tcnf_forward.5} parent=1 // pred_check
      _
    $region7: #{tcnf_forward.5} parent=1 // pred_check_branch
      %30 = sbr.rel (0) target = $region9
    $region8: #{tcnf_forward.5} parent=1 // pred_region
      _
    $region9: #{tcnf_forward.5} parent=1 // pred_fallthru
      _
    // Predicated region
    $region10: #{tcnf_forward.5} parent=1 // pred_check
      _
    $region11: #{tcnf_forward.5} parent=1 // pred_check_branch
      %32 = sbr.rel (0) target = $region13
    $region12: #{tcnf_forward.5} parent=1 // pred_region
      _
    $region13: #{tcnf_forward.5} parent=1 // pred_fallthru
      _
    // Predicated region
    $region14: #{tcnf_forward.5} parent=1 // pred_check
      _
    $region15: #{tcnf_forward.5} parent=1 // pred_check_branch
      %34 = sbr.rel (0) target = $region17
    $region16: #{tcnf_forward.5} parent=1 // pred_region
      _
    $region17: #{tcnf_forward.5} parent=1 // pred_fallthru
      _
    // Predicated region
    $region18: #{tcnf_forward.5} parent=1 // pred_check
      _
    $region19: #{tcnf_forward.5} parent=1 // pred_check_branch
      %36 = sbr.rel (0) target = $region21
    $region20: #{tcnf_forward.5} parent=1 // pred_region
      _
    $region21: #{tcnf_forward.5} parent=1 // pred_fallthru
      _
    // Predicated region
    $region22: #{tcnf_forward.5} parent=1 // pred_check
      _
    $region23: #{tcnf_forward.5} parent=1 // pred_check_branch
      %38 = sbr.rel (0) target = $region25
    $region24: #{tcnf_forward.5} parent=1 // pred_region
      _
    $region25: #{tcnf_forward.5} parent=1 // pred_fallthru
      _
    // Predicated region
    $region26: #{tcnf_forward.5} parent=1 // pred_check
      _
    $region27: #{tcnf_forward.5} parent=1 // pred_check_branch
      %40 = sbr.rel (0) target = $region29
    $region28: #{tcnf_forward.5} parent=1 // pred_region
      _
    $region29: #{tcnf_forward.5} parent=1 // pred_fallthru
      _
    // Predicated region
    $region30: #{tcnf_forward.5} parent=1 // pred_check
      _
    $region31: #{tcnf_forward.5} parent=1 // pred_check_branch
      %42 = sbr.rel (0) target = $region33
    $region32: #{tcnf_forward.5} parent=1 // pred_region
      _
    $region33: #{tcnf_forward.5} parent=1 // pred_fallthru
      _
    // Predicated region
    $region34: #{tcnf_forward.5} parent=1 // pred_check
      _
    $region35: #{tcnf_forward.5} parent=1 // pred_check_branch
      %44 = sbr.rel (0) target = $region37
    $region36: #{tcnf_forward.5} parent=1 // pred_region
      _
    $region37: #{tcnf_forward.5} parent=1 // pred_fallthru
      _
    // Predicated region
    $region38: #{tcnf_forward.5} parent=1 // pred_check
      _
    $region39: #{tcnf_forward.5} parent=1 // pred_check_branch
      %46 = sbr.rel (0) target = $region41
    $region40: #{tcnf_forward.5} parent=1 // pred_region
      _
    $region41: #{tcnf_forward.5} parent=1 // pred_fallthru
      _
    // Predicated region
    $region42: #{tcnf_forward.5} parent=1 // pred_check
      _
    $region43: #{tcnf_forward.5} parent=1 // pred_check_branch
      %48 = sbr.rel (0) target = $region45
    $region44: #{tcnf_forward.5} parent=1 // pred_region
      _
    $region45: #{tcnf_forward.5} parent=1 // pred_fallthru
      _
    // Predicated region
    $region46: #{tcnf_forward.5} parent=1 // pred_check
      _
    $region47: #{tcnf_forward.5} parent=1 // pred_check_branch
      %50 = sbr.rel (0) target = $region49
    $region48: #{tcnf_forward.5} parent=1 // pred_region
      _
    $region49: #{tcnf_forward.5} parent=1 // pred_fallthru
      _
    // Predicated region
    $region50: #{tcnf_forward.5} parent=1 // pred_check
      _
    $region51: #{tcnf_forward.5} parent=1 // pred_check_branch
      %52 = sbr.rel (0) target = $region53
    $region52: #{tcnf_forward.5} parent=1 // pred_region
      _
    $region53: #{tcnf_forward.5} parent=1 // pred_fallthru
      _
    // Predicated region
    $region54: #{tcnf_forward.5} parent=1 // pred_check
      _
    $region55: #{tcnf_forward.5} parent=1 // pred_check_branch
      %54 = sbr.rel (0) target = $region57
    $region56: #{tcnf_forward.5} parent=1 // pred_region
      _
    $region57: #{tcnf_forward.5} parent=1 // pred_fallthru
      _
    // Predicated region
    $region58: #{tcnf_forward.5} parent=1 // pred_check
      _
    $region59: #{tcnf_forward.5} parent=1 // pred_check_branch
      %56 = sbr.rel (0) target = $region61
    $region60: #{tcnf_forward.5} parent=1 // pred_region
      _
    $region61: #{tcnf_forward.5} parent=1 // pred_fallthru
      _
    // Predicated region
    $region62: #{tcnf_forward.5} parent=1 // pred_check
      _
    $region63: #{tcnf_forward.5} parent=1 // pred_check_branch
      %58 = sbr.rel (0) target = $region65
    $region64: #{tcnf_forward.5} parent=1 // pred_region
      _
    $region65: #{tcnf_forward.5} parent=1 // pred_fallthru
      _
    // Predicated region
    $region66: #{tcnf_forward.5} parent=1 // pred_check
      _
    $region67: #{tcnf_forward.5} parent=1 // pred_check_branch
      %60 = sbr.rel (0) target = $region69
    $region68: #{tcnf_forward.5} parent=1 // pred_region
      _
    $region69: #{tcnf_forward.5} parent=1 // pred_fallthru
      _
    // Predicated region
    $region70: #{tcnf_forward.5} parent=1 // pred_check
      _
    $region71: #{tcnf_forward.5} parent=1 // pred_check_branch
      %62 = sbr.rel (0) target = $region73
    $region72: #{tcnf_forward.5} parent=1 // pred_region
      _
    $region73: #{tcnf_forward.5} parent=1 // pred_fallthru
      _
    // Predicated region
    $region74: #{tcnf_forward.5} parent=1 // pred_check
      _
    $region75: #{tcnf_forward.5} parent=1 // pred_check_branch
      %64 = sbr.rel (0) target = $region77
    $region76: #{tcnf_forward.5} parent=1 // pred_region
      _
    $region77: #{tcnf_forward.5} parent=1 // pred_fallthru
      _
    // Predicated region
    $region78: #{tcnf_forward.5} parent=1 // pred_check
      _
    $region79: #{tcnf_forward.5} parent=1 // pred_check_branch
      %66 = sbr.rel (0) target = $region81
    $region80: #{tcnf_forward.5} parent=1 // pred_region
      _
    $region81: #{tcnf_forward.5} parent=1 // pred_fallthru
      _
    // Predicated region
    $region82: #{tcnf_forward.5} parent=1 // pred_check
      _
    $region83: #{tcnf_forward.5} parent=1 // pred_check_branch
      %68 = sbr.rel (0) target = $region85
    $region84: #{tcnf_forward.5} parent=1 // pred_region
      _
    $region85: #{tcnf_forward.5} parent=1 // pred_fallthru
      _
    %v69 = vld [vmem:[%s0] sm:$0xff]
    %v70 = vld [vmem:[%s0 + $0x8] sm:$0xff]
    %vm71 = vcmask 64512
    %72 = vst.msk [vmem:[#allocation2] sm:$0xff] %vm71, %v69
    %73 = vst.msk [vmem:[#allocation2 + $0x8] sm:$0xff] %vm71, %v70
    %v74 = vld [vmem:[%s1] sm:$0xff]
    %v75 = vld [vmem:[%s1 + $0x8] sm:$0xff]
    %78 = vrot.lane.b32.xlu0 %v74, 8
    %v79 = vpop.permute.xlu0 %78
    %80 = vrot.lane.b32.xlu0 %v75, 8
    %v81 = vpop.permute.xlu0 %80
    %vm84 = vcmask 130112
    %85 = vst.msk [vmem:[#allocation2] sm:$0xff] %vm84, %v79
    %86 = vst.msk [vmem:[#allocation2 + $0x8] sm:$0xff] %vm84, %v81
    %v87 = vld [vmem:[%s2] sm:$0xff]
    %v88 = vld [vmem:[%s2 + $0x8] sm:$0xff]
    %v89 = vld [vmem:[%s3] sm:$0x1]
    %v90 = vld [vmem:[%s4] sm:$0xff]
    %v91 = vld [vmem:[%s4 + $0x8] sm:$0xff]
    %v92 = vld [vmem:[%s4 + $0x10] sm:$0xf]
    %v93 = vld [vmem:[%s6] sm:$0xff]
    %v94 = vld [vmem:[%s6 + $0x8] sm:$0xff]
    %v95 = vld [vmem:[%s6 + $0x10] sm:$0xff]
    %v96 = vld [vmem:[%s6 + $0x18] sm:$0xff]
    %v97 = vld [vmem:[%s6 + $0x20] sm:$0xff]
    %v98 = vld [vmem:[%s6 + $0x28] sm:$0xff]
    %v99 = vld [vmem:[%s6 + $0x30] sm:$0xff]
    %v100 = vld [vmem:[%s6 + $0x38] sm:$0xff]
    %v101 = vld [vmem:[%s8] sm:$0xff]
    %v102 = vld [vmem:[%s8 + $0x8] sm:$0xff]
    %v103 = vld [vmem:[%s8 + $0x10] sm:$0xff]
    %v104 = vld [vmem:[%s8 + $0x18] sm:$0xff]
    %v105 = vld [vmem:[%s8 + $0x20] sm:$0xff]
    %v106 = vld [vmem:[%s8 + $0x28] sm:$0xff]
    %v107 = vld [vmem:[%s8 + $0x30] sm:$0xff]
    %v108 = vld [vmem:[%s8 + $0x38] sm:$0xff]
    %v109 = vld [vmem:[%s5] sm:$0x1]
    %v110 = vld [vmem:[%s7] sm:$0x1]
    %v111 = vld [vmem:[%s9] sm:$0x1]
    %v112 = vld [vmem:[%s10] sm:$0x1]
    %v113 = vld [vmem:[%s11] sm:$0x1]
    %v115 = vlaneseq
    %v116 = vshrl.u32 %v115, 7
    %v117 = vsub.s32 0, %v116
    %v118 = vrot.slane %v89, %v117
    %v120 = vmul.f32 %v87, %v118
    %v121 = vmul.f32 %v88, %v118
    %124 = vrot.lane.b32.xlu0 %v120, 16
    %v125 = vpop.permute.xlu0 %124
    %126 = vrot.lane.b32.xlu0 %v121, 16
    %v127 = vpop.permute.xlu0 %126
    %vm130 = vcmask 162944
    %131 = vst.msk [vmem:[#allocation2] sm:$0xff] %vm130, %v125
    %132 = vst.msk [vmem:[#allocation2 + $0x8] sm:$0xff] %vm130, %v127
    %v133 = vld [vmem:[#allocation2] sm:$0xff]
    %v134 = vld [vmem:[#allocation2 + $0x8] sm:$0xff]
    %v136 = vlaneseq
    %v137 = vshrl.u32 %v136, 7
    %v138 = vsub.s32 0, %v137
    %v139 = vrot.slane %v109, %v138
    %vm141 = vcmask 162816
    %v143 = vsel %vm141, %v133, 0
    %v146 = vsel %vm141, %v134, 0
    %vm148 = vcmask 1043456
    %v150 = vsel %vm148, %v92, 0
    %152 = vmatprep.subr.mxu0 0.0
    %153 = vmatpush1.msra.mxu0 %v90
    %154 = vmatprep.subr.mxu0 0.0
    %155 = vmatpush1.msra.mxu0 %v91
    %156 = vmatprep.subr.mxu0 0.0
    %157 = vmatpush1.msra.mxu0 %v150
    %158 = vmatprep.subr.mxu0 0.0
    %159 = vmatpush1.msra.mxu0 0.0
    %160 = vmatprep.subr.mxu0 0.0
    %161 = vmatpush1.msra.mxu0 0.0
    %162 = vmatprep.subr.mxu0 0.0
    %163 = vmatpush1.msra.mxu0 0.0
    %164 = vmatprep.subr.mxu0 0.0
    %165 = vmatpush1.msra.mxu0 0.0
    %166 = vmatprep.subr.mxu0 0.0
    %167 = vmatpush1.msra.mxu0 0.0
    %168 = vmatprep.subr.mxu0 0.0
    %169 = vmatpush1.msra.mxu0 0.0
    %170 = vmatprep.subr.mxu0 0.0
    %171 = vmatpush1.msra.mxu0 0.0
    %172 = vmatprep.subr.mxu0 0.0
    %173 = vmatpush1.msra.mxu0 0.0
    %174 = vmatprep.subr.mxu0 0.0
    %175 = vmatpush1.msra.mxu0 0.0
    %176 = vmatprep.subr.mxu0 0.0
    %177 = vmatpush1.msra.mxu0 0.0
    %178 = vmatprep.subr.mxu0 0.0
    %179 = vmatpush1.msra.mxu0 0.0
    %180 = vmatprep.subr.mxu0 0.0
    %181 = vmatpush1.msra.mxu0 0.0
    %182 = vmatprep.subr.mxu0 0.0
    %183 = vmatpush1.msra.mxu0 0.0
    %184 = vmatprep.subr.mxu0 0.0
    %185 = vmatpush1.msra.mxu0 0.0
    %186 = vmatprep.subr.mxu0 0.0
    %187 = vmatpush1.msra.mxu0 0.0
    %188 = vmatprep.subr.mxu0 0.0
    %189 = vmatpush1.msra.mxu0 0.0
    %190 = vmatprep.subr.mxu0 0.0
    %191 = vmatpush1.msra.mxu0 0.0
    %192 = vmatprep.subr.mxu0 0.0
    %193 = vmatpush1.msra.mxu0 0.0
    %194 = vmatprep.subr.mxu0 0.0
    %195 = vmatpush1.msra.mxu0 0.0
    %196 = vmatprep.subr.mxu0 0.0
    %197 = vmatpush1.msra.mxu0 0.0
    %198 = vmatprep.subr.mxu0 0.0
    %199 = vmatpush1.msra.mxu0 0.0
    %200 = vmatprep.subr.mxu0 0.0
    %201 = vmatpush1.msra.mxu0 0.0
    %202 = vmatprep.subr.mxu0 0.0
    %203 = vmatpush1.msra.mxu0 0.0
    %204 = vmatprep.subr.mxu0 0.0
    %205 = vmatpush1.msra.mxu0 0.0
    %206 = vmatprep.subr.mxu0 0.0
    %207 = vmatpush1.msra.mxu0 0.0
    %208 = vmatprep.subr.mxu0 0.0
    %209 = vmatpush1.msra.mxu0 0.0
    %210 = vmatprep.subr.mxu0 0.0
    %211 = vmatpush1.msra.mxu0 0.0
    %212 = vmatprep.subr.mxu0 0.0
    %213 = vmatpush1.msra.mxu0 0.0
    %214 = vmatprep.subr.mxu0 0.0
    %215 = vmatpush1.msra.mxu0 0.0
    %216 = vmatprep.mubr.f32.mxu0 0.0
    %217 = vmatmul.mubr.f32.gmra.mrb[0].mxu0 %v143
    %v218 = vpop.f32.mrb[0].mxu0
    %v219 = vadd.f32 %v139, %v218
    %v220 = vpop.f32.mrb[0].mxu0
    %221 = vmatprep.mubr.f32.mxu0 0.0
    %222 = vmatmul.mubr.f32.gmra.mrb[0].mxu0 %v146
    %v223 = vpop.f32.mrb[0].mxu0
    %v224 = vadd.f32 %v139, %v223
    %v225 = vpop.f32.mrb[0].mxu0
    %226 = vdwg.mxu0
    %v227 = vlaneseq
    %v228 = vand.u32 %v227, 127
    %vm229 = vcmp.lt.s32.totalorder %v228, 32
    %v230 = vtanh.pop %v219
    %v231 = vtanh.pop %v224
    %v232 = vmax.f32 %v219, 0.0
    %v233 = vmax.f32 %v224, 0.0
    %v234 = vsel %vm229, %v230, %v232
    %v235 = vsel %vm229, %v231, %v233
    %v237 = vlaneseq
    %v238 = vshrl.u32 %v237, 7
    %v239 = vsub.s32 0, %v238
    %v240 = vrot.slane %v110, %v239
    %vm242 = vcmask 523264
    %v244 = vsel %vm242, %v234, 0
    %v247 = vsel %vm242, %v235, 0
    %249 = vmatprep.subr.mxu0 0.0
    %250 = vmatpush1.msra.mxu0 %v93
    %251 = vmatprep.subr.mxu0 0.0
    %252 = vmatpush1.msra.mxu0 %v94
    %253 = vmatprep.subr.mxu0 0.0
    %254 = vmatpush1.msra.mxu0 %v95
    %255 = vmatprep.subr.mxu0 0.0
    %256 = vmatpush1.msra.mxu0 %v96
    %257 = vmatprep.subr.mxu0 0.0
    %258 = vmatpush1.msra.mxu0 %v97
    %259 = vmatprep.subr.mxu0 0.0
    %260 = vmatpush1.msra.mxu0 %v98
    %261 = vmatprep.subr.mxu0 0.0
    %262 = vmatpush1.msra.mxu0 %v99
    %263 = vmatprep.subr.mxu0 0.0
    %264 = vmatpush1.msra.mxu0 %v100
    %265 = vmatprep.subr.mxu0 0.0
    %266 = vmatpush1.msra.mxu0 0.0
    %267 = vmatprep.subr.mxu0 0.0
    %268 = vmatpush1.msra.mxu0 0.0
    %269 = vmatprep.subr.mxu0 0.0
    %270 = vmatpush1.msra.mxu0 0.0
    %271 = vmatprep.subr.mxu0 0.0
    %272 = vmatpush1.msra.mxu0 0.0
    %273 = vmatprep.subr.mxu0 0.0
    %274 = vmatpush1.msra.mxu0 0.0
    %275 = vmatprep.subr.mxu0 0.0
    %276 = vmatpush1.msra.mxu0 0.0
    %277 = vmatprep.subr.mxu0 0.0
    %278 = vmatpush1.msra.mxu0 0.0
    %279 = vmatprep.subr.mxu0 0.0
    %280 = vmatpush1.msra.mxu0 0.0
    %281 = vmatprep.subr.mxu0 0.0
    %282 = vmatpush1.msra.mxu0 0.0
    %283 = vmatprep.subr.mxu0 0.0
    %284 = vmatpush1.msra.mxu0 0.0
    %285 = vmatprep.subr.mxu0 0.0
    %286 = vmatpush1.msra.mxu0 0.0
    %287 = vmatprep.subr.mxu0 0.0
    %288 = vmatpush1.msra.mxu0 0.0
    %289 = vmatprep.subr.mxu0 0.0
    %290 = vmatpush1.msra.mxu0 0.0
    %291 = vmatprep.subr.mxu0 0.0
    %292 = vmatpush1.msra.mxu0 0.0
    %293 = vmatprep.subr.mxu0 0.0
    %294 = vmatpush1.msra.mxu0 0.0
    %295 = vmatprep.subr.mxu0 0.0
    %296 = vmatpush1.msra.mxu0 0.0
    %297 = vmatprep.subr.mxu0 0.0
    %298 = vmatpush1.msra.mxu0 0.0
    %299 = vmatprep.subr.mxu0 0.0
    %300 = vmatpush1.msra.mxu0 0.0
    %301 = vmatprep.subr.mxu0 0.0
    %302 = vmatpush1.msra.mxu0 0.0
    %303 = vmatprep.subr.mxu0 0.0
    %304 = vmatpush1.msra.mxu0 0.0
    %305 = vmatprep.subr.mxu0 0.0
    %306 = vmatpush1.msra.mxu0 0.0
    %307 = vmatprep.subr.mxu0 0.0
    %308 = vmatpush1.msra.mxu0 0.0
    %309 = vmatprep.subr.mxu0 0.0
    %310 = vmatpush1.msra.mxu0 0.0
    %311 = vmatprep.subr.mxu0 0.0
    %312 = vmatpush1.msra.mxu0 0.0
    %313 = vmatprep.mubr.f32.mxu0 0.0
    %314 = vmatmul.mubr.f32.gmra.mrb[0].mxu0 %v244
    %v315 = vpop.f32.mrb[0].mxu0
    %v316 = vadd.f32 %v240, %v315
    %v317 = vpop.f32.mrb[0].mxu0
    %318 = vmatprep.mubr.f32.mxu0 0.0
    %319 = vmatmul.mubr.f32.gmra.mrb[0].mxu0 %v247
    %v320 = vpop.f32.mrb[0].mxu0
    %v321 = vadd.f32 %v240, %v320
    %v322 = vpop.f32.mrb[0].mxu0
    %323 = vdwg.mxu0
    %v324 = vtanh.pop %v316
    %v325 = vtanh.pop %v321
    %v326 = vmax.f32 %v316, 0.0
    %v327 = vmax.f32 %v321, 0.0
    %v328 = vsel %vm229, %v324, %v326
    %v329 = vsel %vm229, %v325, %v327
    %v331 = vlaneseq
    %v332 = vshrl.u32 %v331, 7
    %v333 = vsub.s32 0, %v332
    %v334 = vrot.slane %v111, %v333
    %v337 = vsel %vm242, %v328, 0
    %v340 = vsel %vm242, %v329, 0
    %342 = vmatprep.subr.mxu0 0.0
    %343 = vmatpush1.msra.mxu0 %v101
    %344 = vmatprep.subr.mxu0 0.0
    %345 = vmatpush1.msra.mxu0 %v102
    %346 = vmatprep.subr.mxu0 0.0
    %347 = vmatpush1.msra.mxu0 %v103
    %348 = vmatprep.subr.mxu0 0.0
    %349 = vmatpush1.msra.mxu0 %v104
    %350 = vmatprep.subr.mxu0 0.0
    %351 = vmatpush1.msra.mxu0 %v105
    %352 = vmatprep.subr.mxu0 0.0
    %353 = vmatpush1.msra.mxu0 %v106
    %354 = vmatprep.subr.mxu0 0.0
    %355 = vmatpush1.msra.mxu0 %v107
    %356 = vmatprep.subr.mxu0 0.0
    %357 = vmatpush1.msra.mxu0 %v108
    %358 = vmatprep.subr.mxu0 0.0
    %359 = vmatpush1.msra.mxu0 0.0
    %360 = vmatprep.subr.mxu0 0.0
    %361 = vmatpush1.msra.mxu0 0.0
    %362 = vmatprep.subr.mxu0 0.0
    %363 = vmatpush1.msra.mxu0 0.0
    %364 = vmatprep.subr.mxu0 0.0
    %365 = vmatpush1.msra.mxu0 0.0
    %366 = vmatprep.subr.mxu0 0.0
    %367 = vmatpush1.msra.mxu0 0.0
    %368 = vmatprep.subr.mxu0 0.0
    %369 = vmatpush1.msra.mxu0 0.0
    %370 = vmatprep.subr.mxu0 0.0
    %371 = vmatpush1.msra.mxu0 0.0
    %372 = vmatprep.subr.mxu0 0.0
    %373 = vmatpush1.msra.mxu0 0.0
    %374 = vmatprep.subr.mxu0 0.0
    %375 = vmatpush1.msra.mxu0 0.0
    %376 = vmatprep.subr.mxu0 0.0
    %377 = vmatpush1.msra.mxu0 0.0
    %378 = vmatprep.subr.mxu0 0.0
    %379 = vmatpush1.msra.mxu0 0.0
    %380 = vmatprep.subr.mxu0 0.0
    %381 = vmatpush1.msra.mxu0 0.0
    %382 = vmatprep.subr.mxu0 0.0
    %383 = vmatpush1.msra.mxu0 0.0
    %384 = vmatprep.subr.mxu0 0.0
    %385 = vmatpush1.msra.mxu0 0.0
    %386 = vmatprep.subr.mxu0 0.0
    %387 = vmatpush1.msra.mxu0 0.0
    %388 = vmatprep.subr.mxu0 0.0
    %389 = vmatpush1.msra.mxu0 0.0
    %390 = vmatprep.subr.mxu0 0.0
    %391 = vmatpush1.msra.mxu0 0.0
    %392 = vmatprep.subr.mxu0 0.0
    %393 = vmatpush1.msra.mxu0 0.0
    %394 = vmatprep.subr.mxu0 0.0
    %395 = vmatpush1.msra.mxu0 0.0
    %396 = vmatprep.subr.mxu0 0.0
    %397 = vmatpush1.msra.mxu0 0.0
    %398 = vmatprep.subr.mxu0 0.0
    %399 = vmatpush1.msra.mxu0 0.0
    %400 = vmatprep.subr.mxu0 0.0
    %401 = vmatpush1.msra.mxu0 0.0
    %402 = vmatprep.subr.mxu0 0.0
    %403 = vmatpush1.msra.mxu0 0.0
    %404 = vmatprep.subr.mxu0 0.0
    %405 = vmatpush1.msra.mxu0 0.0
    %406 = vmatprep.mubr.f32.mxu0 0.0
    %407 = vmatmul.mubr.f32.gmra.mrb[0].mxu0 %v337
    %v408 = vpop.f32.mrb[0].mxu0
    %v409 = vadd.f32 %v334, %v408
    %v410 = vpop.f32.mrb[0].mxu0
    %411 = vmatprep.mubr.f32.mxu0 0.0
    %412 = vmatmul.mubr.f32.gmra.mrb[0].mxu0 %v340
    %v413 = vpop.f32.mrb[0].mxu0
    %v414 = vadd.f32 %v334, %v413
    %v415 = vpop.f32.mrb[0].mxu0
    %416 = vdwg.mxu0
    %v417 = vsub.f32 1.0, %v89
    %420 = vrot.lane.b32.xlu0 %v409, 124
    %v421 = vpop.permute.xlu0 %420
    %422 = vrot.lane.b32.xlu0 %v414, 124
    %v423 = vpop.permute.xlu0 %422
    %v426 = vsub.f32 %v87, %v421
    %v427 = vsub.f32 %v88, %v423
    %v429 = vlaneseq
    %v430 = vshrl.u32 %v429, 7
    %v431 = vsub.s32 0, %v430
    %v432 = vrot.slane %v417, %v431
    %v434 = vmul.f32 %v432, %v426
    %v435 = vmul.f32 %v432, %v427
    %v436 = vsub.f32 0.0, %v409
    %v437 = vsub.f32 0.0, %v414
    %v438 = vmul.f32 %v436, 1.442695
    %v439 = vpow.pop %v438
    %v440 = vmul.f32 %v437, 1.442695
    %v441 = vpow.pop %v440
    %v442 = vmul.f32 %v434, %v439
    %v443 = vmul.f32 %v435, %v441
    %v444 = vadd.f32 %v120, %v442
    %v445 = vadd.f32 %v121, %v443
    %v446 = vsub.f32 0.0, %v417
    %v448 = vlaneseq
    %v449 = vshrl.u32 %v448, 7
    %v450 = vsub.s32 0, %v449
    %v451 = vrot.slane %v446, %v450
    %v453 = vmul.f32 %v451, %v409
    %v454 = vmul.f32 %v451, %v414
    %v457 = vcombine.high %v453, %v453
    %v459 = vunpack.c.l.s4 1983009808
    %v460 = vunpack.c.0.s8 %v459
    %v461 = vlaneseq
    %v462 = vshrl.u32 %v461, 7
    %v463 = vsub.s32 %v460, %v462
    %v464 = vrot.slane %v453, %v463
    %v466 = vunpack.c.l.s4 1983009808
    %v467 = vunpack.c.0.s8 %v466
    %v468 = vlaneseq
    %v469 = vshrl.u32 %v468, 7
    %v470 = vsub.s32 %v467, %v469
    %v471 = vrot.slane %v457, %v470
    %v472 = vcombine.high %v464, %v464
    %v473 = vcombine.high %v471, %v471
    %v474 = vcombine.high %v454, %v454
    %v476 = vunpack.c.l.s4 1983009808
    %v477 = vunpack.c.0.s8 %v476
    %v478 = vlaneseq
    %v479 = vshrl.u32 %v478, 7
    %v480 = vsub.s32 %v477, %v479
    %v481 = vrot.slane %v454, %v480
    %v483 = vunpack.c.l.s4 1983009808
    %v484 = vunpack.c.0.s8 %v483
    %v485 = vlaneseq
    %v486 = vshrl.u32 %v485, 7
    %v487 = vsub.s32 %v484, %v486
    %v488 = vrot.slane %v474, %v487
    %v489 = vcombine.high %v481, %v481
    %v490 = vcombine.high %v488, %v488
    %v499 = vadd.f32 %v464, 0.0
    %v500 = vadd.f32 %v472, 0.0
    %v501 = vadd.f32 %v471, 0.0
    %v502 = vadd.f32 %v473, 0.0
    %v503 = vadd.f32 %v481, 0.0
    %v504 = vadd.f32 %v489, 0.0
    %v505 = vadd.f32 %v488, 0.0
    %v506 = vadd.f32 %v490, 0.0
    %v509 = vcombine.high %v444, %v444
    %v511 = vunpack.c.l.s4 1983009808
    %v512 = vunpack.c.0.s8 %v511
    %v513 = vlaneseq
    %v514 = vshrl.u32 %v513, 7
    %v515 = vsub.s32 %v512, %v514
    %v516 = vrot.slane %v444, %v515
    %v518 = vunpack.c.l.s4 1983009808
    %v519 = vunpack.c.0.s8 %v518
    %v520 = vlaneseq
    %v521 = vshrl.u32 %v520, 7
    %v522 = vsub.s32 %v519, %v521
    %v523 = vrot.slane %v509, %v522
    %v524 = vcombine.high %v516, %v516
    %v525 = vcombine.high %v523, %v523
    %v526 = vcombine.high %v445, %v445
    %v528 = vunpack.c.l.s4 1983009808
    %v529 = vunpack.c.0.s8 %v528
    %v530 = vlaneseq
    %v531 = vshrl.u32 %v530, 7
    %v532 = vsub.s32 %v529, %v531
    %v533 = vrot.slane %v445, %v532
    %v535 = vunpack.c.l.s4 1983009808
    %v536 = vunpack.c.0.s8 %v535
    %v537 = vlaneseq
    %v538 = vshrl.u32 %v537, 7
    %v539 = vsub.s32 %v536, %v538
    %v540 = vrot.slane %v526, %v539
    %v541 = vcombine.high %v533, %v533
    %v542 = vcombine.high %v540, %v540
    %vm551 = vcmask 25600
    %v552 = vsel %vm551, %v516, 0.0
    %v553 = vrot.slane %v552, 4
    %v554 = vadd.f32 %v552, %v553
    %v555 = vrot.slane %v554, 2
    %v556 = vadd.f32 %v554, %v555
    %v557 = vrot.slane %v556, 1
    %v558 = vadd.f32 %v556, %v557
    %v559 = vsel %vm551, %v524, 0.0
    %v560 = vrot.slane %v559, 4
    %v561 = vadd.f32 %v559, %v560
    %v562 = vrot.slane %v561, 2
    %v563 = vadd.f32 %v561, %v562
    %v564 = vrot.slane %v563, 1
    %v565 = vadd.f32 %v563, %v564
    %v566 = vsel %vm551, %v523, 0.0
    %v567 = vrot.slane %v566, 4
    %v568 = vadd.f32 %v566, %v567
    %v569 = vrot.slane %v568, 2
    %v570 = vadd.f32 %v568, %v569
    %v571 = vrot.slane %v570, 1
    %v572 = vadd.f32 %v570, %v571
    %v573 = vsel %vm551, %v525, 0.0
    %v574 = vrot.slane %v573, 4
    %v575 = vadd.f32 %v573, %v574
    %v576 = vrot.slane %v575, 2
    %v577 = vadd.f32 %v575, %v576
    %v578 = vrot.slane %v577, 1
    %v579 = vadd.f32 %v577, %v578
    %v580 = vsel %vm551, %v533, 0.0
    %v581 = vrot.slane %v580, 4
    %v582 = vadd.f32 %v580, %v581
    %v583 = vrot.slane %v582, 2
    %v584 = vadd.f32 %v582, %v583
    %v585 = vrot.slane %v584, 1
    %v586 = vadd.f32 %v584, %v585
    %v587 = vsel %vm551, %v541, 0.0
    %v588 = vrot.slane %v587, 4
    %v589 = vadd.f32 %v587, %v588
    %v590 = vrot.slane %v589, 2
    %v591 = vadd.f32 %v589, %v590
    %v592 = vrot.slane %v591, 1
    %v593 = vadd.f32 %v591, %v592
    %v594 = vsel %vm551, %v540, 0.0
    %v595 = vrot.slane %v594, 4
    %v596 = vadd.f32 %v594, %v595
    %v597 = vrot.slane %v596, 2
    %v598 = vadd.f32 %v596, %v597
    %v599 = vrot.slane %v598, 1
    %v600 = vadd.f32 %v598, %v599
    %v601 = vsel %vm551, %v542, 0.0
    %v602 = vrot.slane %v601, 4
    %v603 = vadd.f32 %v601, %v602
    %v604 = vrot.slane %v603, 2
    %v605 = vadd.f32 %v603, %v604
    %v606 = vrot.slane %v605, 1
    %v607 = vadd.f32 %v605, %v606
    %v608 = vrcp.pop 2.0
    %v609 = vmul.f32 %v558, %v608
    %v610 = vmul.f32 %v565, %v608
    %v611 = vmul.f32 %v572, %v608
    %v612 = vmul.f32 %v579, %v608
    %v613 = vmul.f32 %v586, %v608
    %v614 = vmul.f32 %v593, %v608
    %v615 = vmul.f32 %v600, %v608
    %v616 = vmul.f32 %v607, %v608
    %v617 = vsub.f32 %v516, %v609
    %v618 = vsub.f32 %v524, %v610
    %v619 = vsub.f32 %v523, %v611
    %v620 = vsub.f32 %v525, %v612
    %v621 = vsub.f32 %v533, %v613
    %v622 = vsub.f32 %v541, %v614
    %v623 = vsub.f32 %v540, %v615
    %v624 = vsub.f32 %v542, %v616
    %v625 = vmul.f32 %v617, %v617
    %v626 = vmul.f32 %v618, %v618
    %v627 = vmul.f32 %v619, %v619
    %v628 = vmul.f32 %v620, %v620
    %v629 = vmul.f32 %v621, %v621
    %v630 = vmul.f32 %v622, %v622
    %v631 = vmul.f32 %v623, %v623
    %v632 = vmul.f32 %v624, %v624
    %v633 = vsel %vm551, %v625, 0.0
    %v634 = vrot.slane %v633, 4
    %v635 = vadd.f32 %v633, %v634
    %v636 = vrot.slane %v635, 2
    %v637 = vadd.f32 %v635, %v636
    %v638 = vrot.slane %v637, 1
    %v639 = vadd.f32 %v637, %v638
    %v640 = vsel %vm551, %v626, 0.0
    %v641 = vrot.slane %v640, 4
    %v642 = vadd.f32 %v640, %v641
    %v643 = vrot.slane %v642, 2
    %v644 = vadd.f32 %v642, %v643
    %v645 = vrot.slane %v644, 1
    %v646 = vadd.f32 %v644, %v645
    %v647 = vsel %vm551, %v627, 0.0
    %v648 = vrot.slane %v647, 4
    %v649 = vadd.f32 %v647, %v648
    %v650 = vrot.slane %v649, 2
    %v651 = vadd.f32 %v649, %v650
    %v652 = vrot.slane %v651, 1
    %v653 = vadd.f32 %v651, %v652
    %v654 = vsel %vm551, %v628, 0.0
    %v655 = vrot.slane %v654, 4
    %v656 = vadd.f32 %v654, %v655
    %v657 = vrot.slane %v656, 2
    %v658 = vadd.f32 %v656, %v657
    %v659 = vrot.slane %v658, 1
    %v660 = vadd.f32 %v658, %v659
    %v661 = vsel %vm551, %v629, 0.0
    %v662 = vrot.slane %v661, 4
    %v663 = vadd.f32 %v661, %v662
    %v664 = vrot.slane %v663, 2
    %v665 = vadd.f32 %v663, %v664
    %v666 = vrot.slane %v665, 1
    %v667 = vadd.f32 %v665, %v666
    %v668 = vsel %vm551, %v630, 0.0
    %v669 = vrot.slane %v668, 4
    %v670 = vadd.f32 %v668, %v669
    %v671 = vrot.slane %v670, 2
    %v672 = vadd.f32 %v670, %v671
    %v673 = vrot.slane %v672, 1
    %v674 = vadd.f32 %v672, %v673
    %v675 = vsel %vm551, %v631, 0.0
    %v676 = vrot.slane %v675, 4
    %v677 = vadd.f32 %v675, %v676
    %v678 = vrot.slane %v677, 2
    %v679 = vadd.f32 %v677, %v678
    %v680 = vrot.slane %v679, 1
    %v681 = vadd.f32 %v679, %v680
    %v682 = vsel %vm551, %v632, 0.0
    %v683 = vrot.slane %v682, 4
    %v684 = vadd.f32 %v682, %v683
    %v685 = vrot.slane %v684, 2
    %v686 = vadd.f32 %v684, %v685
    %v687 = vrot.slane %v686, 1
    %v688 = vadd.f32 %v686, %v687
    %v689 = vmul.f32 %v112, 1.442695
    %v690 = vpow.pop %v689
    %v692 = vlaneseq
    %v693 = vshrl.u32 %v692, 7
    %v694 = vsub.s32 0, %v693
    %v695 = vrot.slane %v690, %v694
    %v697 = vmul.f32 %v695, %v617
    %v698 = vmul.f32 %v695, %v618
    %v699 = vmul.f32 %v695, %v619
    %v700 = vmul.f32 %v695, %v620
    %v701 = vmul.f32 %v695, %v621
    %v702 = vmul.f32 %v695, %v622
    %v703 = vmul.f32 %v695, %v623
    %v704 = vmul.f32 %v695, %v624
    %v705 = vadd.f32 %v639, 1e-05
    %v706 = vadd.f32 %v646, 1e-05
    %v707 = vadd.f32 %v653, 1e-05
    %v708 = vadd.f32 %v660, 1e-05
    %v709 = vadd.f32 %v667, 1e-05
    %v710 = vadd.f32 %v674, 1e-05
    %v711 = vadd.f32 %v681, 1e-05
    %v712 = vadd.f32 %v688, 1e-05
    %v713 = vrsqrt.pop %v705
    %v714 = vrsqrt.pop %v706
    %v715 = vrsqrt.pop %v707
    %v716 = vrsqrt.pop %v708
    %v717 = vrsqrt.pop %v709
    %v718 = vrsqrt.pop %v710
    %v719 = vrsqrt.pop %v711
    %v720 = vrsqrt.pop %v712
    %v721 = vmul.f32 %v697, %v713
    %v722 = vmul.f32 %v698, %v714
    %v723 = vmul.f32 %v699, %v715
    %v724 = vmul.f32 %v700, %v716
    %v725 = vmul.f32 %v701, %v717
    %v726 = vmul.f32 %v702, %v718
    %v727 = vmul.f32 %v703, %v719
    %v728 = vmul.f32 %v704, %v720
    %v730 = vlaneseq
    %v731 = vshrl.u32 %v730, 7
    %v732 = vsub.s32 0, %v731
    %v733 = vrot.slane %v113, %v732
    %v735 = vadd.f32 %v721, %v733
    %v736 = vadd.f32 %v722, %v733
    %v737 = vadd.f32 %v723, %v733
    %v738 = vadd.f32 %v724, %v733
    %v739 = vadd.f32 %v725, %v733
    %v740 = vadd.f32 %v726, %v733
    %v741 = vadd.f32 %v727, %v733
    %v742 = vadd.f32 %v728, %v733
    %v743 = vlog2.pop %v705
    %v744 = vmul.f32 %v743, 0.6931472
    %v745 = vlog2.pop %v706
    %v746 = vmul.f32 %v745, 0.6931472
    %v747 = vlog2.pop %v707
    %v748 = vmul.f32 %v747, 0.6931472
    %v749 = vlog2.pop %v708
    %v750 = vmul.f32 %v749, 0.6931472
    %v751 = vlog2.pop %v709
    %v752 = vmul.f32 %v751, 0.6931472
    %v753 = vlog2.pop %v710
    %v754 = vmul.f32 %v753, 0.6931472
    %v755 = vlog2.pop %v711
    %v756 = vmul.f32 %v755, 0.6931472
    %v757 = vlog2.pop %v712
    %v758 = vmul.f32 %v757, 0.6931472
    %v759 = vmul.f32 %v744, 0.5
    %v760 = vmul.f32 %v746, 0.5
    %v761 = vmul.f32 %v748, 0.5
    %v762 = vmul.f32 %v750, 0.5
    %v763 = vmul.f32 %v752, 0.5
    %v764 = vmul.f32 %v754, 0.5
    %v765 = vmul.f32 %v756, 0.5
    %v766 = vmul.f32 %v758, 0.5
    %v767 = vsub.f32 %v112, %v759
    %v768 = vsub.f32 %v112, %v760
    %v769 = vsub.f32 %v112, %v761
    %v770 = vsub.f32 %v112, %v762
    %v771 = vsub.f32 %v112, %v763
    %v772 = vsub.f32 %v112, %v764
    %v773 = vsub.f32 %v112, %v765
    %v774 = vsub.f32 %v112, %v766
    %v783 = vlaneseq
    %v784 = vshrl.u32 %v783, 7
    %v785 = vsub.s32 0, %v784
    %v786 = vrot.slane %v767, %v785
    %v787 = vlaneseq
    %v788 = vshrl.u32 %v787, 7
    %v789 = vsub.s32 0, %v788
    %v790 = vrot.slane %v768, %v789
    %v791 = vlaneseq
    %v792 = vshrl.u32 %v791, 7
    %v793 = vsub.s32 0, %v792
    %v794 = vrot.slane %v769, %v793
    %v795 = vlaneseq
    %v796 = vshrl.u32 %v795, 7
    %v797 = vsub.s32 0, %v796
    %v798 = vrot.slane %v770, %v797
    %v799 = vlaneseq
    %v800 = vshrl.u32 %v799, 7
    %v801 = vsub.s32 0, %v800
    %v802 = vrot.slane %v771, %v801
    %v803 = vlaneseq
    %v804 = vshrl.u32 %v803, 7
    %v805 = vsub.s32 0, %v804
    %v806 = vrot.slane %v772, %v805
    %v807 = vlaneseq
    %v808 = vshrl.u32 %v807, 7
    %v809 = vsub.s32 0, %v808
    %v810 = vrot.slane %v773, %v809
    %v811 = vlaneseq
    %v812 = vshrl.u32 %v811, 7
    %v813 = vsub.s32 0, %v812
    %v814 = vrot.slane %v774, %v813
    %v823 = vadd.f32 %v499, %v786
    %v824 = vadd.f32 %v500, %v790
    %v825 = vadd.f32 %v501, %v794
    %v826 = vadd.f32 %v502, %v798
    %v827 = vadd.f32 %v503, %v802
    %v828 = vadd.f32 %v504, %v806
    %v829 = vadd.f32 %v505, %v810
    %v830 = vadd.f32 %v506, %v814
    %v831 = vld [vmem:[%s12] sm:$0x1]
    %v832 = vld [vmem:[%s13] sm:$0xff]
    %v833 = vld [vmem:[%s13 + $0x8] sm:$0xff]
    %v834 = vld [vmem:[%s13 + $0x10] sm:$0xf]
    %v835 = vld [vmem:[%s15] sm:$0xff]
    %v836 = vld [vmem:[%s15 + $0x8] sm:$0xff]
    %v837 = vld [vmem:[%s15 + $0x10] sm:$0xff]
    %v838 = vld [vmem:[%s15 + $0x18] sm:$0xff]
    %v839 = vld [vmem:[%s15 + $0x20] sm:$0xff]
    %v840 = vld [vmem:[%s15 + $0x28] sm:$0xff]
    %v841 = vld [vmem:[%s15 + $0x30] sm:$0xff]
    %v842 = vld [vmem:[%s15 + $0x38] sm:$0xff]
    %v843 = vld [vmem:[%s17] sm:$0xff]
    %v844 = vld [vmem:[%s17 + $0x8] sm:$0xff]
    %v845 = vld [vmem:[%s17 + $0x10] sm:$0xff]
    %v846 = vld [vmem:[%s17 + $0x18] sm:$0xff]
    %v847 = vld [vmem:[%s17 + $0x20] sm:$0xff]
    %v848 = vld [vmem:[%s17 + $0x28] sm:$0xff]
    %v849 = vld [vmem:[%s17 + $0x30] sm:$0xff]
    %v850 = vld [vmem:[%s17 + $0x38] sm:$0xff]
    %v851 = vld [vmem:[%s14] sm:$0x1]
    %v852 = vld [vmem:[%s16] sm:$0x1]
    %v853 = vld [vmem:[%s18] sm:$0x1]
    %v854 = vld [vmem:[%s19] sm:$0x1]
    %v855 = vld [vmem:[%s20] sm:$0x1]
    %v857 = vlaneseq
    %v858 = vshrl.u32 %v857, 7
    %v859 = vsub.s32 0, %v858
    %v860 = vrot.slane %v831, %v859
    %v861 = vcombine.high %v860, %v860
    %v863 = vunpack.c.l.s4 1983009808
    %v864 = vunpack.c.0.s8 %v863
    %v865 = vlaneseq
    %v866 = vshrl.u32 %v865, 7
    %v867 = vsub.s32 %v864, %v866
    %v868 = vrot.slane %v860, %v867
    %v870 = vunpack.c.l.s4 1983009808
    %v871 = vunpack.c.0.s8 %v870
    %v872 = vlaneseq
    %v873 = vshrl.u32 %v872, 7
    %v874 = vsub.s32 %v871, %v873
    %v875 = vrot.slane %v861, %v874
    %v876 = vcombine.high %v868, %v868
    %v877 = vcombine.high %v875, %v875
    %v882 = vmul.f32 %v735, %v868
    %v883 = vmul.f32 %v736, %v876
    %v884 = vmul.f32 %v737, %v875
    %v885 = vmul.f32 %v738, %v877
    %v886 = vmul.f32 %v739, %v868
    %v887 = vmul.f32 %v740, %v876
    %v888 = vmul.f32 %v741, %v875
    %v889 = vmul.f32 %v742, %v877
    %v898 = vcombine.low %v882, %v883
    %v899 = vcombine.low %v884, %v885
    %v901 = vunpack.c.l.s4 1983009808
    %v902 = vunpack.c.0.s8 %v901
    %v903 = vlaneseq
    %v904 = vshrl.u32 %v903, 7
    %v905 = vsub.s32 %v902, %v904
    %v906 = vrot.slane %v898, %v905
    %v908 = vunpack.c.l.s4 1983009808
    %v909 = vunpack.c.0.s8 %v908
    %v910 = vlaneseq
    %v911 = vshrl.u32 %v910, 7
    %v912 = vsub.s32 %v909, %v911
    %v913 = vrot.slane %v899, %v912
    %v914 = vcombine.low %v906, %v913
    %v915 = vcombine.low %v886, %v887
    %v916 = vcombine.low %v888, %v889
    %v918 = vunpack.c.l.s4 1983009808
    %v919 = vunpack.c.0.s8 %v918
    %v920 = vlaneseq
    %v921 = vshrl.u32 %v920, 7
    %v922 = vsub.s32 %v919, %v921
    %v923 = vrot.slane %v915, %v922
    %v925 = vunpack.c.l.s4 1983009808
    %v926 = vunpack.c.0.s8 %v925
    %v927 = vlaneseq
    %v928 = vshrl.u32 %v927, 7
    %v929 = vsub.s32 %v926, %v928
    %v930 = vrot.slane %v916, %v929
    %v931 = vcombine.low %v923, %v930
    %932 = vrot.lane.b32.xlu0 %v914, 16
    %v933 = vpop.permute.xlu0 %932
    %934 = vrot.lane.b32.xlu0 %v931, 16
    %v935 = vpop.permute.xlu0 %934
    %938 = vst.msk [vmem:[#allocation2] sm:$0xff] %vm130, %v933
    %939 = vst.msk [vmem:[#allocation2 + $0x8] sm:$0xff] %vm130, %v935
    %v940 = vld [vmem:[#allocation2] sm:$0xff]
    %v941 = vld [vmem:[#allocation2 + $0x8] sm:$0xff]
    %v943 = vlaneseq
    %v944 = vshrl.u32 %v943, 7
    %v945 = vsub.s32 0, %v944
    %v946 = vrot.slane %v851, %v945
    %v949 = vsel %vm141, %v940, 0
    %v952 = vsel %vm141, %v941, 0
    %v955 = vsel %vm148, %v834, 0
    %957 = vmatprep.subr.mxu0 0.0
    %958 = vmatpush1.msra.mxu0 %v832
    %959 = vmatprep.subr.mxu0 0.0
    %960 = vmatpush1.msra.mxu0 %v833
    %961 = vmatprep.subr.mxu0 0.0
    %962 = vmatpush1.msra.mxu0 %v955
    %963 = vmatprep.subr.mxu0 0.0
    %964 = vmatpush1.msra.mxu0 0.0
    %965 = vmatprep.subr.mxu0 0.0
    %966 = vmatpush1.msra.mxu0 0.0
    %967 = vmatprep.subr.mxu0 0.0
    %968 = vmatpush1.msra.mxu0 0.0
    %969 = vmatprep.subr.mxu0 0.0
    %970 = vmatpush1.msra.mxu0 0.0
    %971 = vmatprep.subr.mxu0 0.0
    %972 = vmatpush1.msra.mxu0 0.0
    %973 = vmatprep.subr.mxu0 0.0
    %974 = vmatpush1.msra.mxu0 0.0
    %975 = vmatprep.subr.mxu0 0.0
    %976 = vmatpush1.msra.mxu0 0.0
    %977 = vmatprep.subr.mxu0 0.0
    %978 = vmatpush1.msra.mxu0 0.0
    %979 = vmatprep.subr.mxu0 0.0
    %980 = vmatpush1.msra.mxu0 0.0
    %981 = vmatprep.subr.mxu0 0.0
    %982 = vmatpush1.msra.mxu0 0.0
    %983 = vmatprep.subr.mxu0 0.0
    %984 = vmatpush1.msra.mxu0 0.0
    %985 = vmatprep.subr.mxu0 0.0
    %986 = vmatpush1.msra.mxu0 0.0
    %987 = vmatprep.subr.mxu0 0.0
    %988 = vmatpush1.msra.mxu0 0.0
    %989 = vmatprep.subr.mxu0 0.0
    %990 = vmatpush1.msra.mxu0 0.0
    %991 = vmatprep.subr.mxu0 0.0
    %992 = vmatpush1.msra.mxu0 0.0
    %993 = vmatprep.subr.mxu0 0.0
    %994 = vmatpush1.msra.mxu0 0.0
    %995 = vmatprep.subr.mxu0 0.0
    %996 = vmatpush1.msra.mxu0 0.0
    %997 = vmatprep.subr.mxu0 0.0
    %998 = vmatpush1.msra.mxu0 0.0
    %999 = vmatprep.subr.mxu0 0.0
    %1000 = vmatpush1.msra.mxu0 0.0
    %1001 = vmatprep.subr.mxu0 0.0
    %1002 = vmatpush1.msra.mxu0 0.0
    %1003 = vmatprep.subr.mxu0 0.0
    %1004 = vmatpush1.msra.mxu0 0.0
    %1005 = vmatprep.subr.mxu0 0.0
    %1006 = vmatpush1.msra.mxu0 0.0
    %1007 = vmatprep.subr.mxu0 0.0
    %1008 = vmatpush1.msra.mxu0 0.0
    %1009 = vmatprep.subr.mxu0 0.0
    %1010 = vmatpush1.msra.mxu0 0.0
    %1011 = vmatprep.subr.mxu0 0.0
    %1012 = vmatpush1.msra.mxu0 0.0
    %1013 = vmatprep.subr.mxu0 0.0
    %1014 = vmatpush1.msra.mxu0 0.0
    %1015 = vmatprep.subr.mxu0 0.0
    %1016 = vmatpush1.msra.mxu0 0.0
    %1017 = vmatprep.subr.mxu0 0.0
    %1018 = vmatpush1.msra.mxu0 0.0
    %1019 = vmatprep.subr.mxu0 0.0
    %1020 = vmatpush1.msra.mxu0 0.0
    %1021 = vmatprep.mubr.f32.mxu0 0.0
    %1022 = vmatmul.mubr.f32.gmra.mrb[0].mxu0 %v949
    %v1023 = vpop.f32.mrb[0].mxu0
    %v1024 = vadd.f32 %v946, %v1023
    %v1025 = vpop.f32.mrb[0].mxu0
    %1026 = vmatprep.mubr.f32.mxu0 0.0
    %1027 = vmatmul.mubr.f32.gmra.mrb[0].mxu0 %v952
    %v1028 = vpop.f32.mrb[0].mxu0
    %v1029 = vadd.f32 %v946, %v1028
    %v1030 = vpop.f32.mrb[0].mxu0
    %1031 = vdwg.mxu0
    %v1032 = vtanh.pop %v1024
    %v1033 = vtanh.pop %v1029
    %v1034 = vmax.f32 %v1024, 0.0
    %v1035 = vmax.f32 %v1029, 0.0
    %v1036 = vsel %vm229, %v1032, %v1034
    %v1037 = vsel %vm229, %v1033, %v1035
    %v1039 = vlaneseq
    %v1040 = vshrl.u32 %v1039, 7
    %v1041 = vsub.s32 0, %v1040
    %v1042 = vrot.slane %v852, %v1041
    %v1045 = vsel %vm242, %v1036, 0
    %v1048 = vsel %vm242, %v1037, 0
    %1050 = vmatprep.subr.mxu0 0.0
    %1051 = vmatpush1.msra.mxu0 %v835
    %1052 = vmatprep.subr.mxu0 0.0
    %1053 = vmatpush1.msra.mxu0 %v836
    %1054 = vmatprep.subr.mxu0 0.0
    %1055 = vmatpush1.msra.mxu0 %v837
    %1056 = vmatprep.subr.mxu0 0.0
    %1057 = vmatpush1.msra.mxu0 %v838
    %1058 = vmatprep.subr.mxu0 0.0
    %1059 = vmatpush1.msra.mxu0 %v839
    %1060 = vmatprep.subr.mxu0 0.0
    %1061 = vmatpush1.msra.mxu0 %v840
    %1062 = vmatprep.subr.mxu0 0.0
    %1063 = vmatpush1.msra.mxu0 %v841
    %1064 = vmatprep.subr.mxu0 0.0
    %1065 = vmatpush1.msra.mxu0 %v842
    %1066 = vmatprep.subr.mxu0 0.0
    %1067 = vmatpush1.msra.mxu0 0.0
    %1068 = vmatprep.subr.mxu0 0.0
    %1069 = vmatpush1.msra.mxu0 0.0
    %1070 = vmatprep.subr.mxu0 0.0
    %1071 = vmatpush1.msra.mxu0 0.0
    %1072 = vmatprep.subr.mxu0 0.0
    %1073 = vmatpush1.msra.mxu0 0.0
    %1074 = vmatprep.subr.mxu0 0.0
    %1075 = vmatpush1.msra.mxu0 0.0
    %1076 = vmatprep.subr.mxu0 0.0
    %1077 = vmatpush1.msra.mxu0 0.0
    %1078 = vmatprep.subr.mxu0 0.0
    %1079 = vmatpush1.msra.mxu0 0.0
    %1080 = vmatprep.subr.mxu0 0.0
    %1081 = vmatpush1.msra.mxu0 0.0
    %1082 = vmatprep.subr.mxu0 0.0
    %1083 = vmatpush1.msra.mxu0 0.0
    %1084 = vmatprep.subr.mxu0 0.0
    %1085 = vmatpush1.msra.mxu0 0.0
    %1086 = vmatprep.subr.mxu0 0.0
    %1087 = vmatpush1.msra.mxu0 0.0
    %1088 = vmatprep.subr.mxu0 0.0
    %1089 = vmatpush1.msra.mxu0 0.0
    %1090 = vmatprep.subr.mxu0 0.0
    %1091 = vmatpush1.msra.mxu0 0.0
    %1092 = vmatprep.subr.mxu0 0.0
    %1093 = vmatpush1.msra.mxu0 0.0
    %1094 = vmatprep.subr.mxu0 0.0
    %1095 = vmatpush1.msra.mxu0 0.0
    %1096 = vmatprep.subr.mxu0 0.0
    %1097 = vmatpush1.msra.mxu0 0.0
    %1098 = vmatprep.subr.mxu0 0.0
    %1099 = vmatpush1.msra.mxu0 0.0
    %1100 = vmatprep.subr.mxu0 0.0
    %1101 = vmatpush1.msra.mxu0 0.0
    %1102 = vmatprep.subr.mxu0 0.0
    %1103 = vmatpush1.msra.mxu0 0.0
    %1104 = vmatprep.subr.mxu0 0.0
    %1105 = vmatpush1.msra.mxu0 0.0
    %1106 = vmatprep.subr.mxu0 0.0
    %1107 = vmatpush1.msra.mxu0 0.0
    %1108 = vmatprep.subr.mxu0 0.0
    %1109 = vmatpush1.msra.mxu0 0.0
    %1110 = vmatprep.subr.mxu0 0.0
    %1111 = vmatpush1.msra.mxu0 0.0
    %1112 = vmatprep.subr.mxu0 0.0
    %1113 = vmatpush1.msra.mxu0 0.0
    %1114 = vmatprep.mubr.f32.mxu0 0.0
    %1115 = vmatmul.mubr.f32.gmra.mrb[0].mxu0 %v1045
    %v1116 = vpop.f32.mrb[0].mxu0
    %v1117 = vadd.f32 %v1042, %v1116
    %v1118 = vpop.f32.mrb[0].mxu0
    %1119 = vmatprep.mubr.f32.mxu0 0.0
    %1120 = vmatmul.mubr.f32.gmra.mrb[0].mxu0 %v1048
    %v1121 = vpop.f32.mrb[0].mxu0
    %v1122 = vadd.f32 %v1042, %v1121
    %v1123 = vpop.f32.mrb[0].mxu0
    %1124 = vdwg.mxu0
    %v1125 = vtanh.pop %v1117
    %v1126 = vtanh.pop %v1122
    %v1127 = vmax.f32 %v1117, 0.0
    %v1128 = vmax.f32 %v1122, 0.0
    %v1129 = vsel %vm229, %v1125, %v1127
    %v1130 = vsel %vm229, %v1126, %v1128
    %v1132 = vlaneseq
    %v1133 = vshrl.u32 %v1132, 7
    %v1134 = vsub.s32 0, %v1133
    %v1135 = vrot.slane %v853, %v1134
    %v1138 = vsel %vm242, %v1129, 0
    %v1141 = vsel %vm242, %v1130, 0
    %1143 = vmatprep.subr.mxu0 0.0
    %1144 = vmatpush1.msra.mxu0 %v843
    %1145 = vmatprep.subr.mxu0 0.0
    %1146 = vmatpush1.msra.mxu0 %v844
    %1147 = vmatprep.subr.mxu0 0.0
    %1148 = vmatpush1.msra.mxu0 %v845
    %1149 = vmatprep.subr.mxu0 0.0
    %1150 = vmatpush1.msra.mxu0 %v846
    %1151 = vmatprep.subr.mxu0 0.0
    %1152 = vmatpush1.msra.mxu0 %v847
    %1153 = vmatprep.subr.mxu0 0.0
    %1154 = vmatpush1.msra.mxu0 %v848
    %1155 = vmatprep.subr.mxu0 0.0
    %1156 = vmatpush1.msra.mxu0 %v849
    %1157 = vmatprep.subr.mxu0 0.0
    %1158 = vmatpush1.msra.mxu0 %v850
    %1159 = vmatprep.subr.mxu0 0.0
    %1160 = vmatpush1.msra.mxu0 0.0
    %1161 = vmatprep.subr.mxu0 0.0
    %1162 = vmatpush1.msra.mxu0 0.0
    %1163 = vmatprep.subr.mxu0 0.0
    %1164 = vmatpush1.msra.mxu0 0.0
    %1165 = vmatprep.subr.mxu0 0.0
    %1166 = vmatpush1.msra.mxu0 0.0
    %1167 = vmatprep.subr.mxu0 0.0
    %1168 = vmatpush1.msra.mxu0 0.0
    %1169 = vmatprep.subr.mxu0 0.0
    %1170 = vmatpush1.msra.mxu0 0.0
    %1171 = vmatprep.subr.mxu0 0.0
    %1172 = vmatpush1.msra.mxu0 0.0
    %1173 = vmatprep.subr.mxu0 0.0
    %1174 = vmatpush1.msra.mxu0 0.0
    %1175 = vmatprep.subr.mxu0 0.0
    %1176 = vmatpush1.msra.mxu0 0.0
    %1177 = vmatprep.subr.mxu0 0.0
    %1178 = vmatpush1.msra.mxu0 0.0
    %1179 = vmatprep.subr.mxu0 0.0
    %1180 = vmatpush1.msra.mxu0 0.0
    %1181 = vmatprep.subr.mxu0 0.0
    %1182 = vmatpush1.msra.mxu0 0.0
    %1183 = vmatprep.subr.mxu0 0.0
    %1184 = vmatpush1.msra.mxu0 0.0
    %1185 = vmatprep.subr.mxu0 0.0
    %1186 = vmatpush1.msra.mxu0 0.0
    %1187 = vmatprep.subr.mxu0 0.0
    %1188 = vmatpush1.msra.mxu0 0.0
    %1189 = vmatprep.subr.mxu0 0.0
    %1190 = vmatpush1.msra.mxu0 0.0
    %1191 = vmatprep.subr.mxu0 0.0
    %1192 = vmatpush1.msra.mxu0 0.0
    %1193 = vmatprep.subr.mxu0 0.0
    %1194 = vmatpush1.msra.mxu0 0.0
    %1195 = vmatprep.subr.mxu0 0.0
    %1196 = vmatpush1.msra.mxu0 0.0
    %1197 = vmatprep.subr.mxu0 0.0
    %1198 = vmatpush1.msra.mxu0 0.0
    %1199 = vmatprep.subr.mxu0 0.0
    %1200 = vmatpush1.msra.mxu0 0.0
    %1201 = vmatprep.subr.mxu0 0.0
    %1202 = vmatpush1.msra.mxu0 0.0
    %1203 = vmatprep.subr.mxu0 0.0
    %1204 = vmatpush1.msra.mxu0 0.0
    %1205 = vmatprep.subr.mxu0 0.0
    %1206 = vmatpush1.msra.mxu0 0.0
    %1207 = vmatprep.mubr.f32.mxu0 0.0
    %1208 = vmatmul.mubr.f32.gmra.mrb[0].mxu0 %v1138
    %v1209 = vpop.f32.mrb[0].mxu0
    %v1210 = vadd.f32 %v1135, %v1209
    %v1211 = vpop.f32.mrb[0].mxu0
    %1212 = vmatprep.mubr.f32.mxu0 0.0
    %1213 = vmatmul.mubr.f32.gmra.mrb[0].mxu0 %v1141
    %v1214 = vpop.f32.mrb[0].mxu0
    %v1215 = vadd.f32 %v1135, %v1214
    %v1216 = vpop.f32.mrb[0].mxu0
    %1217 = vdwg.mxu0
    %v1218 = vsub.f32 1.0, %v831
    %v1221 = vcombine.high %v1210, %v1210
    %v1223 = vunpack.c.l.s4 1983009808
    %v1224 = vunpack.c.0.s8 %v1223
    %v1225 = vlaneseq
    %v1226 = vshrl.u32 %v1225, 7
    %v1227 = vsub.s32 %v1224, %v1226
    %v1228 = vrot.slane %v1210, %v1227
    %v1230 = vunpack.c.l.s4 1983009808
    %v1231 = vunpack.c.0.s8 %v1230
    %v1232 = vlaneseq
    %v1233 = vshrl.u32 %v1232, 7
    %v1234 = vsub.s32 %v1231, %v1233
    %v1235 = vrot.slane %v1221, %v1234
    %v1236 = vcombine.high %v1228, %v1228
    %v1237 = vcombine.high %v1235, %v1235
    %v1238 = vcombine.high %v1215, %v1215
    %v1240 = vunpack.c.l.s4 1983009808
    %v1241 = vunpack.c.0.s8 %v1240
    %v1242 = vlaneseq
    %v1243 = vshrl.u32 %v1242, 7
    %v1244 = vsub.s32 %v1241, %v1243
    %v1245 = vrot.slane %v1215, %v1244
    %v1247 = vunpack.c.l.s4 1983009808
    %v1248 = vunpack.c.0.s8 %v1247
    %v1249 = vlaneseq
    %v1250 = vshrl.u32 %v1249, 7
    %v1251 = vsub.s32 %v1248, %v1250
    %v1252 = vrot.slane %v1238, %v1251
    %v1253 = vcombine.high %v1245, %v1245
    %v1254 = vcombine.high %v1252, %v1252
    %1255 = vrot.lane.b32.xlu0 %v1228, 124
    %v1256 = vpop.permute.xlu0 %1255
    %1257 = vrot.lane.b32.xlu0 %v1236, 124
    %v1258 = vpop.permute.xlu0 %1257
    %1259 = vrot.lane.b32.xlu0 %v1235, 124
    %v1260 = vpop.permute.xlu0 %1259
    %1261 = vrot.lane.b32.xlu0 %v1237, 124
    %v1262 = vpop.permute.xlu0 %1261
    %1263 = vrot.lane.b32.xlu0 %v1245, 124
    %v1264 = vpop.permute.xlu0 %1263
    %1265 = vrot.lane.b32.xlu0 %v1253, 124
    %v1266 = vpop.permute.xlu0 %1265
    %1267 = vrot.lane.b32.xlu0 %v1252, 124
    %v1268 = vpop.permute.xlu0 %1267
    %1269 = vrot.lane.b32.xlu0 %v1254, 124
    %v1270 = vpop.permute.xlu0 %1269
    %v1279 = vsub.f32 %v735, %v1256
    %v1280 = vsub.f32 %v736, %v1258
    %v1281 = vsub.f32 %v737, %v1260
    %v1282 = vsub.f32 %v738, %v1262
    %v1283 = vsub.f32 %v739, %v1264
    %v1284 = vsub.f32 %v740, %v1266
    %v1285 = vsub.f32 %v741, %v1268
    %v1286 = vsub.f32 %v742, %v1270
    %v1288 = vlaneseq
    %v1289 = vshrl.u32 %v1288, 7
    %v1290 = vsub.s32 0, %v1289
    %v1291 = vrot.slane %v1218, %v1290
    %v1301 = vcombine.low %v1279, %v1280
    %v1302 = vcombine.low %v1281, %v1282
    %v1304 = vunpack.c.l.s4 1983009808
    %v1305 = vunpack.c.0.s8 %v1304
    %v1306 = vlaneseq
    %v1307 = vshrl.u32 %v1306, 7
    %v1308 = vsub.s32 %v1305, %v1307
    %v1309 = vrot.slane %v1301, %v1308
    %v1311 = vunpack.c.l.s4 1983009808
    %v1312 = vunpack.c.0.s8 %v1311
    %v1313 = vlaneseq
    %v1314 = vshrl.u32 %v1313, 7
    %v1315 = vsub.s32 %v1312, %v1314
    %v1316 = vrot.slane %v1302, %v1315
    %v1317 = vcombine.low %v1309, %v1316
    %v1318 = vcombine.low %v1283, %v1284
    %v1319 = vcombine.low %v1285, %v1286
    %v1321 = vunpack.c.l.s4 1983009808
    %v1322 = vunpack.c.0.s8 %v1321
    %v1323 = vlaneseq
    %v1324 = vshrl.u32 %v1323, 7
    %v1325 = vsub.s32 %v1322, %v1324
    %v1326 = vrot.slane %v1318, %v1325
    %v1328 = vunpack.c.l.s4 1983009808
    %v1329 = vunpack.c.0.s8 %v1328
    %v1330 = vlaneseq
    %v1331 = vshrl.u32 %v1330, 7
    %v1332 = vsub.s32 %v1329, %v1331
    %v1333 = vrot.slane %v1319, %v1332
    %v1334 = vcombine.low %v1326, %v1333
    %v1337 = vmul.f32 %v1291, %v1317
    %v1338 = vmul.f32 %v1291, %v1334
    %v1339 = vsub.f32 0.0, %v1210
    %v1340 = vsub.f32 0.0, %v1215
    %v1341 = vmul.f32 %v1339, 1.442695
    %v1342 = vpow.pop %v1341
    %v1343 = vmul.f32 %v1340, 1.442695
    %v1344 = vpow.pop %v1343
    %v1345 = vmul.f32 %v1337, %v1342
    %v1346 = vmul.f32 %v1338, %v1344
    %v1349 = vcombine.high %v1345, %v1345
    %v1351 = vunpack.c.l.s4 1983009808
    %v1352 = vunpack.c.0.s8 %v1351
    %v1353 = vlaneseq
    %v1354 = vshrl.u32 %v1353, 7
    %v1355 = vsub.s32 %v1352, %v1354
    %v1356 = vrot.slane %v1345, %v1355
    %v1358 = vunpack.c.l.s4 1983009808
    %v1359 = vunpack.c.0.s8 %v1358
    %v1360 = vlaneseq
    %v1361 = vshrl.u32 %v1360, 7
    %v1362 = vsub.s32 %v1359, %v1361
    %v1363 = vrot.slane %v1349, %v1362
    %v1364 = vcombine.high %v1356, %v1356
    %v1365 = vcombine.high %v1363, %v1363
    %v1366 = vcombine.high %v1346, %v1346
    %v1368 = vunpack.c.l.s4 1983009808
    %v1369 = vunpack.c.0.s8 %v1368
    %v1370 = vlaneseq
    %v1371 = vshrl.u32 %v1370, 7
    %v1372 = vsub.s32 %v1369, %v1371
    %v1373 = vrot.slane %v1346, %v1372
    %v1375 = vunpack.c.l.s4 1983009808
    %v1376 = vunpack.c.0.s8 %v1375
    %v1377 = vlaneseq
    %v1378 = vshrl.u32 %v1377, 7
    %v1379 = vsub.s32 %v1376, %v1378
    %v1380 = vrot.slane %v1366, %v1379
    %v1381 = vcombine.high %v1373, %v1373
    %v1382 = vcombine.high %v1380, %v1380
    %v1391 = vadd.f32 %v882, %v1356
    %v1392 = vadd.f32 %v883, %v1364
    %v1393 = vadd.f32 %v884, %v1363
    %v1394 = vadd.f32 %v885, %v1365
    %v1395 = vadd.f32 %v886, %v1373
    %v1396 = vadd.f32 %v887, %v1381
    %v1397 = vadd.f32 %v888, %v1380
    %v1398 = vadd.f32 %v889, %v1382
    %v1399 = vsub.f32 0.0, %v1218
    %v1401 = vlaneseq
    %v1402 = vshrl.u32 %v1401, 7
    %v1403 = vsub.s32 0, %v1402
    %v1404 = vrot.slane %v1399, %v1403
    %v1406 = vmul.f32 %v1404, %v1210
    %v1407 = vmul.f32 %v1404, %v1215
    %v1410 = vcombine.high %v1406, %v1406
    %v1412 = vunpack.c.l.s4 1983009808
    %v1413 = vunpack.c.0.s8 %v1412
    %v1414 = vlaneseq
    %v1415 = vshrl.u32 %v1414, 7
    %v1416 = vsub.s32 %v1413, %v1415
    %v1417 = vrot.slane %v1406, %v1416
    %v1419 = vunpack.c.l.s4 1983009808
    %v1420 = vunpack.c.0.s8 %v1419
    %v1421 = vlaneseq
    %v1422 = vshrl.u32 %v1421, 7
    %v1423 = vsub.s32 %v1420, %v1422
    %v1424 = vrot.slane %v1410, %v1423
    %v1425 = vcombine.high %v1417, %v1417
    %v1426 = vcombine.high %v1424, %v1424
    %v1427 = vcombine.high %v1407, %v1407
    %v1429 = vunpack.c.l.s4 1983009808
    %v1430 = vunpack.c.0.s8 %v1429
    %v1431 = vlaneseq
    %v1432 = vshrl.u32 %v1431, 7
    %v1433 = vsub.s32 %v1430, %v1432
    %v1434 = vrot.slane %v1407, %v1433
    %v1436 = vunpack.c.l.s4 1983009808
    %v1437 = vunpack.c.0.s8 %v1436
    %v1438 = vlaneseq
    %v1439 = vshrl.u32 %v1438, 7
    %v1440 = vsub.s32 %v1437, %v1439
    %v1441 = vrot.slane %v1427, %v1440
    %v1442 = vcombine.high %v1434, %v1434
    %v1443 = vcombine.high %v1441, %v1441
    %v1452 = vadd.f32 %v823, %v1417
    %v1453 = vadd.f32 %v824, %v1425
    %v1454 = vadd.f32 %v825, %v1424
    %v1455 = vadd.f32 %v826, %v1426
    %v1456 = vadd.f32 %v827, %v1434
    %v1457 = vadd.f32 %v828, %v1442
    %v1458 = vadd.f32 %v829, %v1441
    %v1459 = vadd.f32 %v830, %v1443
    %v1460 = vsel %vm551, %v1391, 0.0
    %v1461 = vrot.slane %v1460, 4
    %v1462 = vadd.f32 %v1460, %v1461
    %v1463 = vrot.slane %v1462, 2
    %v1464 = vadd.f32 %v1462, %v1463
    %v1465 = vrot.slane %v1464, 1
    %v1466 = vadd.f32 %v1464, %v1465
    %v1467 = vsel %vm551, %v1392, 0.0
    %v1468 = vrot.slane %v1467, 4
    %v1469 = vadd.f32 %v1467, %v1468
    %v1470 = vrot.slane %v1469, 2
    %v1471 = vadd.f32 %v1469, %v1470
    %v1472 = vrot.slane %v1471, 1
    %v1473 = vadd.f32 %v1471, %v1472
    %v1474 = vsel %vm551, %v1393, 0.0
    %v1475 = vrot.slane %v1474, 4
    %v1476 = vadd.f32 %v1474, %v1475
    %v1477 = vrot.slane %v1476, 2
    %v1478 = vadd.f32 %v1476, %v1477
    %v1479 = vrot.slane %v1478, 1
    %v1480 = vadd.f32 %v1478, %v1479
    %v1481 = vsel %vm551, %v1394, 0.0
    %v1482 = vrot.slane %v1481, 4
    %v1483 = vadd.f32 %v1481, %v1482
    %v1484 = vrot.slane %v1483, 2
    %v1485 = vadd.f32 %v1483, %v1484
    %v1486 = vrot.slane %v1485, 1
    %v1487 = vadd.f32 %v1485, %v1486
    %v1488 = vsel %vm551, %v1395, 0.0
    %v1489 = vrot.slane %v1488, 4
    %v1490 = vadd.f32 %v1488, %v1489
    %v1491 = vrot.slane %v1490, 2
    %v1492 = vadd.f32 %v1490, %v1491
    %v1493 = vrot.slane %v1492, 1
    %v1494 = vadd.f32 %v1492, %v1493
    %v1495 = vsel %vm551, %v1396, 0.0
    %v1496 = vrot.slane %v1495, 4
    %v1497 = vadd.f32 %v1495, %v1496
    %v1498 = vrot.slane %v1497, 2
    %v1499 = vadd.f32 %v1497, %v1498
    %v1500 = vrot.slane %v1499, 1
    %v1501 = vadd.f32 %v1499, %v1500
    %v1502 = vsel %vm551, %v1397, 0.0
    %v1503 = vrot.slane %v1502, 4
    %v1504 = vadd.f32 %v1502, %v1503
    %v1505 = vrot.slane %v1504, 2
    %v1506 = vadd.f32 %v1504, %v1505
    %v1507 = vrot.slane %v1506, 1
    %v1508 = vadd.f32 %v1506, %v1507
    %v1509 = vsel %vm551, %v1398, 0.0
    %v1510 = vrot.slane %v1509, 4
    %v1511 = vadd.f32 %v1509, %v1510
    %v1512 = vrot.slane %v1511, 2
    %v1513 = vadd.f32 %v1511, %v1512
    %v1514 = vrot.slane %v1513, 1
    %v1515 = vadd.f32 %v1513, %v1514
    %v1516 = vmul.f32 %v1466, %v608
    %v1517 = vmul.f32 %v1473, %v608
    %v1518 = vmul.f32 %v1480, %v608
    %v1519 = vmul.f32 %v1487, %v608
    %v1520 = vmul.f32 %v1494, %v608
    %v1521 = vmul.f32 %v1501, %v608
    %v1522 = vmul.f32 %v1508, %v608
    %v1523 = vmul.f32 %v1515, %v608
    %v1524 = vsub.f32 %v1391, %v1516
    %v1525 = vsub.f32 %v1392, %v1517
    %v1526 = vsub.f32 %v1393, %v1518
    %v1527 = vsub.f32 %v1394, %v1519
    %v1528 = vsub.f32 %v1395, %v1520
    %v1529 = vsub.f32 %v1396, %v1521
    %v1530 = vsub.f32 %v1397, %v1522
    %v1531 = vsub.f32 %v1398, %v1523
    %v1532 = vmul.f32 %v1524, %v1524
    %v1533 = vmul.f32 %v1525, %v1525
    %v1534 = vmul.f32 %v1526, %v1526
    %v1535 = vmul.f32 %v1527, %v1527
    %v1536 = vmul.f32 %v1528, %v1528
    %v1537 = vmul.f32 %v1529, %v1529
    %v1538 = vmul.f32 %v1530, %v1530
    %v1539 = vmul.f32 %v1531, %v1531
    %v1540 = vsel %vm551, %v1532, 0.0
    %v1541 = vrot.slane %v1540, 4
    %v1542 = vadd.f32 %v1540, %v1541
    %v1543 = vrot.slane %v1542, 2
    %v1544 = vadd.f32 %v1542, %v1543
    %v1545 = vrot.slane %v1544, 1
    %v1546 = vadd.f32 %v1544, %v1545
    %v1547 = vsel %vm551, %v1533, 0.0
    %v1548 = vrot.slane %v1547, 4
    %v1549 = vadd.f32 %v1547, %v1548
    %v1550 = vrot.slane %v1549, 2
    %v1551 = vadd.f32 %v1549, %v1550
    %v1552 = vrot.slane %v1551, 1
    %v1553 = vadd.f32 %v1551, %v1552
    %v1554 = vsel %vm551, %v1534, 0.0
    %v1555 = vrot.slane %v1554, 4
    %v1556 = vadd.f32 %v1554, %v1555
    %v1557 = vrot.slane %v1556, 2
    %v1558 = vadd.f32 %v1556, %v1557
    %v1559 = vrot.slane %v1558, 1
    %v1560 = vadd.f32 %v1558, %v1559
    %v1561 = vsel %vm551, %v1535, 0.0
    %v1562 = vrot.slane %v1561, 4
    %v1563 = vadd.f32 %v1561, %v1562
    %v1564 = vrot.slane %v1563, 2
    %v1565 = vadd.f32 %v1563, %v1564
    %v1566 = vrot.slane %v1565, 1
    %v1567 = vadd.f32 %v1565, %v1566
    %v1568 = vsel %vm551, %v1536, 0.0
    %v1569 = vrot.slane %v1568, 4
    %v1570 = vadd.f32 %v1568, %v1569
    %v1571 = vrot.slane %v1570, 2
    %v1572 = vadd.f32 %v1570, %v1571
    %v1573 = vrot.slane %v1572, 1
    %v1574 = vadd.f32 %v1572, %v1573
    %v1575 = vsel %vm551, %v1537, 0.0
    %v1576 = vrot.slane %v1575, 4
    %v1577 = vadd.f32 %v1575, %v1576
    %v1578 = vrot.slane %v1577, 2
    %v1579 = vadd.f32 %v1577, %v1578
    %v1580 = vrot.slane %v1579, 1
    %v1581 = vadd.f32 %v1579, %v1580
    %v1582 = vsel %vm551, %v1538, 0.0
    %v1583 = vrot.slane %v1582, 4
    %v1584 = vadd.f32 %v1582, %v1583
    %v1585 = vrot.slane %v1584, 2
    %v1586 = vadd.f32 %v1584, %v1585
    %v1587 = vrot.slane %v1586, 1
    %v1588 = vadd.f32 %v1586, %v1587
    %v1589 = vsel %vm551, %v1539, 0.0
    %v1590 = vrot.slane %v1589, 4
    %v1591 = vadd.f32 %v1589, %v1590
    %v1592 = vrot.slane %v1591, 2
    %v1593 = vadd.f32 %v1591, %v1592
    %v1594 = vrot.slane %v1593, 1
    %v1595 = vadd.f32 %v1593, %v1594
    %v1596 = vmul.f32 %v854, 1.442695
    %v1597 = vpow.pop %v1596
    %v1599 = vlaneseq
    %v1600 = vshrl.u32 %v1599, 7
    %v1601 = vsub.s32 0, %v1600
    %v1602 = vrot.slane %v1597, %v1601
    %v1604 = vmul.f32 %v1602, %v1524
    %v1605 = vmul.f32 %v1602, %v1525
    %v1606 = vmul.f32 %v1602, %v1526
    %v1607 = vmul.f32 %v1602, %v1527
    %v1608 = vmul.f32 %v1602, %v1528
    %v1609 = vmul.f32 %v1602, %v1529
    %v1610 = vmul.f32 %v1602, %v1530
    %v1611 = vmul.f32 %v1602, %v1531
    %v1612 = vadd.f32 %v1546, 1e-05
    %v1613 = vadd.f32 %v1553, 1e-05
    %v1614 = vadd.f32 %v1560, 1e-05
    %v1615 = vadd.f32 %v1567, 1e-05
    %v1616 = vadd.f32 %v1574, 1e-05
    %v1617 = vadd.f32 %v1581, 1e-05
    %v1618 = vadd.f32 %v1588, 1e-05
    %v1619 = vadd.f32 %v1595, 1e-05
    %v1620 = vrsqrt.pop %v1612
    %v1621 = vrsqrt.pop %v1613
    %v1622 = vrsqrt.pop %v1614
    %v1623 = vrsqrt.pop %v1615
    %v1624 = vrsqrt.pop %v1616
    %v1625 = vrsqrt.pop %v1617
    %v1626 = vrsqrt.pop %v1618
    %v1627 = vrsqrt.pop %v1619
    %v1628 = vmul.f32 %v1604, %v1620
    %v1629 = vmul.f32 %v1605, %v1621
    %v1630 = vmul.f32 %v1606, %v1622
    %v1631 = vmul.f32 %v1607, %v1623
    %v1632 = vmul.f32 %v1608, %v1624
    %v1633 = vmul.f32 %v1609, %v1625
    %v1634 = vmul.f32 %v1610, %v1626
    %v1635 = vmul.f32 %v1611, %v1627
    %v1637 = vlaneseq
    %v1638 = vshrl.u32 %v1637, 7
    %v1639 = vsub.s32 0, %v1638
    %v1640 = vrot.slane %v855, %v1639
    %v1642 = vadd.f32 %v1628, %v1640
    %v1643 = vadd.f32 %v1629, %v1640
    %v1644 = vadd.f32 %v1630, %v1640
    %v1645 = vadd.f32 %v1631, %v1640
    %v1646 = vadd.f32 %v1632, %v1640
    %v1647 = vadd.f32 %v1633, %v1640
    %v1648 = vadd.f32 %v1634, %v1640
    %v1649 = vadd.f32 %v1635, %v1640
    %v1650 = vlog2.pop %v1612
    %v1651 = vmul.f32 %v1650, 0.6931472
    %v1652 = vlog2.pop %v1613
    %v1653 = vmul.f32 %v1652, 0.6931472
    %v1654 = vlog2.pop %v1614
    %v1655 = vmul.f32 %v1654, 0.6931472
    %v1656 = vlog2.pop %v1615
    %v1657 = vmul.f32 %v1656, 0.6931472
    %v1658 = vlog2.pop %v1616
    %v1659 = vmul.f32 %v1658, 0.6931472
    %v1660 = vlog2.pop %v1617
    %v1661 = vmul.f32 %v1660, 0.6931472
    %v1662 = vlog2.pop %v1618
    %v1663 = vmul.f32 %v1662, 0.6931472
    %v1664 = vlog2.pop %v1619
    %v1665 = vmul.f32 %v1664, 0.6931472
    %v1666 = vmul.f32 %v1651, 0.5
    %v1667 = vmul.f32 %v1653, 0.5
    %v1668 = vmul.f32 %v1655, 0.5
    %v1669 = vmul.f32 %v1657, 0.5
    %v1670 = vmul.f32 %v1659, 0.5
    %v1671 = vmul.f32 %v1661, 0.5
    %v1672 = vmul.f32 %v1663, 0.5
    %v1673 = vmul.f32 %v1665, 0.5
    %v1674 = vsub.f32 %v854, %v1666
    %v1675 = vsub.f32 %v854, %v1667
    %v1676 = vsub.f32 %v854, %v1668
    %v1677 = vsub.f32 %v854, %v1669
    %v1678 = vsub.f32 %v854, %v1670
    %v1679 = vsub.f32 %v854, %v1671
    %v1680 = vsub.f32 %v854, %v1672
    %v1681 = vsub.f32 %v854, %v1673
    %v1690 = vlaneseq
    %v1691 = vshrl.u32 %v1690, 7
    %v1692 = vsub.s32 0, %v1691
    %v1693 = vrot.slane %v1674, %v1692
    %v1694 = vlaneseq
    %v1695 = vshrl.u32 %v1694, 7
    %v1696 = vsub.s32 0, %v1695
    %v1697 = vrot.slane %v1675, %v1696
    %v1698 = vlaneseq
    %v1699 = vshrl.u32 %v1698, 7
    %v1700 = vsub.s32 0, %v1699
    %v1701 = vrot.slane %v1676, %v1700
    %v1702 = vlaneseq
    %v1703 = vshrl.u32 %v1702, 7
    %v1704 = vsub.s32 0, %v1703
    %v1705 = vrot.slane %v1677, %v1704
    %v1706 = vlaneseq
    %v1707 = vshrl.u32 %v1706, 7
    %v1708 = vsub.s32 0, %v1707
    %v1709 = vrot.slane %v1678, %v1708
    %v1710 = vlaneseq
    %v1711 = vshrl.u32 %v1710, 7
    %v1712 = vsub.s32 0, %v1711
    %v1713 = vrot.slane %v1679, %v1712
    %v1714 = vlaneseq
    %v1715 = vshrl.u32 %v1714, 7
    %v1716 = vsub.s32 0, %v1715
    %v1717 = vrot.slane %v1680, %v1716
    %v1718 = vlaneseq
    %v1719 = vshrl.u32 %v1718, 7
    %v1720 = vsub.s32 0, %v1719
    %v1721 = vrot.slane %v1681, %v1720
    %v1730 = vadd.f32 %v1452, %v1693
    %v1731 = vadd.f32 %v1453, %v1697
    %v1732 = vadd.f32 %v1454, %v1701
    %v1733 = vadd.f32 %v1455, %v1705
    %v1734 = vadd.f32 %v1456, %v1709
    %v1735 = vadd.f32 %v1457, %v1713
    %v1736 = vadd.f32 %v1458, %v1717
    %v1737 = vadd.f32 %v1459, %v1721
    %v1738 = vmul.f32 %v1642, 50.0
    %v1739 = vmul.f32 %v1738, %v1642
    %v1740 = vadd.f32 %v1739, 0.0
    %v1741 = vmul.f32 %v1643, 12.5
    %v1742 = vmul.f32 %v1741, %v1643
    %v1743 = vadd.f32 %v1740, %v1742
    %v1744 = vmul.f32 %v1644, 5.5555553
    %v1745 = vmul.f32 %v1744, %v1644
    %v1746 = vadd.f32 %v1743, %v1745
    %v1747 = vmul.f32 %v1645, 3.125
    %v1748 = vmul.f32 %v1747, %v1645
    %v1749 = vadd.f32 %v1746, %v1748
    %v1750 = vmul.f32 %v1646, 2.0
    %v1751 = vmul.f32 %v1750, %v1646
    %v1752 = vadd.f32 %v1749, %v1751
    %v1753 = vmul.f32 %v1647, 1.3888888
    %v1754 = vmul.f32 %v1753, %v1647
    %v1755 = vadd.f32 %v1752, %v1754
    %v1756 = vmul.f32 %v1648, 1.0204082
    %v1757 = vmul.f32 %v1756, %v1648
    %v1758 = vadd.f32 %v1755, %v1757
    %v1759 = vmul.f32 %v1649, 0.78125
    %v1760 = vmul.f32 %v1759, %v1649
    %v1761 = vadd.f32 %v1758, %v1760
    %v1762 = vsel %vm551, %v1730, 0.0
    %v1763 = vsel %vm551, %v1731, 0.0
    %v1764 = vadd.f32 %v1762, %v1763
    %v1765 = vsel %vm551, %v1732, 0.0
    %v1766 = vadd.f32 %v1764, %v1765
    %v1767 = vsel %vm551, %v1733, 0.0
    %v1768 = vadd.f32 %v1766, %v1767
    %v1769 = vsel %vm551, %v1734, 0.0
    %v1770 = vadd.f32 %v1768, %v1769
    %v1771 = vsel %vm551, %v1735, 0.0
    %v1772 = vadd.f32 %v1770, %v1771
    %v1773 = vsel %vm551, %v1736, 0.0
    %v1774 = vadd.f32 %v1772, %v1773
    %v1775 = vsel %vm551, %v1737, 0.0
    %v1776 = vadd.f32 %v1774, %v1775
    %v1777 = vsub.f32 %v1761, %v1776
    %v1778 = vrcp.pop 8.0
    %v1779 = vmul.f32 %v1777, %v1778
    %v1780 = vsel %vm551, %v1779, 0.0
    %1781 = vadd.xlane.f32.xlu0 %v1780
    %v1782 = vpop.xlane.xlu0 %1781
    %v1783 = vrot.slane %v1782, 4
    %v1784 = vadd.f32 %v1782, %v1783
    %v1785 = vrot.slane %v1784, 2
    %v1786 = vadd.f32 %v1784, %v1785
    %v1787 = vrot.slane %v1786, 1
    %v1788 = vadd.f32 %v1786, %v1787
    %s1789 = vtos %v1788
    %v1790 = vrcp.pop 2.0
    %s1791 = vtos %v1790
    %s1792 = smul.f32 %s1789, %s1791
    %s1793 = scalar_lea.smem [#allocation3], 0
    %1794 = sst [smem:[%s1793]] %s1792
    // Predicated region
    $region86: #{tcnf_forward.5} parent=1 // pred_check
      _
    $region87: #{tcnf_forward.5} parent=1 // pred_check_branch
      %1796 = sbr.rel (0) target = $region89
    $region88: #{tcnf_forward.5} parent=1 // pred_region
      %s1798 = ssub.s32 16, 16
      %1799 = vsyncadd [#allocation4], %s1798
      %1802 = dma.smem_to_hbm [#allocation3], 16, %s21, [#allocation4]
    $region89: #{tcnf_forward.5} parent=1 // pred_fallthru
      _
    // Predicated region
    $region90: #{tcnf_forward.5} parent=1 // pred_check
      _
    $region91: #{tcnf_forward.5} parent=1 // pred_check_branch
      %1804 = sbr.rel (0) target = $region93
    $region92: #{tcnf_forward.5} parent=1 // pred_region
      %1805 = dma.done [#allocation4], 16
    $region93: #{tcnf_forward.5} parent=1 // pred_fallthru
      _
    %1806 = sfence
    %1807 = vsyncpa [#allocation4], 1

</llo_original>
